<compile_context>
chip_gen: v6e
topology: v6e:2x2x1
jax: 0.10.0
libtpu: 0.0.40
codegen_flags: <defaults>
</compile_context>

<pallas_src>
import math
import functools

import jax
import jax.numpy as jnp
from jax.experimental import pallas as pl
from jax.experimental.pallas import tpu as pltpu  # noqa: F401  (TPU backend)

# ----------------------- model hyper-parameters -----------------------
D = 32            # transformer.embed_dim (hid_dim)
H = 4             # attention heads
DH = D // H       # head dim
FFN = 64          # feed-forward hidden dim
NUM_CLASSES = 9   # match_embed output classes
NUM_ENC_LAYERS = 1
NUM_DEC_LAYERS = 2

MATMUL_DTYPE = jnp.bfloat16   # MXU operand dtype; accumulation is f32
_NEG_INF = -1e9
VEC_W = 128                   # lane-padded width for stacked bias/LN vectors


# ----------------------------- in-kernel helpers -----------------------------

def _mm(a, b):
    """2-D matmul, bf16 operands (no-op cast if already bf16), f32 accumulation."""
    return jnp.dot(a.astype(MATMUL_DTYPE), b.astype(MATMUL_DTYPE),
                   preferred_element_type=jnp.float32)


def _layer_norm(x, g, b):
    """x: (N, D); g, b: (1, D); all f32."""
    mu = jnp.mean(x, axis=-1, keepdims=True)
    var = jnp.mean(jnp.square(x - mu), axis=-1, keepdims=True)
    return (x - mu) * jax.lax.rsqrt(var + 1e-5) * g + b


def _bd_mask(rows, cols, rb, cb):
    """0/1 block-diagonal mask with H blocks of (rb, cb); built from 2-D iota."""
    ri = jax.lax.broadcasted_iota(jnp.int32, (rows, cols), 0)
    ci = jax.lax.broadcasted_iota(jnp.int32, (rows, cols), 1)
    blk = None
    for h in range(H):
        this = ((ri >= h * rb) & (ri < (h + 1) * rb) &
                (ci >= h * cb) & (ci < (h + 1) * cb))
        blk = this if blk is None else (blk | this)
    return blk.astype(jnp.float32)


# ----------------------------- the fused kernel -----------------------------

def _fused_forward_kernel(feat_pre_ref, feat_cur_ref, pos_pre_ref, pos_cur_ref,
                          bias_enc_ref, bias_dself_ref, bias_dcross_ref,
                          w_qkv_ref, wo_ref, w1_ref, w2_ref, wm_ref, vecs_ref,
                          o_ref, *, vidx):
    feat_pre = feat_pre_ref[...]        # (B*Npre, D) f32
    feat_cur = feat_cur_ref[...]        # (B*Ncur, D) f32
    pos_pre = pos_pre_ref[...]
    pos_cur = pos_cur_ref[...]
    bias_enc = bias_enc_ref[...]        # (B*Npre, H*B*Npre) additive bias
    bias_dself = bias_dself_ref[...]    # (B*Ncur, H*B*Ncur)
    bias_dcross = bias_dcross_ref[...]  # (B*Ncur, H*B*Npre)

    w_qkv_all = w_qkv_ref[...]          # (5D, 3D) bf16
    wo_all = wo_ref[...]                # (5D, D)  bf16
    w1_all = w1_ref[...]                # (3D, FFN) bf16
    w2_all = w2_ref[...]                # (3FFN, D) bf16
    wm = wm_ref[...]                    # (D, 128) bf16 (match head, lane padded)
    vecs = vecs_ref[...]                # (NV, 128) f32 (all bias/LN vectors)

    def vec(name, w):
        r = vidx[name]
        return vecs[r:r + 1, :w]        # (1, w) f32

    def w_qkv(i):
        return w_qkv_all[i * D:(i + 1) * D, :]

    def w_out(i):
        return wo_all[i * D:(i + 1) * D, :]

    def w_ffn1(l):
        return w1_all[l * D:(l + 1) * D, :]

    def w_ffn2(l):
        return w2_all[l * FFN:(l + 1) * FFN, :]

    # static block-diagonal masks, traced once per distinct key length
    mask_cache = {}

    def bd_masks(bm):
        if bm not in mask_cache:
            mask_cache[bm] = (_bd_mask(D, H * bm, DH, bm),   # K side  (D, H*bm)
                              _bd_mask(H * bm, D, bm, DH))   # V side  (H*bm, D)
        return mask_cache[bm]

    scale = 1.0 / math.sqrt(DH)

    def mha(i, q_in, k_in, v_in, bias, fuse_qk):
        """Merged-head, batch-folded multi-head attention.

        q_in: (Nq, D), k_in/v_in: (M, D) with batch folded into rows.
        bias: (Nq, H*M) additive, already contains key-padding and
        cross-batch -inf and is pre-tiled across heads.
        """
        w = w_qkv(i)
        b = vec(f"bqkv{i}", 3 * D)
        bm = k_in.shape[0]
        km, vm = bd_masks(bm)

        if fuse_qk:                      # self-attention: q_in is k_in
            qk = _mm(q_in, w[:, :2 * D]) + b[:, :2 * D]
            q = qk[:, :D] * scale
            k = qk[:, D:2 * D]
        else:                            # cross-attention
            q = (_mm(q_in, w[:, :D]) + b[:, :D]) * scale
            k = _mm(k_in, w[:, D:2 * D]) + b[:, D:2 * D]
        v = _mm(v_in, w[:, 2 * D:]) + b[:, 2 * D:]

        # One score matmul for all heads via block-diagonal K^T.
        k_bd = jnp.concatenate([k.T] * H, axis=1) * km      # (D, H*bm)
        s = _mm(q, k_bd) + bias                             # (Nq, H*bm) f32
        # A per-row (all-head) max is a valid softmax shift; masked keys carry
        # -1e9 and vanish under exp.
        m = jnp.max(s, axis=-1, keepdims=True)
        e = jnp.exp(s - m)                                  # (Nq, H*bm) f32

        # One P.V matmul for all heads via block-diagonal V; the per-head
        # softmax denominator is the same matmul against the 0/1 mask.
        v_bd = jnp.concatenate([v] * H, axis=0) * vm        # (H*bm, D)
        o_un = _mm(e, v_bd)                                 # (Nq, D) unnormalised
        denom = _mm(e, vm)                                  # (Nq, D) per-head sum(e)
        o = o_un * pl.reciprocal(denom, approx=True)        # normalise (EUP)
        return _mm(o, w_out(i)) + vec(f"bo{i}", D)

    def ffn(l, x):
        h = jnp.maximum(_mm(x, w_ffn1(l)) + vec(f"b1_{l}", FFN), 0.0)
        return _mm(h, w_ffn2(l)) + vec(f"b2_{l}", D)

    # ---------------------------- encoder ----------------------------
    mha_i = 0
    layer_i = 0
    src = feat_pre
    for _ in range(NUM_ENC_LAYERS):
        qk_in = src + pos_pre
        a = mha(mha_i, qk_in, qk_in, src, bias_enc, True)
        src = _layer_norm(src + a, vec(f"ln1g{layer_i}", D),
                          vec(f"ln1b{layer_i}", D))
        src = _layer_norm(src + ffn(layer_i, src), vec(f"ln2g{layer_i}", D),
                          vec(f"ln2b{layer_i}", D))
        mha_i += 1
        layer_i += 1
    memory = src
    mem_k = memory + pos_pre        # hoisted: shared by both cross-attentions

    # ---------------------------- decoder ----------------------------
    tgt = feat_cur
    for _ in range(NUM_DEC_LAYERS):
        qk_in = tgt + pos_cur
        a = mha(mha_i, qk_in, qk_in, tgt, bias_dself, True)
        tgt = _layer_norm(tgt + a, vec(f"ln1g{layer_i}", D),
                          vec(f"ln1b{layer_i}", D))
        c = mha(mha_i + 1, tgt + pos_cur, mem_k, memory, bias_dcross, False)
        tgt = _layer_norm(tgt + c, vec(f"ln2g{layer_i}", D),
                          vec(f"ln2b{layer_i}", D))
        tgt = _layer_norm(tgt + ffn(layer_i, tgt), vec(f"ln3g{layer_i}", D),
                          vec(f"ln3b{layer_i}", D))
        mha_i += 2
        layer_i += 1

    # match_embed on the last decoder layer only; lane-dense (B*Ncur, 128) store.
    o_ref[...] = _mm(tgt, wm) + vec("match_b", VEC_W)


# ----------------------------- parameter packing -----------------------------

def _pad_row(v):
    v = jnp.asarray(v, jnp.float32).reshape(-1)
    return jnp.zeros((VEC_W,), jnp.float32).at[:v.shape[0]].set(v)


def _pack_params(params):
    """Pack all weights into 6 blobs + a static name->row index for vectors."""
    t = params["transformer"]
    enc, dec = t["encoder"], t["decoder"]

    mhas = [e["self_attn"] for e in enc]
    for dl in dec:
        mhas.append(dl["self_attn"])
        mhas.append(dl["cross_attn"])
    layers = list(enc) + list(dec)

    w_qkv_all = jnp.concatenate(
        [jnp.concatenate([m["wq"], m["wk"], m["wv"]], axis=1) for m in mhas],
        axis=0).astype(MATMUL_DTYPE)                                  # (5D, 3D)
    wo_all = jnp.concatenate([m["wo"] for m in mhas],
                             axis=0).astype(MATMUL_DTYPE)             # (5D, D)
    w1_all = jnp.concatenate([l["w1"] for l in layers],
                             axis=0).astype(MATMUL_DTYPE)             # (3D, FFN)
    w2_all = jnp.concatenate([l["w2"] for l in layers],
                             axis=0).astype(MATMUL_DTYPE)             # (3FFN, D)
    wm_pad = (jnp.zeros((D, VEC_W), jnp.float32)
              .at[:, :NUM_CLASSES].set(params["match_embed_w"])
              .astype(MATMUL_DTYPE))                                  # (D, 128)

    rows, vidx = [], {}

    def add(name, v):
        vidx[name] = len(rows)
        rows.append(_pad_row(v))

    for i, m in enumerate(mhas):
        add(f"bqkv{i}", jnp.concatenate([m["bq"], m["bk"], m["bv"]]))
        add(f"bo{i}", m["bo"])
    for l, lp in enumerate(layers):
        add(f"b1_{l}", lp["b1"])
        add(f"b2_{l}", lp["b2"])
        add(f"ln1g{l}", lp["ln1_g"])
        add(f"ln1b{l}", lp["ln1_b"])
        add(f"ln2g{l}", lp["ln2_g"])
        add(f"ln2b{l}", lp["ln2_b"])
        if "ln3_g" in lp:
            add(f"ln3g{l}", lp["ln3_g"])
            add(f"ln3b{l}", lp["ln3_b"])
    add("match_b", params["match_embed_b"])
    vecs = jnp.stack(rows, axis=0)                                    # (NV, 128)

    blobs = (w_qkv_all, wo_all, w1_all, w2_all, wm_pad, vecs)
    return blobs, vidx


# ----------------------------- forward wrapper -----------------------------

def _attn_bias(key_pad_mask, nq):
    """(B*nq, H*B*M) additive bias: -1e9 for padded keys and cross-batch keys."""
    bsz, m = key_pad_mask.shape
    qb = jnp.repeat(jnp.arange(bsz, dtype=jnp.int32), nq)[:, None]    # (B*nq, 1)
    kb = jnp.repeat(jnp.arange(bsz, dtype=jnp.int32), m)[None, :]     # (1, B*M)
    valid = (qb == kb) & jnp.logical_not(key_pad_mask.reshape(1, -1))
    bias = jnp.where(valid, 0.0, _NEG_INF).astype(jnp.float32)        # (B*nq, B*M)
    return jnp.tile(bias, (1, H))                                     # (B*nq, H*B*M)


def tracking_model_forward(params, reid_feat_pre, reid_feat_cur, mask_pre,
                           mask_cur, reid_pos_enc_pre, reid_pos_enc_cur,
                           train=True):
    # TODO(synk): train/eval only toggles dropout in the torch module; dropout
    # is omitted here (equivalent to dropout=0 / eval mode).
    del train
    blobs, vidx = _pack_params(params)

    bsz, npre, _ = reid_feat_pre.shape
    _, ncur, _ = reid_feat_cur.shape

    feat_pre = reid_feat_pre.astype(jnp.float32).reshape(bsz * npre, D)
    feat_cur = reid_feat_cur.astype(jnp.float32).reshape(bsz * ncur, D)
    pos_pre = reid_pos_enc_pre.astype(jnp.float32).reshape(bsz * npre, D)
    pos_cur = reid_pos_enc_cur.astype(jnp.float32).reshape(bsz * ncur, D)

    bias_enc = _attn_bias(mask_pre, npre)        # encoder self-attn
    bias_dec_self = _attn_bias(mask_cur, ncur)   # decoder self-attn
    bias_dec_cross = _attn_bias(mask_pre, ncur)  # decoder cross-attn

    kernel = functools.partial(_fused_forward_kernel, vidx=vidx)
    # Single grid-less pallas_call: 13 operands total (7 data + 6 weight blobs),
    # everything VMEM-resident, lane-dense 128-wide output slab.
    out2d = pl.pallas_call(
        kernel,
        out_shape=jax.ShapeDtypeStruct((bsz * ncur, VEC_W), jnp.float32),
    )(feat_pre, feat_cur, pos_pre, pos_cur,
      bias_enc, bias_dec_self, bias_dec_cross, *blobs)

    return out2d[:, :NUM_CLASSES].reshape(bsz, ncur, NUM_CLASSES)


# ----------------------------- parameter init -----------------------------

def _init_linear(key, din, dout, scale=0.02):
    kw, _ = jax.random.split(key)
    w = scale * jax.random.normal(kw, (din, dout), jnp.float32)
    b = jnp.zeros((dout,), jnp.float32)
    return w, b


def _init_mha(key):
    ks = jax.random.split(key, 4)
    p = {}
    for name, k in zip(("q", "k", "v", "o"), ks):
        w, b = _init_linear(k, D, D)
        p["w" + name], p["b" + name] = w, b
    return p


def _init_enc_layer(key):
    ks = jax.random.split(key, 3)
    w1, b1 = _init_linear(ks[1], D, FFN)
    w2, b2 = _init_linear(ks[2], FFN, D)
    return dict(self_attn=_init_mha(ks[0]), w1=w1, b1=b1, w2=w2, b2=b2,
                ln1_g=jnp.ones((D,)), ln1_b=jnp.zeros((D,)),
                ln2_g=jnp.ones((D,)), ln2_b=jnp.zeros((D,)))


def _init_dec_layer(key):
    ks = jax.random.split(key, 4)
    w1, b1 = _init_linear(ks[2], D, FFN)
    w2, b2 = _init_linear(ks[3], FFN, D)
    return dict(self_attn=_init_mha(ks[0]), cross_attn=_init_mha(ks[1]),
                w1=w1, b1=b1, w2=w2, b2=b2,
                ln1_g=jnp.ones((D,)), ln1_b=jnp.zeros((D,)),
                ln2_g=jnp.ones((D,)), ln2_b=jnp.zeros((D,)),
                ln3_g=jnp.ones((D,)), ln3_b=jnp.zeros((D,)))


def init_params(key):
    ks = jax.random.split(key, NUM_ENC_LAYERS + NUM_DEC_LAYERS + 1)
    enc = [_init_enc_layer(ks[i]) for i in range(NUM_ENC_LAYERS)]
    dec = [_init_dec_layer(ks[NUM_ENC_LAYERS + i]) for i in range(NUM_DEC_LAYERS)]
    mw, mb = _init_linear(ks[-1], D, NUM_CLASSES)
    return dict(transformer=dict(encoder=enc, decoder=dec),
                match_embed_w=mw, match_embed_b=mb)


# ----------------------------------- main -----------------------------------

if __name__ == "__main__":
    B, N_PRE, N_CUR = 2, 8, 8
    root = jax.random.PRNGKey(0)
    k_par, k_pre, k_cur, k_ppre, k_pcur = jax.random.split(root, 5)

    params = init_params(k_par)

    reid_feat_pre = jax.random.normal(k_pre, (B, N_PRE, D), jnp.float32)
    reid_feat_cur = jax.random.normal(k_cur, (B, N_CUR, D), jnp.float32)
    reid_pos_enc_pre = jax.random.normal(k_ppre, (B, N_PRE, D), jnp.float32)
    reid_pos_enc_cur = jax.random.normal(k_pcur, (B, N_CUR, D), jnp.float32)
    # key-padding masks: True = padded. Pad last 2 slots of each sequence.
    mask_pre = jnp.zeros((B, N_PRE), jnp.bool_).at[:, -2:].set(True)
    mask_cur = jnp.zeros((B, N_CUR), jnp.bool_).at[:, -2:].set(True)

    fwd = jax.jit(tracking_model_forward, static_argnames=("train",))
    out = fwd(params, reid_feat_pre, reid_feat_cur, mask_pre, mask_cur,
              reid_pos_enc_pre, reid_pos_enc_cur, train=True)
    out = jax.block_until_ready(out)

    assert out.shape == (B, N_CUR, NUM_CLASSES), out.shape
    assert out.dtype == jnp.float32
    assert bool(jnp.all(jnp.isfinite(out)))
    print("KERNEL_OK")
</pallas_src>

<mosaic_0001>
module attributes {stable_mosaic.version = 11 : i64} {
  func.func @_fused_forward_kernel(%arg0: memref<16x32xf32, #tpu.memory_space<vmem>>, %arg1: memref<16x32xf32, #tpu.memory_space<vmem>>, %arg2: memref<16x32xf32, #tpu.memory_space<vmem>>, %arg3: memref<16x32xf32, #tpu.memory_space<vmem>>, %arg4: memref<16x64xf32, #tpu.memory_space<vmem>>, %arg5: memref<16x64xf32, #tpu.memory_space<vmem>>, %arg6: memref<16x64xf32, #tpu.memory_space<vmem>>, %arg7: memref<160x96xbf16, #tpu.memory_space<vmem>>, %arg8: memref<160x32xbf16, #tpu.memory_space<vmem>>, %arg9: memref<96x64xbf16, #tpu.memory_space<vmem>>, %arg10: memref<192x32xbf16, #tpu.memory_space<vmem>>, %arg11: memref<32x128xbf16, #tpu.memory_space<vmem>>, %arg12: memref<33x128xf32, #tpu.memory_space<vmem>>, %arg13: memref<16x128xf32, #tpu.memory_space<vmem>>) attributes {dimension_semantics = [], scalar_prefetch = 0 : i64, scratch_operands = 0 : i64, tpu.core_type = #tpu.core_type<tc>} {
    %c0 = arith.constant 0 : index
    %c0_0 = arith.constant 0 : index
    %0 = vector.load %arg0[%c0, %c0_0] : memref<16x32xf32, #tpu.memory_space<vmem>>, vector<16x32xf32>
    %c0_1 = arith.constant 0 : index
    %c0_2 = arith.constant 0 : index
    %1 = vector.load %arg1[%c0_1, %c0_2] : memref<16x32xf32, #tpu.memory_space<vmem>>, vector<16x32xf32>
    %c0_3 = arith.constant 0 : index
    %c0_4 = arith.constant 0 : index
    %2 = vector.load %arg2[%c0_3, %c0_4] : memref<16x32xf32, #tpu.memory_space<vmem>>, vector<16x32xf32>
    %c0_5 = arith.constant 0 : index
    %c0_6 = arith.constant 0 : index
    %3 = vector.load %arg3[%c0_5, %c0_6] : memref<16x32xf32, #tpu.memory_space<vmem>>, vector<16x32xf32>
    %c0_7 = arith.constant 0 : index
    %c0_8 = arith.constant 0 : index
    %4 = vector.load %arg4[%c0_7, %c0_8] : memref<16x64xf32, #tpu.memory_space<vmem>>, vector<16x64xf32>
    %c0_9 = arith.constant 0 : index
    %c0_10 = arith.constant 0 : index
    %5 = vector.load %arg5[%c0_9, %c0_10] : memref<16x64xf32, #tpu.memory_space<vmem>>, vector<16x64xf32>
    %c0_11 = arith.constant 0 : index
    %c0_12 = arith.constant 0 : index
    %6 = vector.load %arg6[%c0_11, %c0_12] : memref<16x64xf32, #tpu.memory_space<vmem>>, vector<16x64xf32>
    %c0_13 = arith.constant 0 : index
    %c0_14 = arith.constant 0 : index
    %7 = vector.load %arg7[%c0_13, %c0_14] : memref<160x96xbf16, #tpu.memory_space<vmem>>, vector<160x96xbf16>
    %c0_15 = arith.constant 0 : index
    %c0_16 = arith.constant 0 : index
    %8 = vector.load %arg8[%c0_15, %c0_16] : memref<160x32xbf16, #tpu.memory_space<vmem>>, vector<160x32xbf16>
    %c0_17 = arith.constant 0 : index
    %c0_18 = arith.constant 0 : index
    %9 = vector.load %arg9[%c0_17, %c0_18] : memref<96x64xbf16, #tpu.memory_space<vmem>>, vector<96x64xbf16>
    %c0_19 = arith.constant 0 : index
    %c0_20 = arith.constant 0 : index
    %10 = vector.load %arg10[%c0_19, %c0_20] : memref<192x32xbf16, #tpu.memory_space<vmem>>, vector<192x32xbf16>
    %c0_21 = arith.constant 0 : index
    %c0_22 = arith.constant 0 : index
    %11 = vector.load %arg11[%c0_21, %c0_22] : memref<32x128xbf16, #tpu.memory_space<vmem>>, vector<32x128xbf16>
    %c0_23 = arith.constant 0 : index
    %c0_24 = arith.constant 0 : index
    %12 = vector.load %arg12[%c0_23, %c0_24] : memref<33x128xf32, #tpu.memory_space<vmem>>, vector<33x128xf32>
    %13 = arith.addf %0, %2 : vector<16x32xf32>
    %14 = vector.extract_strided_slice %7 {offsets = [0, 0], sizes = [32, 96], strides = [1, 1]} : vector<160x96xbf16> to vector<32x96xbf16>
    %15 = vector.extract_strided_slice %12 {offsets = [0, 0], sizes = [1, 96], strides = [1, 1]} : vector<33x128xf32> to vector<1x96xf32>
    %16 = tpu.iota {dimensions = array<i32: 0>} : vector<32x64xi32>
    %17 = tpu.iota {dimensions = array<i32: 1>} : vector<32x64xi32>
    %c0_i32 = arith.constant 0 : i32
    %18 = vector.broadcast %c0_i32 : i32 to vector<32x64xi32>
    %19 = arith.cmpi sge, %16, %18 : vector<32x64xi32>
    %c8_i32 = arith.constant 8 : i32
    %20 = vector.broadcast %c8_i32 : i32 to vector<32x64xi32>
    %21 = arith.cmpi slt, %16, %20 : vector<32x64xi32>
    %22 = arith.andi %19, %21 : vector<32x64xi1>
    %c0_i32_25 = arith.constant 0 : i32
    %23 = vector.broadcast %c0_i32_25 : i32 to vector<32x64xi32>
    %24 = arith.cmpi sge, %17, %23 : vector<32x64xi32>
    %25 = arith.andi %22, %24 : vector<32x64xi1>
    %c16_i32 = arith.constant 16 : i32
    %26 = vector.broadcast %c16_i32 : i32 to vector<32x64xi32>
    %27 = arith.cmpi slt, %17, %26 : vector<32x64xi32>
    %28 = arith.andi %25, %27 : vector<32x64xi1>
    %c8_i32_26 = arith.constant 8 : i32
    %29 = vector.broadcast %c8_i32_26 : i32 to vector<32x64xi32>
    %30 = arith.cmpi sge, %16, %29 : vector<32x64xi32>
    %c16_i32_27 = arith.constant 16 : i32
    %31 = vector.broadcast %c16_i32_27 : i32 to vector<32x64xi32>
    %32 = arith.cmpi slt, %16, %31 : vector<32x64xi32>
    %33 = arith.andi %30, %32 : vector<32x64xi1>
    %c16_i32_28 = arith.constant 16 : i32
    %34 = vector.broadcast %c16_i32_28 : i32 to vector<32x64xi32>
    %35 = arith.cmpi sge, %17, %34 : vector<32x64xi32>
    %36 = arith.andi %33, %35 : vector<32x64xi1>
    %c32_i32 = arith.constant 32 : i32
    %37 = vector.broadcast %c32_i32 : i32 to vector<32x64xi32>
    %38 = arith.cmpi slt, %17, %37 : vector<32x64xi32>
    %39 = arith.andi %36, %38 : vector<32x64xi1>
    %40 = arith.ori %28, %39 : vector<32x64xi1>
    %c16_i32_29 = arith.constant 16 : i32
    %41 = vector.broadcast %c16_i32_29 : i32 to vector<32x64xi32>
    %42 = arith.cmpi sge, %16, %41 : vector<32x64xi32>
    %c24_i32 = arith.constant 24 : i32
    %43 = vector.broadcast %c24_i32 : i32 to vector<32x64xi32>
    %44 = arith.cmpi slt, %16, %43 : vector<32x64xi32>
    %45 = arith.andi %42, %44 : vector<32x64xi1>
    %c32_i32_30 = arith.constant 32 : i32
    %46 = vector.broadcast %c32_i32_30 : i32 to vector<32x64xi32>
    %47 = arith.cmpi sge, %17, %46 : vector<32x64xi32>
    %48 = arith.andi %45, %47 : vector<32x64xi1>
    %c48_i32 = arith.constant 48 : i32
    %49 = vector.broadcast %c48_i32 : i32 to vector<32x64xi32>
    %50 = arith.cmpi slt, %17, %49 : vector<32x64xi32>
    %51 = arith.andi %48, %50 : vector<32x64xi1>
    %52 = arith.ori %40, %51 : vector<32x64xi1>
    %c24_i32_31 = arith.constant 24 : i32
    %53 = vector.broadcast %c24_i32_31 : i32 to vector<32x64xi32>
    %54 = arith.cmpi sge, %16, %53 : vector<32x64xi32>
    %c32_i32_32 = arith.constant 32 : i32
    %55 = vector.broadcast %c32_i32_32 : i32 to vector<32x64xi32>
    %56 = arith.cmpi slt, %16, %55 : vector<32x64xi32>
    %57 = arith.andi %54, %56 : vector<32x64xi1>
    %c48_i32_33 = arith.constant 48 : i32
    %58 = vector.broadcast %c48_i32_33 : i32 to vector<32x64xi32>
    %59 = arith.cmpi sge, %17, %58 : vector<32x64xi32>
    %60 = arith.andi %57, %59 : vector<32x64xi1>
    %c64_i32 = arith.constant 64 : i32
    %61 = vector.broadcast %c64_i32 : i32 to vector<32x64xi32>
    %62 = arith.cmpi slt, %17, %61 : vector<32x64xi32>
    %63 = arith.andi %60, %62 : vector<32x64xi1>
    %64 = arith.ori %52, %63 : vector<32x64xi1>
    %65 = arith.extui %64 : vector<32x64xi1> to vector<32x64xi32>
    %66 = arith.sitofp %65 : vector<32x64xi32> to vector<32x64xf32>
    %67 = tpu.iota {dimensions = array<i32: 0>} : vector<64x32xi32>
    %68 = tpu.iota {dimensions = array<i32: 1>} : vector<64x32xi32>
    %c0_i32_34 = arith.constant 0 : i32
    %69 = vector.broadcast %c0_i32_34 : i32 to vector<64x32xi32>
    %70 = arith.cmpi sge, %67, %69 : vector<64x32xi32>
    %c16_i32_35 = arith.constant 16 : i32
    %71 = vector.broadcast %c16_i32_35 : i32 to vector<64x32xi32>
    %72 = arith.cmpi slt, %67, %71 : vector<64x32xi32>
    %73 = arith.andi %70, %72 : vector<64x32xi1>
    %c0_i32_36 = arith.constant 0 : i32
    %74 = vector.broadcast %c0_i32_36 : i32 to vector<64x32xi32>
    %75 = arith.cmpi sge, %68, %74 : vector<64x32xi32>
    %76 = arith.andi %73, %75 : vector<64x32xi1>
    %c8_i32_37 = arith.constant 8 : i32
    %77 = vector.broadcast %c8_i32_37 : i32 to vector<64x32xi32>
    %78 = arith.cmpi slt, %68, %77 : vector<64x32xi32>
    %79 = arith.andi %76, %78 : vector<64x32xi1>
    %c16_i32_38 = arith.constant 16 : i32
    %80 = vector.broadcast %c16_i32_38 : i32 to vector<64x32xi32>
    %81 = arith.cmpi sge, %67, %80 : vector<64x32xi32>
    %c32_i32_39 = arith.constant 32 : i32
    %82 = vector.broadcast %c32_i32_39 : i32 to vector<64x32xi32>
    %83 = arith.cmpi slt, %67, %82 : vector<64x32xi32>
    %84 = arith.andi %81, %83 : vector<64x32xi1>
    %c8_i32_40 = arith.constant 8 : i32
    %85 = vector.broadcast %c8_i32_40 : i32 to vector<64x32xi32>
    %86 = arith.cmpi sge, %68, %85 : vector<64x32xi32>
    %87 = arith.andi %84, %86 : vector<64x32xi1>
    %c16_i32_41 = arith.constant 16 : i32
    %88 = vector.broadcast %c16_i32_41 : i32 to vector<64x32xi32>
    %89 = arith.cmpi slt, %68, %88 : vector<64x32xi32>
    %90 = arith.andi %87, %89 : vector<64x32xi1>
    %91 = arith.ori %79, %90 : vector<64x32xi1>
    %c32_i32_42 = arith.constant 32 : i32
    %92 = vector.broadcast %c32_i32_42 : i32 to vector<64x32xi32>
    %93 = arith.cmpi sge, %67, %92 : vector<64x32xi32>
    %c48_i32_43 = arith.constant 48 : i32
    %94 = vector.broadcast %c48_i32_43 : i32 to vector<64x32xi32>
    %95 = arith.cmpi slt, %67, %94 : vector<64x32xi32>
    %96 = arith.andi %93, %95 : vector<64x32xi1>
    %c16_i32_44 = arith.constant 16 : i32
    %97 = vector.broadcast %c16_i32_44 : i32 to vector<64x32xi32>
    %98 = arith.cmpi sge, %68, %97 : vector<64x32xi32>
    %99 = arith.andi %96, %98 : vector<64x32xi1>
    %c24_i32_45 = arith.constant 24 : i32
    %100 = vector.broadcast %c24_i32_45 : i32 to vector<64x32xi32>
    %101 = arith.cmpi slt, %68, %100 : vector<64x32xi32>
    %102 = arith.andi %99, %101 : vector<64x32xi1>
    %103 = arith.ori %91, %102 : vector<64x32xi1>
    %c48_i32_46 = arith.constant 48 : i32
    %104 = vector.broadcast %c48_i32_46 : i32 to vector<64x32xi32>
    %105 = arith.cmpi sge, %67, %104 : vector<64x32xi32>
    %c64_i32_47 = arith.constant 64 : i32
    %106 = vector.broadcast %c64_i32_47 : i32 to vector<64x32xi32>
    %107 = arith.cmpi slt, %67, %106 : vector<64x32xi32>
    %108 = arith.andi %105, %107 : vector<64x32xi1>
    %c24_i32_48 = arith.constant 24 : i32
    %109 = vector.broadcast %c24_i32_48 : i32 to vector<64x32xi32>
    %110 = arith.cmpi sge, %68, %109 : vector<64x32xi32>
    %111 = arith.andi %108, %110 : vector<64x32xi1>
    %c32_i32_49 = arith.constant 32 : i32
    %112 = vector.broadcast %c32_i32_49 : i32 to vector<64x32xi32>
    %113 = arith.cmpi slt, %68, %112 : vector<64x32xi32>
    %114 = arith.andi %111, %113 : vector<64x32xi1>
    %115 = arith.ori %103, %114 : vector<64x32xi1>
    %116 = arith.extui %115 : vector<64x32xi1> to vector<64x32xi32>
    %117 = arith.sitofp %116 : vector<64x32xi32> to vector<64x32xf32>
    %118 = vector.extract_strided_slice %14 {offsets = [0, 0], sizes = [32, 64], strides = [1, 1]} : vector<32x96xbf16> to vector<32x64xbf16>
    %119 = arith.truncf %13 : vector<16x32xf32> to vector<16x32xbf16>
    %cst = arith.constant dense<0.000000e+00> : vector<16x64xf32>
    %120 = tpu.matmul %119, %118, %cst {dimension_numbers = #tpu.dot_dimension_numbers<[1], [0], [0], [1], [0, 0, 1, 1], [], []>} : vector<16x32xbf16>, vector<32x64xbf16>, vector<16x64xf32> -> vector<16x64xf32>
    %121 = vector.extract_strided_slice %15 {offsets = [0, 0], sizes = [1, 64], strides = [1, 1]} : vector<1x96xf32> to vector<1x64xf32>
    %122 = vector.broadcast %121 : vector<1x64xf32> to vector<16x64xf32>
    %123 = arith.addf %120, %122 : vector<16x64xf32>
    %124 = vector.extract_strided_slice %123 {offsets = [0, 0], sizes = [16, 32], strides = [1, 1]} : vector<16x64xf32> to vector<16x32xf32>
    %cst_50 = arith.constant 0.353553385 : f32
    %125 = vector.broadcast %cst_50 : f32 to vector<16x32xf32>
    %126 = arith.mulf %124, %125 : vector<16x32xf32>
    %127 = vector.extract_strided_slice %123 {offsets = [0, 32], sizes = [16, 32], strides = [1, 1]} : vector<16x64xf32> to vector<16x32xf32>
    %128 = vector.extract_strided_slice %14 {offsets = [0, 64], sizes = [32, 32], strides = [1, 1]} : vector<32x96xbf16> to vector<32x32xbf16>
    %129 = arith.truncf %0 : vector<16x32xf32> to vector<16x32xbf16>
    %cst_51 = arith.constant dense<0.000000e+00> : vector<16x32xf32>
    %130 = tpu.matmul %129, %128, %cst_51 {dimension_numbers = #tpu.dot_dimension_numbers<[1], [0], [0], [1], [0, 0, 1, 1], [], []>} : vector<16x32xbf16>, vector<32x32xbf16>, vector<16x32xf32> -> vector<16x32xf32>
    %131 = vector.extract_strided_slice %15 {offsets = [0, 64], sizes = [1, 32], strides = [1, 1]} : vector<1x96xf32> to vector<1x32xf32>
    %132 = vector.broadcast %131 : vector<1x32xf32> to vector<16x32xf32>
    %133 = arith.addf %130, %132 : vector<16x32xf32>
    %134 = tpu.transpose %127, [1, 0] : vector<16x32xf32> -> vector<32x16xf32>
    %135 = tpu.concatenate %134, %134, %134, %134 in 1 : vector<32x16xf32>, vector<32x16xf32>, vector<32x16xf32>, vector<32x16xf32> -> vector<32x64xf32>
    %136 = arith.mulf %135, %66 : vector<32x64xf32>
    %137 = arith.truncf %126 : vector<16x32xf32> to vector<16x32xbf16>
    %138 = arith.truncf %136 : vector<32x64xf32> to vector<32x64xbf16>
    %cst_52 = arith.constant dense<0.000000e+00> : vector<16x64xf32>
    %139 = tpu.matmul %137, %138, %cst_52 {dimension_numbers = #tpu.dot_dimension_numbers<[1], [0], [0], [1], [0, 0, 1, 1], [], []>} : vector<16x32xbf16>, vector<32x64xbf16>, vector<16x64xf32> -> vector<16x64xf32>
    %140 = arith.addf %139, %4 : vector<16x64xf32>
    %cst_53 = arith.constant dense<0xFF800000> : vector<16xf32>
    %141 = vector.multi_reduction <maximumf>, %140, %cst_53 [1] : vector<16x64xf32> to vector<16xf32>
    %142 = vector.shape_cast %141 : vector<16xf32> to vector<16x1xf32>
    %143 = vector.broadcast %142 : vector<16x1xf32> to vector<16x64xf32>
    %144 = arith.subf %140, %143 : vector<16x64xf32>
    %145 = math.exp %144 : vector<16x64xf32>
    %146 = tpu.concatenate %133, %133, %133, %133 in 0 : vector<16x32xf32>, vector<16x32xf32>, vector<16x32xf32>, vector<16x32xf32> -> vector<64x32xf32>
    %147 = arith.mulf %146, %117 : vector<64x32xf32>
    %148 = arith.truncf %145 : vector<16x64xf32> to vector<16x64xbf16>
    %149 = arith.truncf %147 : vector<64x32xf32> to vector<64x32xbf16>
    %cst_54 = arith.constant dense<0.000000e+00> : vector<16x32xf32>
    %150 = tpu.matmul %148, %149, %cst_54 {dimension_numbers = #tpu.dot_dimension_numbers<[1], [0], [0], [1], [0, 0, 1, 1], [], []>} : vector<16x64xbf16>, vector<64x32xbf16>, vector<16x32xf32> -> vector<16x32xf32>
    %151 = arith.truncf %145 : vector<16x64xf32> to vector<16x64xbf16>
    %152 = arith.truncf %117 : vector<64x32xf32> to vector<64x32xbf16>
    %cst_55 = arith.constant dense<0.000000e+00> : vector<16x32xf32>
    %153 = tpu.matmul %151, %152, %cst_55 {dimension_numbers = #tpu.dot_dimension_numbers<[1], [0], [0], [1], [0, 0, 1, 1], [], []>} : vector<16x64xbf16>, vector<64x32xbf16>, vector<16x32xf32> -> vector<16x32xf32>
    %154 = tpu.reciprocal %153 {approx = true} : vector<16x32xf32> -> vector<16x32xf32>
    %155 = arith.mulf %150, %154 : vector<16x32xf32>
    %156 = vector.extract_strided_slice %8 {offsets = [0, 0], sizes = [32, 32], strides = [1, 1]} : vector<160x32xbf16> to vector<32x32xbf16>
    %157 = arith.truncf %155 : vector<16x32xf32> to vector<16x32xbf16>
    %cst_56 = arith.constant dense<0.000000e+00> : vector<16x32xf32>
    %158 = tpu.matmul %157, %156, %cst_56 {dimension_numbers = #tpu.dot_dimension_numbers<[1], [0], [0], [1], [0, 0, 1, 1], [], []>} : vector<16x32xbf16>, vector<32x32xbf16>, vector<16x32xf32> -> vector<16x32xf32>
    %159 = vector.extract_strided_slice %12 {offsets = [1, 0], sizes = [1, 32], strides = [1, 1]} : vector<33x128xf32> to vector<1x32xf32>
    %160 = vector.broadcast %159 : vector<1x32xf32> to vector<16x32xf32>
    %161 = arith.addf %158, %160 : vector<16x32xf32>
    %162 = arith.addf %0, %161 : vector<16x32xf32>
    %163 = vector.extract_strided_slice %12 {offsets = [12, 0], sizes = [1, 32], strides = [1, 1]} : vector<33x128xf32> to vector<1x32xf32>
    %164 = vector.extract_strided_slice %12 {offsets = [13, 0], sizes = [1, 32], strides = [1, 1]} : vector<33x128xf32> to vector<1x32xf32>
    %cst_57 = arith.constant dense<0.000000e+00> : vector<16xf32>
    %165 = vector.multi_reduction <add>, %162, %cst_57 [1] : vector<16x32xf32> to vector<16xf32>
    %166 = vector.shape_cast %165 : vector<16xf32> to vector<16x1xf32>
    %cst_58 = arith.constant 3.200000e+01 : f32
    %167 = vector.broadcast %cst_58 : f32 to vector<16x1xf32>
    %168 = arith.divf %166, %167 : vector<16x1xf32>
    %169 = vector.broadcast %168 : vector<16x1xf32> to vector<16x32xf32>
    %170 = arith.subf %162, %169 : vector<16x32xf32>
    %171 = arith.mulf %170, %170 : vector<16x32xf32>
    %cst_59 = arith.constant dense<0.000000e+00> : vector<16xf32>
    %172 = vector.multi_reduction <add>, %171, %cst_59 [1] : vector<16x32xf32> to vector<16xf32>
    %173 = vector.shape_cast %172 : vector<16xf32> to vector<16x1xf32>
    %cst_60 = arith.constant 3.200000e+01 : f32
    %174 = vector.broadcast %cst_60 : f32 to vector<16x1xf32>
    %175 = arith.divf %173, %174 : vector<16x1xf32>
    %176 = vector.broadcast %168 : vector<16x1xf32> to vector<16x32xf32>
    %177 = arith.subf %162, %176 : vector<16x32xf32>
    %cst_61 = arith.constant 9.99999974E-6 : f32
    %178 = vector.broadcast %cst_61 : f32 to vector<16x1xf32>
    %179 = arith.addf %175, %178 : vector<16x1xf32>
    %180 = math.rsqrt %179 : vector<16x1xf32>
    %181 = vector.broadcast %180 : vector<16x1xf32> to vector<16x32xf32>
    %182 = arith.mulf %177, %181 : vector<16x32xf32>
    %183 = vector.broadcast %163 : vector<1x32xf32> to vector<16x32xf32>
    %184 = arith.mulf %182, %183 : vector<16x32xf32>
    %185 = vector.broadcast %164 : vector<1x32xf32> to vector<16x32xf32>
    %186 = arith.addf %184, %185 : vector<16x32xf32>
    %187 = vector.extract_strided_slice %9 {offsets = [0, 0], sizes = [32, 64], strides = [1, 1]} : vector<96x64xbf16> to vector<32x64xbf16>
    %188 = arith.truncf %186 : vector<16x32xf32> to vector<16x32xbf16>
    %cst_62 = arith.constant dense<0.000000e+00> : vector<16x64xf32>
    %189 = tpu.matmul %188, %187, %cst_62 {dimension_numbers = #tpu.dot_dimension_numbers<[1], [0], [0], [1], [0, 0, 1, 1], [], []>} : vector<16x32xbf16>, vector<32x64xbf16>, vector<16x64xf32> -> vector<16x64xf32>
    %190 = vector.extract_strided_slice %12 {offsets = [10, 0], sizes = [1, 64], strides = [1, 1]} : vector<33x128xf32> to vector<1x64xf32>
    %191 = vector.broadcast %190 : vector<1x64xf32> to vector<16x64xf32>
    %192 = arith.addf %189, %191 : vector<16x64xf32>
    %cst_63 = arith.constant 0.000000e+00 : f32
    %193 = vector.broadcast %cst_63 : f32 to vector<16x64xf32>
    %194 = arith.maximumf %192, %193 : vector<16x64xf32>
    %195 = vector.extract_strided_slice %10 {offsets = [0, 0], sizes = [64, 32], strides = [1, 1]} : vector<192x32xbf16> to vector<64x32xbf16>
    %196 = arith.truncf %194 : vector<16x64xf32> to vector<16x64xbf16>
    %cst_64 = arith.constant dense<0.000000e+00> : vector<16x32xf32>
    %197 = tpu.matmul %196, %195, %cst_64 {dimension_numbers = #tpu.dot_dimension_numbers<[1], [0], [0], [1], [0, 0, 1, 1], [], []>} : vector<16x64xbf16>, vector<64x32xbf16>, vector<16x32xf32> -> vector<16x32xf32>
    %198 = vector.extract_strided_slice %12 {offsets = [11, 0], sizes = [1, 32], strides = [1, 1]} : vector<33x128xf32> to vector<1x32xf32>
    %199 = vector.broadcast %198 : vector<1x32xf32> to vector<16x32xf32>
    %200 = arith.addf %197, %199 : vector<16x32xf32>
    %201 = arith.addf %186, %200 : vector<16x32xf32>
    %202 = vector.extract_strided_slice %12 {offsets = [14, 0], sizes = [1, 32], strides = [1, 1]} : vector<33x128xf32> to vector<1x32xf32>
    %203 = vector.extract_strided_slice %12 {offsets = [15, 0], sizes = [1, 32], strides = [1, 1]} : vector<33x128xf32> to vector<1x32xf32>
    %cst_65 = arith.constant dense<0.000000e+00> : vector<16xf32>
    %204 = vector.multi_reduction <add>, %201, %cst_65 [1] : vector<16x32xf32> to vector<16xf32>
    %205 = vector.shape_cast %204 : vector<16xf32> to vector<16x1xf32>
    %cst_66 = arith.constant 3.200000e+01 : f32
    %206 = vector.broadcast %cst_66 : f32 to vector<16x1xf32>
    %207 = arith.divf %205, %206 : vector<16x1xf32>
    %208 = vector.broadcast %207 : vector<16x1xf32> to vector<16x32xf32>
    %209 = arith.subf %201, %208 : vector<16x32xf32>
    %210 = arith.mulf %209, %209 : vector<16x32xf32>
    %cst_67 = arith.constant dense<0.000000e+00> : vector<16xf32>
    %211 = vector.multi_reduction <add>, %210, %cst_67 [1] : vector<16x32xf32> to vector<16xf32>
    %212 = vector.shape_cast %211 : vector<16xf32> to vector<16x1xf32>
    %cst_68 = arith.constant 3.200000e+01 : f32
    %213 = vector.broadcast %cst_68 : f32 to vector<16x1xf32>
    %214 = arith.divf %212, %213 : vector<16x1xf32>
    %215 = vector.broadcast %207 : vector<16x1xf32> to vector<16x32xf32>
    %216 = arith.subf %201, %215 : vector<16x32xf32>
    %cst_69 = arith.constant 9.99999974E-6 : f32
    %217 = vector.broadcast %cst_69 : f32 to vector<16x1xf32>
    %218 = arith.addf %214, %217 : vector<16x1xf32>
    %219 = math.rsqrt %218 : vector<16x1xf32>
    %220 = vector.broadcast %219 : vector<16x1xf32> to vector<16x32xf32>
    %221 = arith.mulf %216, %220 : vector<16x32xf32>
    %222 = vector.broadcast %202 : vector<1x32xf32> to vector<16x32xf32>
    %223 = arith.mulf %221, %222 : vector<16x32xf32>
    %224 = vector.broadcast %203 : vector<1x32xf32> to vector<16x32xf32>
    %225 = arith.addf %223, %224 : vector<16x32xf32>
    %226 = arith.addf %225, %2 : vector<16x32xf32>
    %227 = arith.addf %1, %3 : vector<16x32xf32>
    %228 = vector.extract_strided_slice %7 {offsets = [32, 0], sizes = [32, 96], strides = [1, 1]} : vector<160x96xbf16> to vector<32x96xbf16>
    %229 = vector.extract_strided_slice %12 {offsets = [2, 0], sizes = [1, 96], strides = [1, 1]} : vector<33x128xf32> to vector<1x96xf32>
    %230 = vector.extract_strided_slice %228 {offsets = [0, 0], sizes = [32, 64], strides = [1, 1]} : vector<32x96xbf16> to vector<32x64xbf16>
    %231 = arith.truncf %227 : vector<16x32xf32> to vector<16x32xbf16>
    %cst_70 = arith.constant dense<0.000000e+00> : vector<16x64xf32>
    %232 = tpu.matmul %231, %230, %cst_70 {dimension_numbers = #tpu.dot_dimension_numbers<[1], [0], [0], [1], [0, 0, 1, 1], [], []>} : vector<16x32xbf16>, vector<32x64xbf16>, vector<16x64xf32> -> vector<16x64xf32>
    %233 = vector.extract_strided_slice %229 {offsets = [0, 0], sizes = [1, 64], strides = [1, 1]} : vector<1x96xf32> to vector<1x64xf32>
    %234 = vector.broadcast %233 : vector<1x64xf32> to vector<16x64xf32>
    %235 = arith.addf %232, %234 : vector<16x64xf32>
    %236 = vector.extract_strided_slice %235 {offsets = [0, 0], sizes = [16, 32], strides = [1, 1]} : vector<16x64xf32> to vector<16x32xf32>
    %cst_71 = arith.constant 0.353553385 : f32
    %237 = vector.broadcast %cst_71 : f32 to vector<16x32xf32>
    %238 = arith.mulf %236, %237 : vector<16x32xf32>
    %239 = vector.extract_strided_slice %235 {offsets = [0, 32], sizes = [16, 32], strides = [1, 1]} : vector<16x64xf32> to vector<16x32xf32>
    %240 = vector.extract_strided_slice %228 {offsets = [0, 64], sizes = [32, 32], strides = [1, 1]} : vector<32x96xbf16> to vector<32x32xbf16>
    %241 = arith.truncf %1 : vector<16x32xf32> to vector<16x32xbf16>
    %cst_72 = arith.constant dense<0.000000e+00> : vector<16x32xf32>
    %242 = tpu.matmul %241, %240, %cst_72 {dimension_numbers = #tpu.dot_dimension_numbers<[1], [0], [0], [1], [0, 0, 1, 1], [], []>} : vector<16x32xbf16>, vector<32x32xbf16>, vector<16x32xf32> -> vector<16x32xf32>
    %243 = vector.extract_strided_slice %229 {offsets = [0, 64], sizes = [1, 32], strides = [1, 1]} : vector<1x96xf32> to vector<1x32xf32>
    %244 = vector.broadcast %243 : vector<1x32xf32> to vector<16x32xf32>
    %245 = arith.addf %242, %244 : vector<16x32xf32>
    %246 = tpu.transpose %239, [1, 0] : vector<16x32xf32> -> vector<32x16xf32>
    %247 = tpu.concatenate %246, %246, %246, %246 in 1 : vector<32x16xf32>, vector<32x16xf32>, vector<32x16xf32>, vector<32x16xf32> -> vector<32x64xf32>
    %248 = arith.mulf %247, %66 : vector<32x64xf32>
    %249 = arith.truncf %238 : vector<16x32xf32> to vector<16x32xbf16>
    %250 = arith.truncf %248 : vector<32x64xf32> to vector<32x64xbf16>
    %cst_73 = arith.constant dense<0.000000e+00> : vector<16x64xf32>
    %251 = tpu.matmul %249, %250, %cst_73 {dimension_numbers = #tpu.dot_dimension_numbers<[1], [0], [0], [1], [0, 0, 1, 1], [], []>} : vector<16x32xbf16>, vector<32x64xbf16>, vector<16x64xf32> -> vector<16x64xf32>
    %252 = arith.addf %251, %5 : vector<16x64xf32>
    %cst_74 = arith.constant dense<0xFF800000> : vector<16xf32>
    %253 = vector.multi_reduction <maximumf>, %252, %cst_74 [1] : vector<16x64xf32> to vector<16xf32>
    %254 = vector.shape_cast %253 : vector<16xf32> to vector<16x1xf32>
    %255 = vector.broadcast %254 : vector<16x1xf32> to vector<16x64xf32>
    %256 = arith.subf %252, %255 : vector<16x64xf32>
    %257 = math.exp %256 : vector<16x64xf32>
    %258 = tpu.concatenate %245, %245, %245, %245 in 0 : vector<16x32xf32>, vector<16x32xf32>, vector<16x32xf32>, vector<16x32xf32> -> vector<64x32xf32>
    %259 = arith.mulf %258, %117 : vector<64x32xf32>
    %260 = arith.truncf %257 : vector<16x64xf32> to vector<16x64xbf16>
    %261 = arith.truncf %259 : vector<64x32xf32> to vector<64x32xbf16>
    %cst_75 = arith.constant dense<0.000000e+00> : vector<16x32xf32>
    %262 = tpu.matmul %260, %261, %cst_75 {dimension_numbers = #tpu.dot_dimension_numbers<[1], [0], [0], [1], [0, 0, 1, 1], [], []>} : vector<16x64xbf16>, vector<64x32xbf16>, vector<16x32xf32> -> vector<16x32xf32>
    %263 = arith.truncf %257 : vector<16x64xf32> to vector<16x64xbf16>
    %264 = arith.truncf %117 : vector<64x32xf32> to vector<64x32xbf16>
    %cst_76 = arith.constant dense<0.000000e+00> : vector<16x32xf32>
    %265 = tpu.matmul %263, %264, %cst_76 {dimension_numbers = #tpu.dot_dimension_numbers<[1], [0], [0], [1], [0, 0, 1, 1], [], []>} : vector<16x64xbf16>, vector<64x32xbf16>, vector<16x32xf32> -> vector<16x32xf32>
    %266 = tpu.reciprocal %265 {approx = true} : vector<16x32xf32> -> vector<16x32xf32>
    %267 = arith.mulf %262, %266 : vector<16x32xf32>
    %268 = vector.extract_strided_slice %8 {offsets = [32, 0], sizes = [32, 32], strides = [1, 1]} : vector<160x32xbf16> to vector<32x32xbf16>
    %269 = arith.truncf %267 : vector<16x32xf32> to vector<16x32xbf16>
    %cst_77 = arith.constant dense<0.000000e+00> : vector<16x32xf32>
    %270 = tpu.matmul %269, %268, %cst_77 {dimension_numbers = #tpu.dot_dimension_numbers<[1], [0], [0], [1], [0, 0, 1, 1], [], []>} : vector<16x32xbf16>, vector<32x32xbf16>, vector<16x32xf32> -> vector<16x32xf32>
    %271 = vector.extract_strided_slice %12 {offsets = [3, 0], sizes = [1, 32], strides = [1, 1]} : vector<33x128xf32> to vector<1x32xf32>
    %272 = vector.broadcast %271 : vector<1x32xf32> to vector<16x32xf32>
    %273 = arith.addf %270, %272 : vector<16x32xf32>
    %274 = arith.addf %1, %273 : vector<16x32xf32>
    %275 = vector.extract_strided_slice %12 {offsets = [18, 0], sizes = [1, 32], strides = [1, 1]} : vector<33x128xf32> to vector<1x32xf32>
    %276 = vector.extract_strided_slice %12 {offsets = [19, 0], sizes = [1, 32], strides = [1, 1]} : vector<33x128xf32> to vector<1x32xf32>
    %cst_78 = arith.constant dense<0.000000e+00> : vector<16xf32>
    %277 = vector.multi_reduction <add>, %274, %cst_78 [1] : vector<16x32xf32> to vector<16xf32>
    %278 = vector.shape_cast %277 : vector<16xf32> to vector<16x1xf32>
    %cst_79 = arith.constant 3.200000e+01 : f32
    %279 = vector.broadcast %cst_79 : f32 to vector<16x1xf32>
    %280 = arith.divf %278, %279 : vector<16x1xf32>
    %281 = vector.broadcast %280 : vector<16x1xf32> to vector<16x32xf32>
    %282 = arith.subf %274, %281 : vector<16x32xf32>
    %283 = arith.mulf %282, %282 : vector<16x32xf32>
    %cst_80 = arith.constant dense<0.000000e+00> : vector<16xf32>
    %284 = vector.multi_reduction <add>, %283, %cst_80 [1] : vector<16x32xf32> to vector<16xf32>
    %285 = vector.shape_cast %284 : vector<16xf32> to vector<16x1xf32>
    %cst_81 = arith.constant 3.200000e+01 : f32
    %286 = vector.broadcast %cst_81 : f32 to vector<16x1xf32>
    %287 = arith.divf %285, %286 : vector<16x1xf32>
    %288 = vector.broadcast %280 : vector<16x1xf32> to vector<16x32xf32>
    %289 = arith.subf %274, %288 : vector<16x32xf32>
    %cst_82 = arith.constant 9.99999974E-6 : f32
    %290 = vector.broadcast %cst_82 : f32 to vector<16x1xf32>
    %291 = arith.addf %287, %290 : vector<16x1xf32>
    %292 = math.rsqrt %291 : vector<16x1xf32>
    %293 = vector.broadcast %292 : vector<16x1xf32> to vector<16x32xf32>
    %294 = arith.mulf %289, %293 : vector<16x32xf32>
    %295 = vector.broadcast %275 : vector<1x32xf32> to vector<16x32xf32>
    %296 = arith.mulf %294, %295 : vector<16x32xf32>
    %297 = vector.broadcast %276 : vector<1x32xf32> to vector<16x32xf32>
    %298 = arith.addf %296, %297 : vector<16x32xf32>
    %299 = arith.addf %298, %3 : vector<16x32xf32>
    %300 = vector.extract_strided_slice %7 {offsets = [64, 0], sizes = [32, 96], strides = [1, 1]} : vector<160x96xbf16> to vector<32x96xbf16>
    %301 = vector.extract_strided_slice %12 {offsets = [4, 0], sizes = [1, 96], strides = [1, 1]} : vector<33x128xf32> to vector<1x96xf32>
    %302 = vector.extract_strided_slice %300 {offsets = [0, 0], sizes = [32, 32], strides = [1, 1]} : vector<32x96xbf16> to vector<32x32xbf16>
    %303 = arith.truncf %299 : vector<16x32xf32> to vector<16x32xbf16>
    %cst_83 = arith.constant dense<0.000000e+00> : vector<16x32xf32>
    %304 = tpu.matmul %303, %302, %cst_83 {dimension_numbers = #tpu.dot_dimension_numbers<[1], [0], [0], [1], [0, 0, 1, 1], [], []>} : vector<16x32xbf16>, vector<32x32xbf16>, vector<16x32xf32> -> vector<16x32xf32>
    %305 = vector.extract_strided_slice %301 {offsets = [0, 0], sizes = [1, 32], strides = [1, 1]} : vector<1x96xf32> to vector<1x32xf32>
    %306 = vector.broadcast %305 : vector<1x32xf32> to vector<16x32xf32>
    %307 = arith.addf %304, %306 : vector<16x32xf32>
    %cst_84 = arith.constant 0.353553385 : f32
    %308 = vector.broadcast %cst_84 : f32 to vector<16x32xf32>
    %309 = arith.mulf %307, %308 : vector<16x32xf32>
    %310 = vector.extract_strided_slice %300 {offsets = [0, 32], sizes = [32, 32], strides = [1, 1]} : vector<32x96xbf16> to vector<32x32xbf16>
    %311 = arith.truncf %226 : vector<16x32xf32> to vector<16x32xbf16>
    %cst_85 = arith.constant dense<0.000000e+00> : vector<16x32xf32>
    %312 = tpu.matmul %311, %310, %cst_85 {dimension_numbers = #tpu.dot_dimension_numbers<[1], [0], [0], [1], [0, 0, 1, 1], [], []>} : vector<16x32xbf16>, vector<32x32xbf16>, vector<16x32xf32> -> vector<16x32xf32>
    %313 = vector.extract_strided_slice %301 {offsets = [0, 32], sizes = [1, 32], strides = [1, 1]} : vector<1x96xf32> to vector<1x32xf32>
    %314 = vector.broadcast %313 : vector<1x32xf32> to vector<16x32xf32>
    %315 = arith.addf %312, %314 : vector<16x32xf32>
    %316 = vector.extract_strided_slice %300 {offsets = [0, 64], sizes = [32, 32], strides = [1, 1]} : vector<32x96xbf16> to vector<32x32xbf16>
    %317 = arith.truncf %225 : vector<16x32xf32> to vector<16x32xbf16>
    %cst_86 = arith.constant dense<0.000000e+00> : vector<16x32xf32>
    %318 = tpu.matmul %317, %316, %cst_86 {dimension_numbers = #tpu.dot_dimension_numbers<[1], [0], [0], [1], [0, 0, 1, 1], [], []>} : vector<16x32xbf16>, vector<32x32xbf16>, vector<16x32xf32> -> vector<16x32xf32>
    %319 = vector.extract_strided_slice %301 {offsets = [0, 64], sizes = [1, 32], strides = [1, 1]} : vector<1x96xf32> to vector<1x32xf32>
    %320 = vector.broadcast %319 : vector<1x32xf32> to vector<16x32xf32>
    %321 = arith.addf %318, %320 : vector<16x32xf32>
    %322 = tpu.transpose %315, [1, 0] : vector<16x32xf32> -> vector<32x16xf32>
    %323 = tpu.concatenate %322, %322, %322, %322 in 1 : vector<32x16xf32>, vector<32x16xf32>, vector<32x16xf32>, vector<32x16xf32> -> vector<32x64xf32>
    %324 = arith.mulf %323, %66 : vector<32x64xf32>
    %325 = arith.truncf %309 : vector<16x32xf32> to vector<16x32xbf16>
    %326 = arith.truncf %324 : vector<32x64xf32> to vector<32x64xbf16>
    %cst_87 = arith.constant dense<0.000000e+00> : vector<16x64xf32>
    %327 = tpu.matmul %325, %326, %cst_87 {dimension_numbers = #tpu.dot_dimension_numbers<[1], [0], [0], [1], [0, 0, 1, 1], [], []>} : vector<16x32xbf16>, vector<32x64xbf16>, vector<16x64xf32> -> vector<16x64xf32>
    %328 = arith.addf %327, %6 : vector<16x64xf32>
    %cst_88 = arith.constant dense<0xFF800000> : vector<16xf32>
    %329 = vector.multi_reduction <maximumf>, %328, %cst_88 [1] : vector<16x64xf32> to vector<16xf32>
    %330 = vector.shape_cast %329 : vector<16xf32> to vector<16x1xf32>
    %331 = vector.broadcast %330 : vector<16x1xf32> to vector<16x64xf32>
    %332 = arith.subf %328, %331 : vector<16x64xf32>
    %333 = math.exp %332 : vector<16x64xf32>
    %334 = tpu.concatenate %321, %321, %321, %321 in 0 : vector<16x32xf32>, vector<16x32xf32>, vector<16x32xf32>, vector<16x32xf32> -> vector<64x32xf32>
    %335 = arith.mulf %334, %117 : vector<64x32xf32>
    %336 = arith.truncf %333 : vector<16x64xf32> to vector<16x64xbf16>
    %337 = arith.truncf %335 : vector<64x32xf32> to vector<64x32xbf16>
    %cst_89 = arith.constant dense<0.000000e+00> : vector<16x32xf32>
    %338 = tpu.matmul %336, %337, %cst_89 {dimension_numbers = #tpu.dot_dimension_numbers<[1], [0], [0], [1], [0, 0, 1, 1], [], []>} : vector<16x64xbf16>, vector<64x32xbf16>, vector<16x32xf32> -> vector<16x32xf32>
    %339 = arith.truncf %333 : vector<16x64xf32> to vector<16x64xbf16>
    %340 = arith.truncf %117 : vector<64x32xf32> to vector<64x32xbf16>
    %cst_90 = arith.constant dense<0.000000e+00> : vector<16x32xf32>
    %341 = tpu.matmul %339, %340, %cst_90 {dimension_numbers = #tpu.dot_dimension_numbers<[1], [0], [0], [1], [0, 0, 1, 1], [], []>} : vector<16x64xbf16>, vector<64x32xbf16>, vector<16x32xf32> -> vector<16x32xf32>
    %342 = tpu.reciprocal %341 {approx = true} : vector<16x32xf32> -> vector<16x32xf32>
    %343 = arith.mulf %338, %342 : vector<16x32xf32>
    %344 = vector.extract_strided_slice %8 {offsets = [64, 0], sizes = [32, 32], strides = [1, 1]} : vector<160x32xbf16> to vector<32x32xbf16>
    %345 = arith.truncf %343 : vector<16x32xf32> to vector<16x32xbf16>
    %cst_91 = arith.constant dense<0.000000e+00> : vector<16x32xf32>
    %346 = tpu.matmul %345, %344, %cst_91 {dimension_numbers = #tpu.dot_dimension_numbers<[1], [0], [0], [1], [0, 0, 1, 1], [], []>} : vector<16x32xbf16>, vector<32x32xbf16>, vector<16x32xf32> -> vector<16x32xf32>
    %347 = vector.extract_strided_slice %12 {offsets = [5, 0], sizes = [1, 32], strides = [1, 1]} : vector<33x128xf32> to vector<1x32xf32>
    %348 = vector.broadcast %347 : vector<1x32xf32> to vector<16x32xf32>
    %349 = arith.addf %346, %348 : vector<16x32xf32>
    %350 = arith.addf %298, %349 : vector<16x32xf32>
    %351 = vector.extract_strided_slice %12 {offsets = [20, 0], sizes = [1, 32], strides = [1, 1]} : vector<33x128xf32> to vector<1x32xf32>
    %352 = vector.extract_strided_slice %12 {offsets = [21, 0], sizes = [1, 32], strides = [1, 1]} : vector<33x128xf32> to vector<1x32xf32>
    %cst_92 = arith.constant dense<0.000000e+00> : vector<16xf32>
    %353 = vector.multi_reduction <add>, %350, %cst_92 [1] : vector<16x32xf32> to vector<16xf32>
    %354 = vector.shape_cast %353 : vector<16xf32> to vector<16x1xf32>
    %cst_93 = arith.constant 3.200000e+01 : f32
    %355 = vector.broadcast %cst_93 : f32 to vector<16x1xf32>
    %356 = arith.divf %354, %355 : vector<16x1xf32>
    %357 = vector.broadcast %356 : vector<16x1xf32> to vector<16x32xf32>
    %358 = arith.subf %350, %357 : vector<16x32xf32>
    %359 = arith.mulf %358, %358 : vector<16x32xf32>
    %cst_94 = arith.constant dense<0.000000e+00> : vector<16xf32>
    %360 = vector.multi_reduction <add>, %359, %cst_94 [1] : vector<16x32xf32> to vector<16xf32>
    %361 = vector.shape_cast %360 : vector<16xf32> to vector<16x1xf32>
    %cst_95 = arith.constant 3.200000e+01 : f32
    %362 = vector.broadcast %cst_95 : f32 to vector<16x1xf32>
    %363 = arith.divf %361, %362 : vector<16x1xf32>
    %364 = vector.broadcast %356 : vector<16x1xf32> to vector<16x32xf32>
    %365 = arith.subf %350, %364 : vector<16x32xf32>
    %cst_96 = arith.constant 9.99999974E-6 : f32
    %366 = vector.broadcast %cst_96 : f32 to vector<16x1xf32>
    %367 = arith.addf %363, %366 : vector<16x1xf32>
    %368 = math.rsqrt %367 : vector<16x1xf32>
    %369 = vector.broadcast %368 : vector<16x1xf32> to vector<16x32xf32>
    %370 = arith.mulf %365, %369 : vector<16x32xf32>
    %371 = vector.broadcast %351 : vector<1x32xf32> to vector<16x32xf32>
    %372 = arith.mulf %370, %371 : vector<16x32xf32>
    %373 = vector.broadcast %352 : vector<1x32xf32> to vector<16x32xf32>
    %374 = arith.addf %372, %373 : vector<16x32xf32>
    %375 = vector.extract_strided_slice %9 {offsets = [32, 0], sizes = [32, 64], strides = [1, 1]} : vector<96x64xbf16> to vector<32x64xbf16>
    %376 = arith.truncf %374 : vector<16x32xf32> to vector<16x32xbf16>
    %cst_97 = arith.constant dense<0.000000e+00> : vector<16x64xf32>
    %377 = tpu.matmul %376, %375, %cst_97 {dimension_numbers = #tpu.dot_dimension_numbers<[1], [0], [0], [1], [0, 0, 1, 1], [], []>} : vector<16x32xbf16>, vector<32x64xbf16>, vector<16x64xf32> -> vector<16x64xf32>
    %378 = vector.extract_strided_slice %12 {offsets = [16, 0], sizes = [1, 64], strides = [1, 1]} : vector<33x128xf32> to vector<1x64xf32>
    %379 = vector.broadcast %378 : vector<1x64xf32> to vector<16x64xf32>
    %380 = arith.addf %377, %379 : vector<16x64xf32>
    %cst_98 = arith.constant 0.000000e+00 : f32
    %381 = vector.broadcast %cst_98 : f32 to vector<16x64xf32>
    %382 = arith.maximumf %380, %381 : vector<16x64xf32>
    %383 = vector.extract_strided_slice %10 {offsets = [64, 0], sizes = [64, 32], strides = [1, 1]} : vector<192x32xbf16> to vector<64x32xbf16>
    %384 = arith.truncf %382 : vector<16x64xf32> to vector<16x64xbf16>
    %cst_99 = arith.constant dense<0.000000e+00> : vector<16x32xf32>
    %385 = tpu.matmul %384, %383, %cst_99 {dimension_numbers = #tpu.dot_dimension_numbers<[1], [0], [0], [1], [0, 0, 1, 1], [], []>} : vector<16x64xbf16>, vector<64x32xbf16>, vector<16x32xf32> -> vector<16x32xf32>
    %386 = vector.extract_strided_slice %12 {offsets = [17, 0], sizes = [1, 32], strides = [1, 1]} : vector<33x128xf32> to vector<1x32xf32>
    %387 = vector.broadcast %386 : vector<1x32xf32> to vector<16x32xf32>
    %388 = arith.addf %385, %387 : vector<16x32xf32>
    %389 = arith.addf %374, %388 : vector<16x32xf32>
    %390 = vector.extract_strided_slice %12 {offsets = [22, 0], sizes = [1, 32], strides = [1, 1]} : vector<33x128xf32> to vector<1x32xf32>
    %391 = vector.extract_strided_slice %12 {offsets = [23, 0], sizes = [1, 32], strides = [1, 1]} : vector<33x128xf32> to vector<1x32xf32>
    %cst_100 = arith.constant dense<0.000000e+00> : vector<16xf32>
    %392 = vector.multi_reduction <add>, %389, %cst_100 [1] : vector<16x32xf32> to vector<16xf32>
    %393 = vector.shape_cast %392 : vector<16xf32> to vector<16x1xf32>
    %cst_101 = arith.constant 3.200000e+01 : f32
    %394 = vector.broadcast %cst_101 : f32 to vector<16x1xf32>
    %395 = arith.divf %393, %394 : vector<16x1xf32>
    %396 = vector.broadcast %395 : vector<16x1xf32> to vector<16x32xf32>
    %397 = arith.subf %389, %396 : vector<16x32xf32>
    %398 = arith.mulf %397, %397 : vector<16x32xf32>
    %cst_102 = arith.constant dense<0.000000e+00> : vector<16xf32>
    %399 = vector.multi_reduction <add>, %398, %cst_102 [1] : vector<16x32xf32> to vector<16xf32>
    %400 = vector.shape_cast %399 : vector<16xf32> to vector<16x1xf32>
    %cst_103 = arith.constant 3.200000e+01 : f32
    %401 = vector.broadcast %cst_103 : f32 to vector<16x1xf32>
    %402 = arith.divf %400, %401 : vector<16x1xf32>
    %403 = vector.broadcast %395 : vector<16x1xf32> to vector<16x32xf32>
    %404 = arith.subf %389, %403 : vector<16x32xf32>
    %cst_104 = arith.constant 9.99999974E-6 : f32
    %405 = vector.broadcast %cst_104 : f32 to vector<16x1xf32>
    %406 = arith.addf %402, %405 : vector<16x1xf32>
    %407 = math.rsqrt %406 : vector<16x1xf32>
    %408 = vector.broadcast %407 : vector<16x1xf32> to vector<16x32xf32>
    %409 = arith.mulf %404, %408 : vector<16x32xf32>
    %410 = vector.broadcast %390 : vector<1x32xf32> to vector<16x32xf32>
    %411 = arith.mulf %409, %410 : vector<16x32xf32>
    %412 = vector.broadcast %391 : vector<1x32xf32> to vector<16x32xf32>
    %413 = arith.addf %411, %412 : vector<16x32xf32>
    %414 = arith.addf %413, %3 : vector<16x32xf32>
    %415 = vector.extract_strided_slice %7 {offsets = [96, 0], sizes = [32, 96], strides = [1, 1]} : vector<160x96xbf16> to vector<32x96xbf16>
    %416 = vector.extract_strided_slice %12 {offsets = [6, 0], sizes = [1, 96], strides = [1, 1]} : vector<33x128xf32> to vector<1x96xf32>
    %417 = vector.extract_strided_slice %415 {offsets = [0, 0], sizes = [32, 64], strides = [1, 1]} : vector<32x96xbf16> to vector<32x64xbf16>
    %418 = arith.truncf %414 : vector<16x32xf32> to vector<16x32xbf16>
    %cst_105 = arith.constant dense<0.000000e+00> : vector<16x64xf32>
    %419 = tpu.matmul %418, %417, %cst_105 {dimension_numbers = #tpu.dot_dimension_numbers<[1], [0], [0], [1], [0, 0, 1, 1], [], []>} : vector<16x32xbf16>, vector<32x64xbf16>, vector<16x64xf32> -> vector<16x64xf32>
    %420 = vector.extract_strided_slice %416 {offsets = [0, 0], sizes = [1, 64], strides = [1, 1]} : vector<1x96xf32> to vector<1x64xf32>
    %421 = vector.broadcast %420 : vector<1x64xf32> to vector<16x64xf32>
    %422 = arith.addf %419, %421 : vector<16x64xf32>
    %423 = vector.extract_strided_slice %422 {offsets = [0, 0], sizes = [16, 32], strides = [1, 1]} : vector<16x64xf32> to vector<16x32xf32>
    %cst_106 = arith.constant 0.353553385 : f32
    %424 = vector.broadcast %cst_106 : f32 to vector<16x32xf32>
    %425 = arith.mulf %423, %424 : vector<16x32xf32>
    %426 = vector.extract_strided_slice %422 {offsets = [0, 32], sizes = [16, 32], strides = [1, 1]} : vector<16x64xf32> to vector<16x32xf32>
    %427 = vector.extract_strided_slice %415 {offsets = [0, 64], sizes = [32, 32], strides = [1, 1]} : vector<32x96xbf16> to vector<32x32xbf16>
    %428 = arith.truncf %413 : vector<16x32xf32> to vector<16x32xbf16>
    %cst_107 = arith.constant dense<0.000000e+00> : vector<16x32xf32>
    %429 = tpu.matmul %428, %427, %cst_107 {dimension_numbers = #tpu.dot_dimension_numbers<[1], [0], [0], [1], [0, 0, 1, 1], [], []>} : vector<16x32xbf16>, vector<32x32xbf16>, vector<16x32xf32> -> vector<16x32xf32>
    %430 = vector.extract_strided_slice %416 {offsets = [0, 64], sizes = [1, 32], strides = [1, 1]} : vector<1x96xf32> to vector<1x32xf32>
    %431 = vector.broadcast %430 : vector<1x32xf32> to vector<16x32xf32>
    %432 = arith.addf %429, %431 : vector<16x32xf32>
    %433 = tpu.transpose %426, [1, 0] : vector<16x32xf32> -> vector<32x16xf32>
    %434 = tpu.concatenate %433, %433, %433, %433 in 1 : vector<32x16xf32>, vector<32x16xf32>, vector<32x16xf32>, vector<32x16xf32> -> vector<32x64xf32>
    %435 = arith.mulf %434, %66 : vector<32x64xf32>
    %436 = arith.truncf %425 : vector<16x32xf32> to vector<16x32xbf16>
    %437 = arith.truncf %435 : vector<32x64xf32> to vector<32x64xbf16>
    %cst_108 = arith.constant dense<0.000000e+00> : vector<16x64xf32>
    %438 = tpu.matmul %436, %437, %cst_108 {dimension_numbers = #tpu.dot_dimension_numbers<[1], [0], [0], [1], [0, 0, 1, 1], [], []>} : vector<16x32xbf16>, vector<32x64xbf16>, vector<16x64xf32> -> vector<16x64xf32>
    %439 = arith.addf %438, %5 : vector<16x64xf32>
    %cst_109 = arith.constant dense<0xFF800000> : vector<16xf32>
    %440 = vector.multi_reduction <maximumf>, %439, %cst_109 [1] : vector<16x64xf32> to vector<16xf32>
    %441 = vector.shape_cast %440 : vector<16xf32> to vector<16x1xf32>
    %442 = vector.broadcast %441 : vector<16x1xf32> to vector<16x64xf32>
    %443 = arith.subf %439, %442 : vector<16x64xf32>
    %444 = math.exp %443 : vector<16x64xf32>
    %445 = tpu.concatenate %432, %432, %432, %432 in 0 : vector<16x32xf32>, vector<16x32xf32>, vector<16x32xf32>, vector<16x32xf32> -> vector<64x32xf32>
    %446 = arith.mulf %445, %117 : vector<64x32xf32>
    %447 = arith.truncf %444 : vector<16x64xf32> to vector<16x64xbf16>
    %448 = arith.truncf %446 : vector<64x32xf32> to vector<64x32xbf16>
    %cst_110 = arith.constant dense<0.000000e+00> : vector<16x32xf32>
    %449 = tpu.matmul %447, %448, %cst_110 {dimension_numbers = #tpu.dot_dimension_numbers<[1], [0], [0], [1], [0, 0, 1, 1], [], []>} : vector<16x64xbf16>, vector<64x32xbf16>, vector<16x32xf32> -> vector<16x32xf32>
    %450 = arith.truncf %444 : vector<16x64xf32> to vector<16x64xbf16>
    %451 = arith.truncf %117 : vector<64x32xf32> to vector<64x32xbf16>
    %cst_111 = arith.constant dense<0.000000e+00> : vector<16x32xf32>
    %452 = tpu.matmul %450, %451, %cst_111 {dimension_numbers = #tpu.dot_dimension_numbers<[1], [0], [0], [1], [0, 0, 1, 1], [], []>} : vector<16x64xbf16>, vector<64x32xbf16>, vector<16x32xf32> -> vector<16x32xf32>
    %453 = tpu.reciprocal %452 {approx = true} : vector<16x32xf32> -> vector<16x32xf32>
    %454 = arith.mulf %449, %453 : vector<16x32xf32>
    %455 = vector.extract_strided_slice %8 {offsets = [96, 0], sizes = [32, 32], strides = [1, 1]} : vector<160x32xbf16> to vector<32x32xbf16>
    %456 = arith.truncf %454 : vector<16x32xf32> to vector<16x32xbf16>
    %cst_112 = arith.constant dense<0.000000e+00> : vector<16x32xf32>
    %457 = tpu.matmul %456, %455, %cst_112 {dimension_numbers = #tpu.dot_dimension_numbers<[1], [0], [0], [1], [0, 0, 1, 1], [], []>} : vector<16x32xbf16>, vector<32x32xbf16>, vector<16x32xf32> -> vector<16x32xf32>
    %458 = vector.extract_strided_slice %12 {offsets = [7, 0], sizes = [1, 32], strides = [1, 1]} : vector<33x128xf32> to vector<1x32xf32>
    %459 = vector.broadcast %458 : vector<1x32xf32> to vector<16x32xf32>
    %460 = arith.addf %457, %459 : vector<16x32xf32>
    %461 = arith.addf %413, %460 : vector<16x32xf32>
    %462 = vector.extract_strided_slice %12 {offsets = [26, 0], sizes = [1, 32], strides = [1, 1]} : vector<33x128xf32> to vector<1x32xf32>
    %463 = vector.extract_strided_slice %12 {offsets = [27, 0], sizes = [1, 32], strides = [1, 1]} : vector<33x128xf32> to vector<1x32xf32>
    %cst_113 = arith.constant dense<0.000000e+00> : vector<16xf32>
    %464 = vector.multi_reduction <add>, %461, %cst_113 [1] : vector<16x32xf32> to vector<16xf32>
    %465 = vector.shape_cast %464 : vector<16xf32> to vector<16x1xf32>
    %cst_114 = arith.constant 3.200000e+01 : f32
    %466 = vector.broadcast %cst_114 : f32 to vector<16x1xf32>
    %467 = arith.divf %465, %466 : vector<16x1xf32>
    %468 = vector.broadcast %467 : vector<16x1xf32> to vector<16x32xf32>
    %469 = arith.subf %461, %468 : vector<16x32xf32>
    %470 = arith.mulf %469, %469 : vector<16x32xf32>
    %cst_115 = arith.constant dense<0.000000e+00> : vector<16xf32>
    %471 = vector.multi_reduction <add>, %470, %cst_115 [1] : vector<16x32xf32> to vector<16xf32>
    %472 = vector.shape_cast %471 : vector<16xf32> to vector<16x1xf32>
    %cst_116 = arith.constant 3.200000e+01 : f32
    %473 = vector.broadcast %cst_116 : f32 to vector<16x1xf32>
    %474 = arith.divf %472, %473 : vector<16x1xf32>
    %475 = vector.broadcast %467 : vector<16x1xf32> to vector<16x32xf32>
    %476 = arith.subf %461, %475 : vector<16x32xf32>
    %cst_117 = arith.constant 9.99999974E-6 : f32
    %477 = vector.broadcast %cst_117 : f32 to vector<16x1xf32>
    %478 = arith.addf %474, %477 : vector<16x1xf32>
    %479 = math.rsqrt %478 : vector<16x1xf32>
    %480 = vector.broadcast %479 : vector<16x1xf32> to vector<16x32xf32>
    %481 = arith.mulf %476, %480 : vector<16x32xf32>
    %482 = vector.broadcast %462 : vector<1x32xf32> to vector<16x32xf32>
    %483 = arith.mulf %481, %482 : vector<16x32xf32>
    %484 = vector.broadcast %463 : vector<1x32xf32> to vector<16x32xf32>
    %485 = arith.addf %483, %484 : vector<16x32xf32>
    %486 = arith.addf %485, %3 : vector<16x32xf32>
    %487 = vector.extract_strided_slice %7 {offsets = [128, 0], sizes = [32, 96], strides = [1, 1]} : vector<160x96xbf16> to vector<32x96xbf16>
    %488 = vector.extract_strided_slice %12 {offsets = [8, 0], sizes = [1, 96], strides = [1, 1]} : vector<33x128xf32> to vector<1x96xf32>
    %489 = vector.extract_strided_slice %487 {offsets = [0, 0], sizes = [32, 32], strides = [1, 1]} : vector<32x96xbf16> to vector<32x32xbf16>
    %490 = arith.truncf %486 : vector<16x32xf32> to vector<16x32xbf16>
    %cst_118 = arith.constant dense<0.000000e+00> : vector<16x32xf32>
    %491 = tpu.matmul %490, %489, %cst_118 {dimension_numbers = #tpu.dot_dimension_numbers<[1], [0], [0], [1], [0, 0, 1, 1], [], []>} : vector<16x32xbf16>, vector<32x32xbf16>, vector<16x32xf32> -> vector<16x32xf32>
    %492 = vector.extract_strided_slice %488 {offsets = [0, 0], sizes = [1, 32], strides = [1, 1]} : vector<1x96xf32> to vector<1x32xf32>
    %493 = vector.broadcast %492 : vector<1x32xf32> to vector<16x32xf32>
    %494 = arith.addf %491, %493 : vector<16x32xf32>
    %cst_119 = arith.constant 0.353553385 : f32
    %495 = vector.broadcast %cst_119 : f32 to vector<16x32xf32>
    %496 = arith.mulf %494, %495 : vector<16x32xf32>
    %497 = vector.extract_strided_slice %487 {offsets = [0, 32], sizes = [32, 32], strides = [1, 1]} : vector<32x96xbf16> to vector<32x32xbf16>
    %498 = arith.truncf %226 : vector<16x32xf32> to vector<16x32xbf16>
    %cst_120 = arith.constant dense<0.000000e+00> : vector<16x32xf32>
    %499 = tpu.matmul %498, %497, %cst_120 {dimension_numbers = #tpu.dot_dimension_numbers<[1], [0], [0], [1], [0, 0, 1, 1], [], []>} : vector<16x32xbf16>, vector<32x32xbf16>, vector<16x32xf32> -> vector<16x32xf32>
    %500 = vector.extract_strided_slice %488 {offsets = [0, 32], sizes = [1, 32], strides = [1, 1]} : vector<1x96xf32> to vector<1x32xf32>
    %501 = vector.broadcast %500 : vector<1x32xf32> to vector<16x32xf32>
    %502 = arith.addf %499, %501 : vector<16x32xf32>
    %503 = vector.extract_strided_slice %487 {offsets = [0, 64], sizes = [32, 32], strides = [1, 1]} : vector<32x96xbf16> to vector<32x32xbf16>
    %504 = arith.truncf %225 : vector<16x32xf32> to vector<16x32xbf16>
    %cst_121 = arith.constant dense<0.000000e+00> : vector<16x32xf32>
    %505 = tpu.matmul %504, %503, %cst_121 {dimension_numbers = #tpu.dot_dimension_numbers<[1], [0], [0], [1], [0, 0, 1, 1], [], []>} : vector<16x32xbf16>, vector<32x32xbf16>, vector<16x32xf32> -> vector<16x32xf32>
    %506 = vector.extract_strided_slice %488 {offsets = [0, 64], sizes = [1, 32], strides = [1, 1]} : vector<1x96xf32> to vector<1x32xf32>
    %507 = vector.broadcast %506 : vector<1x32xf32> to vector<16x32xf32>
    %508 = arith.addf %505, %507 : vector<16x32xf32>
    %509 = tpu.transpose %502, [1, 0] : vector<16x32xf32> -> vector<32x16xf32>
    %510 = tpu.concatenate %509, %509, %509, %509 in 1 : vector<32x16xf32>, vector<32x16xf32>, vector<32x16xf32>, vector<32x16xf32> -> vector<32x64xf32>
    %511 = arith.mulf %510, %66 : vector<32x64xf32>
    %512 = arith.truncf %496 : vector<16x32xf32> to vector<16x32xbf16>
    %513 = arith.truncf %511 : vector<32x64xf32> to vector<32x64xbf16>
    %cst_122 = arith.constant dense<0.000000e+00> : vector<16x64xf32>
    %514 = tpu.matmul %512, %513, %cst_122 {dimension_numbers = #tpu.dot_dimension_numbers<[1], [0], [0], [1], [0, 0, 1, 1], [], []>} : vector<16x32xbf16>, vector<32x64xbf16>, vector<16x64xf32> -> vector<16x64xf32>
    %515 = arith.addf %514, %6 : vector<16x64xf32>
    %cst_123 = arith.constant dense<0xFF800000> : vector<16xf32>
    %516 = vector.multi_reduction <maximumf>, %515, %cst_123 [1] : vector<16x64xf32> to vector<16xf32>
    %517 = vector.shape_cast %516 : vector<16xf32> to vector<16x1xf32>
    %518 = vector.broadcast %517 : vector<16x1xf32> to vector<16x64xf32>
    %519 = arith.subf %515, %518 : vector<16x64xf32>
    %520 = math.exp %519 : vector<16x64xf32>
    %521 = tpu.concatenate %508, %508, %508, %508 in 0 : vector<16x32xf32>, vector<16x32xf32>, vector<16x32xf32>, vector<16x32xf32> -> vector<64x32xf32>
    %522 = arith.mulf %521, %117 : vector<64x32xf32>
    %523 = arith.truncf %520 : vector<16x64xf32> to vector<16x64xbf16>
    %524 = arith.truncf %522 : vector<64x32xf32> to vector<64x32xbf16>
    %cst_124 = arith.constant dense<0.000000e+00> : vector<16x32xf32>
    %525 = tpu.matmul %523, %524, %cst_124 {dimension_numbers = #tpu.dot_dimension_numbers<[1], [0], [0], [1], [0, 0, 1, 1], [], []>} : vector<16x64xbf16>, vector<64x32xbf16>, vector<16x32xf32> -> vector<16x32xf32>
    %526 = arith.truncf %520 : vector<16x64xf32> to vector<16x64xbf16>
    %527 = arith.truncf %117 : vector<64x32xf32> to vector<64x32xbf16>
    %cst_125 = arith.constant dense<0.000000e+00> : vector<16x32xf32>
    %528 = tpu.matmul %526, %527, %cst_125 {dimension_numbers = #tpu.dot_dimension_numbers<[1], [0], [0], [1], [0, 0, 1, 1], [], []>} : vector<16x64xbf16>, vector<64x32xbf16>, vector<16x32xf32> -> vector<16x32xf32>
    %529 = tpu.reciprocal %528 {approx = true} : vector<16x32xf32> -> vector<16x32xf32>
    %530 = arith.mulf %525, %529 : vector<16x32xf32>
    %531 = vector.extract_strided_slice %8 {offsets = [128, 0], sizes = [32, 32], strides = [1, 1]} : vector<160x32xbf16> to vector<32x32xbf16>
    %532 = arith.truncf %530 : vector<16x32xf32> to vector<16x32xbf16>
    %cst_126 = arith.constant dense<0.000000e+00> : vector<16x32xf32>
    %533 = tpu.matmul %532, %531, %cst_126 {dimension_numbers = #tpu.dot_dimension_numbers<[1], [0], [0], [1], [0, 0, 1, 1], [], []>} : vector<16x32xbf16>, vector<32x32xbf16>, vector<16x32xf32> -> vector<16x32xf32>
    %534 = vector.extract_strided_slice %12 {offsets = [9, 0], sizes = [1, 32], strides = [1, 1]} : vector<33x128xf32> to vector<1x32xf32>
    %535 = vector.broadcast %534 : vector<1x32xf32> to vector<16x32xf32>
    %536 = arith.addf %533, %535 : vector<16x32xf32>
    %537 = arith.addf %485, %536 : vector<16x32xf32>
    %538 = vector.extract_strided_slice %12 {offsets = [28, 0], sizes = [1, 32], strides = [1, 1]} : vector<33x128xf32> to vector<1x32xf32>
    %539 = vector.extract_strided_slice %12 {offsets = [29, 0], sizes = [1, 32], strides = [1, 1]} : vector<33x128xf32> to vector<1x32xf32>
    %cst_127 = arith.constant dense<0.000000e+00> : vector<16xf32>
    %540 = vector.multi_reduction <add>, %537, %cst_127 [1] : vector<16x32xf32> to vector<16xf32>
    %541 = vector.shape_cast %540 : vector<16xf32> to vector<16x1xf32>
    %cst_128 = arith.constant 3.200000e+01 : f32
    %542 = vector.broadcast %cst_128 : f32 to vector<16x1xf32>
    %543 = arith.divf %541, %542 : vector<16x1xf32>
    %544 = vector.broadcast %543 : vector<16x1xf32> to vector<16x32xf32>
    %545 = arith.subf %537, %544 : vector<16x32xf32>
    %546 = arith.mulf %545, %545 : vector<16x32xf32>
    %cst_129 = arith.constant dense<0.000000e+00> : vector<16xf32>
    %547 = vector.multi_reduction <add>, %546, %cst_129 [1] : vector<16x32xf32> to vector<16xf32>
    %548 = vector.shape_cast %547 : vector<16xf32> to vector<16x1xf32>
    %cst_130 = arith.constant 3.200000e+01 : f32
    %549 = vector.broadcast %cst_130 : f32 to vector<16x1xf32>
    %550 = arith.divf %548, %549 : vector<16x1xf32>
    %551 = vector.broadcast %543 : vector<16x1xf32> to vector<16x32xf32>
    %552 = arith.subf %537, %551 : vector<16x32xf32>
    %cst_131 = arith.constant 9.99999974E-6 : f32
    %553 = vector.broadcast %cst_131 : f32 to vector<16x1xf32>
    %554 = arith.addf %550, %553 : vector<16x1xf32>
    %555 = math.rsqrt %554 : vector<16x1xf32>
    %556 = vector.broadcast %555 : vector<16x1xf32> to vector<16x32xf32>
    %557 = arith.mulf %552, %556 : vector<16x32xf32>
    %558 = vector.broadcast %538 : vector<1x32xf32> to vector<16x32xf32>
    %559 = arith.mulf %557, %558 : vector<16x32xf32>
    %560 = vector.broadcast %539 : vector<1x32xf32> to vector<16x32xf32>
    %561 = arith.addf %559, %560 : vector<16x32xf32>
    %562 = vector.extract_strided_slice %9 {offsets = [64, 0], sizes = [32, 64], strides = [1, 1]} : vector<96x64xbf16> to vector<32x64xbf16>
    %563 = arith.truncf %561 : vector<16x32xf32> to vector<16x32xbf16>
    %cst_132 = arith.constant dense<0.000000e+00> : vector<16x64xf32>
    %564 = tpu.matmul %563, %562, %cst_132 {dimension_numbers = #tpu.dot_dimension_numbers<[1], [0], [0], [1], [0, 0, 1, 1], [], []>} : vector<16x32xbf16>, vector<32x64xbf16>, vector<16x64xf32> -> vector<16x64xf32>
    %565 = vector.extract_strided_slice %12 {offsets = [24, 0], sizes = [1, 64], strides = [1, 1]} : vector<33x128xf32> to vector<1x64xf32>
    %566 = vector.broadcast %565 : vector<1x64xf32> to vector<16x64xf32>
    %567 = arith.addf %564, %566 : vector<16x64xf32>
    %cst_133 = arith.constant 0.000000e+00 : f32
    %568 = vector.broadcast %cst_133 : f32 to vector<16x64xf32>
    %569 = arith.maximumf %567, %568 : vector<16x64xf32>
    %570 = vector.extract_strided_slice %10 {offsets = [128, 0], sizes = [64, 32], strides = [1, 1]} : vector<192x32xbf16> to vector<64x32xbf16>
    %571 = arith.truncf %569 : vector<16x64xf32> to vector<16x64xbf16>
    %cst_134 = arith.constant dense<0.000000e+00> : vector<16x32xf32>
    %572 = tpu.matmul %571, %570, %cst_134 {dimension_numbers = #tpu.dot_dimension_numbers<[1], [0], [0], [1], [0, 0, 1, 1], [], []>} : vector<16x64xbf16>, vector<64x32xbf16>, vector<16x32xf32> -> vector<16x32xf32>
    %573 = vector.extract_strided_slice %12 {offsets = [25, 0], sizes = [1, 32], strides = [1, 1]} : vector<33x128xf32> to vector<1x32xf32>
    %574 = vector.broadcast %573 : vector<1x32xf32> to vector<16x32xf32>
    %575 = arith.addf %572, %574 : vector<16x32xf32>
    %576 = arith.addf %561, %575 : vector<16x32xf32>
    %577 = vector.extract_strided_slice %12 {offsets = [30, 0], sizes = [1, 32], strides = [1, 1]} : vector<33x128xf32> to vector<1x32xf32>
    %578 = vector.extract_strided_slice %12 {offsets = [31, 0], sizes = [1, 32], strides = [1, 1]} : vector<33x128xf32> to vector<1x32xf32>
    %cst_135 = arith.constant dense<0.000000e+00> : vector<16xf32>
    %579 = vector.multi_reduction <add>, %576, %cst_135 [1] : vector<16x32xf32> to vector<16xf32>
    %580 = vector.shape_cast %579 : vector<16xf32> to vector<16x1xf32>
    %cst_136 = arith.constant 3.200000e+01 : f32
    %581 = vector.broadcast %cst_136 : f32 to vector<16x1xf32>
    %582 = arith.divf %580, %581 : vector<16x1xf32>
    %583 = vector.broadcast %582 : vector<16x1xf32> to vector<16x32xf32>
    %584 = arith.subf %576, %583 : vector<16x32xf32>
    %585 = arith.mulf %584, %584 : vector<16x32xf32>
    %cst_137 = arith.constant dense<0.000000e+00> : vector<16xf32>
    %586 = vector.multi_reduction <add>, %585, %cst_137 [1] : vector<16x32xf32> to vector<16xf32>
    %587 = vector.shape_cast %586 : vector<16xf32> to vector<16x1xf32>
    %cst_138 = arith.constant 3.200000e+01 : f32
    %588 = vector.broadcast %cst_138 : f32 to vector<16x1xf32>
    %589 = arith.divf %587, %588 : vector<16x1xf32>
    %590 = vector.broadcast %582 : vector<16x1xf32> to vector<16x32xf32>
    %591 = arith.subf %576, %590 : vector<16x32xf32>
    %cst_139 = arith.constant 9.99999974E-6 : f32
    %592 = vector.broadcast %cst_139 : f32 to vector<16x1xf32>
    %593 = arith.addf %589, %592 : vector<16x1xf32>
    %594 = math.rsqrt %593 : vector<16x1xf32>
    %595 = vector.broadcast %594 : vector<16x1xf32> to vector<16x32xf32>
    %596 = arith.mulf %591, %595 : vector<16x32xf32>
    %597 = vector.broadcast %577 : vector<1x32xf32> to vector<16x32xf32>
    %598 = arith.mulf %596, %597 : vector<16x32xf32>
    %599 = vector.broadcast %578 : vector<1x32xf32> to vector<16x32xf32>
    %600 = arith.addf %598, %599 : vector<16x32xf32>
    %601 = arith.truncf %600 : vector<16x32xf32> to vector<16x32xbf16>
    %cst_140 = arith.constant dense<0.000000e+00> : vector<16x128xf32>
    %602 = tpu.matmul %601, %11, %cst_140 {dimension_numbers = #tpu.dot_dimension_numbers<[1], [0], [0], [1], [0, 0, 1, 1], [], []>} : vector<16x32xbf16>, vector<32x128xbf16>, vector<16x128xf32> -> vector<16x128xf32>
    %603 = vector.extract_strided_slice %12 {offsets = [32, 0], sizes = [1, 128], strides = [1, 1]} : vector<33x128xf32> to vector<1x128xf32>
    %604 = vector.broadcast %603 : vector<1x128xf32> to vector<16x128xf32>
    %605 = arith.addf %602, %604 : vector<16x128xf32>
    %c0_141 = arith.constant 0 : index
    %c0_142 = arith.constant 0 : index
    %606 = vector.load %arg13[%c0_141, %c0_142] : memref<16x128xf32, #tpu.memory_space<vmem>>, vector<16x128xf32>
    tpu.vector_store %arg13[%c0_141, %c0_142], %605 {strides = array<i32>} : memref<16x128xf32, #tpu.memory_space<vmem>>, vector<16x128xf32>,
    return
  }
}

</mosaic_0001>

<llo_original>
// kernel: tile.19
$region0: #{tile.19}
  %s0 = inlined_call_operand.vmem [shape: f32[16,4,16], index: 0, kind: input, shape index: {}]
  %s1 = inlined_call_operand.vmem [shape: f32[16,64], index: 1, kind: output, shape index: {}]
  $region1: #{tile.19} parent=0
    #allocation0 [shape = 'u8[65536]{0}', space=vmem, size = 0x10000, scoped, tag = 'scoped mem for input reshape']
    %s3 = sshll.u32 1, 4
    %s4 = ssub.s32 %s3, 1
    %s5 = smul.addr 4, 15
    %s6 = scalar_lea.vmem %s0, %s5
    %v7 = vld [vmem:[%s6] sm:%s4]
    %s8 = scalar_lea.vmem [#allocation0], 120
    %9 = vst [vmem:[%s8] sm:%s4] %v7
    %s10 = smul.addr 4, 14
    %s11 = scalar_lea.vmem %s0, %s10
    %v12 = vld [vmem:[%s11] sm:%s4]
    %s13 = scalar_lea.vmem [#allocation0], 112
    %14 = vst [vmem:[%s13] sm:%s4] %v12
    %s15 = smul.addr 4, 13
    %s16 = scalar_lea.vmem %s0, %s15
    %v17 = vld [vmem:[%s16] sm:%s4]
    %s18 = scalar_lea.vmem [#allocation0], 104
    %19 = vst [vmem:[%s18] sm:%s4] %v17
    %s20 = smul.addr 4, 12
    %s21 = scalar_lea.vmem %s0, %s20
    %v22 = vld [vmem:[%s21] sm:%s4]
    %s23 = scalar_lea.vmem [#allocation0], 96
    %24 = vst [vmem:[%s23] sm:%s4] %v22
    %s25 = smul.addr 4, 11
    %s26 = scalar_lea.vmem %s0, %s25
    %v27 = vld [vmem:[%s26] sm:%s4]
    %s28 = scalar_lea.vmem [#allocation0], 88
    %29 = vst [vmem:[%s28] sm:%s4] %v27
    %s30 = smul.addr 4, 10
    %s31 = scalar_lea.vmem %s0, %s30
    %v32 = vld [vmem:[%s31] sm:%s4]
    %s33 = scalar_lea.vmem [#allocation0], 80
    %34 = vst [vmem:[%s33] sm:%s4] %v32
    %s35 = smul.addr 4, 9
    %s36 = scalar_lea.vmem %s0, %s35
    %v37 = vld [vmem:[%s36] sm:%s4]
    %s38 = scalar_lea.vmem [#allocation0], 72
    %39 = vst [vmem:[%s38] sm:%s4] %v37
    %s40 = smul.addr 4, 8
    %s41 = scalar_lea.vmem %s0, %s40
    %v42 = vld [vmem:[%s41] sm:%s4]
    %s43 = scalar_lea.vmem [#allocation0], 64
    %44 = vst [vmem:[%s43] sm:%s4] %v42
    %s45 = smul.addr 4, 7
    %s46 = scalar_lea.vmem %s0, %s45
    %v47 = vld [vmem:[%s46] sm:%s4]
    %s48 = scalar_lea.vmem [#allocation0], 56
    %49 = vst [vmem:[%s48] sm:%s4] %v47
    %s50 = smul.addr 4, 6
    %s51 = scalar_lea.vmem %s0, %s50
    %v52 = vld [vmem:[%s51] sm:%s4]
    %s53 = scalar_lea.vmem [#allocation0], 48
    %54 = vst [vmem:[%s53] sm:%s4] %v52
    %s55 = smul.addr 4, 5
    %s56 = scalar_lea.vmem %s0, %s55
    %v57 = vld [vmem:[%s56] sm:%s4]
    %s58 = scalar_lea.vmem [#allocation0], 40
    %59 = vst [vmem:[%s58] sm:%s4] %v57
    %s60 = smul.addr 4, 4
    %s61 = scalar_lea.vmem %s0, %s60
    %v62 = vld [vmem:[%s61] sm:%s4]
    %s63 = scalar_lea.vmem [#allocation0], 32
    %64 = vst [vmem:[%s63] sm:%s4] %v62
    %s65 = smul.addr 4, 3
    %s66 = scalar_lea.vmem %s0, %s65
    %v67 = vld [vmem:[%s66] sm:%s4]
    %s68 = scalar_lea.vmem [#allocation0], 24
    %69 = vst [vmem:[%s68] sm:%s4] %v67
    %s70 = smul.addr 4, 2
    %s71 = scalar_lea.vmem %s0, %s70
    %v72 = vld [vmem:[%s71] sm:%s4]
    %s73 = scalar_lea.vmem [#allocation0], 16
    %74 = vst [vmem:[%s73] sm:%s4] %v72
    %s75 = scalar_lea.vmem %s0, 4
    %v76 = vld [vmem:[%s75] sm:%s4]
    %s77 = scalar_lea.vmem [#allocation0], 8
    %78 = vst [vmem:[%s77] sm:%s4] %v76
    %v79 = vld [vmem:[%s0] sm:%s4]
    %80 = vst [vmem:[#allocation0] sm:%s4] %v79
    %v81 = vld [vmem:[#allocation0] ss:$8 sm:$0xf]
    %v82 = vld [vmem:[#allocation0] ss:$8 sm:$0xf0]
    %vm83 = vcmask 1047556
    %v84 = vsel %vm83, %v82, %v81
    %vm85 = vcmask 130048
    %86 = vst.msk [vmem:[%s1] sm:$0xff] %vm85, %v84
    %s87 = scalar_lea.vmem [#allocation0], 64
    %v88 = vld [vmem:[%s87] ss:$8 sm:$0xf]
    %s89 = scalar_lea.vmem [#allocation0], 64
    %v90 = vld [vmem:[%s89] ss:$8 sm:$0xf0]
    %vm91 = vcmask 1047556
    %v92 = vsel %vm91, %v90, %v88
    %vm93 = vcmask 130048
    %s94 = scalar_lea.vmem %s1, 8
    %95 = vst.msk [vmem:[%s94] sm:$0xff] %vm93, %v92
    %s96 = scalar_lea.vmem [#allocation0], 3
    %v97 = vld [vmem:[%s96] ss:$8 sm:$0xf]
    %s98 = scalar_lea.vmem [#allocation0], 3
    %v99 = vld [vmem:[%s98] ss:$8 sm:$0xf0]
    %vm100 = vcmask 1047556
    %v101 = vsel %vm100, %v99, %v97
    %102 = vrot.lane.b32.xlu0 %v101, 48
    %v103 = vpop.permute.xlu0 %102
    %vm104 = vcmask 523648
    %105 = vst.msk [vmem:[%s1] sm:$0xff] %vm104, %v103
    %s106 = scalar_lea.vmem [#allocation0], 67
    %v107 = vld [vmem:[%s106] ss:$8 sm:$0xf]
    %s108 = scalar_lea.vmem [#allocation0], 67
    %v109 = vld [vmem:[%s108] ss:$8 sm:$0xf0]
    %vm110 = vcmask 1047556
    %v111 = vsel %vm110, %v109, %v107
    %112 = vrot.lane.b32.xlu0 %v111, 48
    %v113 = vpop.permute.xlu0 %112
    %vm114 = vcmask 523648
    %s115 = scalar_lea.vmem %s1, 8
    %116 = vst.msk [vmem:[%s115] sm:$0xff] %vm114, %v113
    %s117 = scalar_lea.vmem [#allocation0], 2
    %v118 = vld [vmem:[%s117] ss:$8 sm:$0xf]
    %s119 = scalar_lea.vmem [#allocation0], 2
    %v120 = vld [vmem:[%s119] ss:$8 sm:$0xf0]
    %vm121 = vcmask 1047556
    %v122 = vsel %vm121, %v120, %v118
    %123 = vrot.lane.b32.xlu0 %v122, 32
    %v124 = vpop.permute.xlu0 %123
    %vm125 = vcmask 392448
    %126 = vst.msk [vmem:[%s1] sm:$0xff] %vm125, %v124
    %s127 = scalar_lea.vmem [#allocation0], 66
    %v128 = vld [vmem:[%s127] ss:$8 sm:$0xf]
    %s129 = scalar_lea.vmem [#allocation0], 66
    %v130 = vld [vmem:[%s129] ss:$8 sm:$0xf0]
    %vm131 = vcmask 1047556
    %v132 = vsel %vm131, %v130, %v128
    %133 = vrot.lane.b32.xlu0 %v132, 32
    %v134 = vpop.permute.xlu0 %133
    %vm135 = vcmask 392448
    %s136 = scalar_lea.vmem %s1, 8
    %137 = vst.msk [vmem:[%s136] sm:$0xff] %vm135, %v134
    %s138 = scalar_lea.vmem [#allocation0], 1
    %v139 = vld [vmem:[%s138] ss:$8 sm:$0xf]
    %s140 = scalar_lea.vmem [#allocation0], 1
    %v141 = vld [vmem:[%s140] ss:$8 sm:$0xf0]
    %vm142 = vcmask 1047556
    %v143 = vsel %vm142, %v141, %v139
    %144 = vrot.lane.b32.xlu0 %v143, 16
    %v145 = vpop.permute.xlu0 %144
    %vm146 = vcmask 261248
    %147 = vst.msk [vmem:[%s1] sm:$0xff] %vm146, %v145
    %s148 = scalar_lea.vmem [#allocation0], 65
    %v149 = vld [vmem:[%s148] ss:$8 sm:$0xf]
    %s150 = scalar_lea.vmem [#allocation0], 65
    %v151 = vld [vmem:[%s150] ss:$8 sm:$0xf0]
    %vm152 = vcmask 1047556
    %v153 = vsel %vm152, %v151, %v149
    %154 = vrot.lane.b32.xlu0 %v153, 16
    %v155 = vpop.permute.xlu0 %154
    %vm156 = vcmask 261248
    %s157 = scalar_lea.vmem %s1, 8
    %158 = vst.msk [vmem:[%s157] sm:$0xff] %vm156, %v155

// kernel: tracking_model_forward.1
$region0: #{tracking_model_forward.1}
  #allocation0 [shape = 'u32[]', space=smem, size = 0x4, offset = 0x4, fixed_abs, tag = 'smem constant byte address 0x4 - core index']
  #allocation1 [shape = 'u32[144,128]{1,0:T(1,128)}', space=vmem, size = 0x12000, scoped, tag = 'internal scratch']
  %s0 = inlined_call_operand.vmem [shape: f32[16,32], index: 0, kind: input, shape index: {}]
  %s1 = inlined_call_operand.vmem [shape: f32[16,32], index: 1, kind: input, shape index: {}]
  %s2 = inlined_call_operand.vmem [shape: f32[16,32], index: 2, kind: input, shape index: {}]
  %s3 = inlined_call_operand.vmem [shape: f32[16,32], index: 3, kind: input, shape index: {}]
  %s4 = inlined_call_operand.vmem [shape: f32[16,64], index: 4, kind: input, shape index: {}, may-alias: {4,6}]
  %s5 = inlined_call_operand.vmem [shape: f32[16,64], index: 5, kind: input, shape index: {}]
  %s6 = inlined_call_operand.vmem [shape: f32[16,64], index: 6, kind: input, shape index: {}, may-alias: {4,6}]
  %s7 = inlined_call_operand.vmem [shape: bf16[160,96], index: 7, kind: input, shape index: {}]
  %s8 = inlined_call_operand.vmem [shape: bf16[160,32], index: 8, kind: input, shape index: {}]
  %s9 = inlined_call_operand.vmem [shape: bf16[96,64], index: 9, kind: input, shape index: {}]
  %s10 = inlined_call_operand.vmem [shape: bf16[192,32], index: 10, kind: input, shape index: {}]
  %s11 = inlined_call_operand.vmem [shape: bf16[32,128], index: 11, kind: input, shape index: {}]
  %s12 = inlined_call_operand.vmem [shape: f32[33,128], index: 12, kind: input, shape index: {}]
  %s13 = inlined_call_operand.vmem [shape: f32[16,128], index: 13, kind: output, shape index: {}]
  %s14 = sld [smem:[#allocation0]]
  $region62: #{tracking_model_forward.1} parent=0
    _
  %s16 = ssub.s32 1, %s14
  %s17 = scalar_select 0, %s16, %s14
  // Predicated region
  $region2: #{tracking_model_forward.1} parent=0 // pred_check
    _
  $region3: #{tracking_model_forward.1} parent=0 // pred_check_branch
    %19 = sbr.rel (0) target = $region5
  $region4: #{tracking_model_forward.1} parent=0 // pred_region
    _
  $region5: #{tracking_model_forward.1} parent=0 // pred_fallthru
    _
  // Predicated region
  $region6: #{tracking_model_forward.1} parent=0 // pred_check
    _
  $region7: #{tracking_model_forward.1} parent=0 // pred_check_branch
    %21 = sbr.rel (0) target = $region9
  $region8: #{tracking_model_forward.1} parent=0 // pred_region
    _
  $region9: #{tracking_model_forward.1} parent=0 // pred_fallthru
    _
  // Predicated region
  $region10: #{tracking_model_forward.1} parent=0 // pred_check
    _
  $region11: #{tracking_model_forward.1} parent=0 // pred_check_branch
    %23 = sbr.rel (0) target = $region13
  $region12: #{tracking_model_forward.1} parent=0 // pred_region
    _
  $region13: #{tracking_model_forward.1} parent=0 // pred_fallthru
    _
  // Predicated region
  $region14: #{tracking_model_forward.1} parent=0 // pred_check
    _
  $region15: #{tracking_model_forward.1} parent=0 // pred_check_branch
    %25 = sbr.rel (0) target = $region17
  $region16: #{tracking_model_forward.1} parent=0 // pred_region
    _
  $region17: #{tracking_model_forward.1} parent=0 // pred_fallthru
    _
  // Predicated region
  $region18: #{tracking_model_forward.1} parent=0 // pred_check
    _
  $region19: #{tracking_model_forward.1} parent=0 // pred_check_branch
    %27 = sbr.rel (0) target = $region21
  $region20: #{tracking_model_forward.1} parent=0 // pred_region
    _
  $region21: #{tracking_model_forward.1} parent=0 // pred_fallthru
    _
  // Predicated region
  $region22: #{tracking_model_forward.1} parent=0 // pred_check
    _
  $region23: #{tracking_model_forward.1} parent=0 // pred_check_branch
    %29 = sbr.rel (0) target = $region25
  $region24: #{tracking_model_forward.1} parent=0 // pred_region
    _
  $region25: #{tracking_model_forward.1} parent=0 // pred_fallthru
    _
  // Predicated region
  $region26: #{tracking_model_forward.1} parent=0 // pred_check
    _
  $region27: #{tracking_model_forward.1} parent=0 // pred_check_branch
    %31 = sbr.rel (0) target = $region29
  $region28: #{tracking_model_forward.1} parent=0 // pred_region
    _
  $region29: #{tracking_model_forward.1} parent=0 // pred_fallthru
    _
  // Predicated region
  $region30: #{tracking_model_forward.1} parent=0 // pred_check
    _
  $region31: #{tracking_model_forward.1} parent=0 // pred_check_branch
    %33 = sbr.rel (0) target = $region33
  $region32: #{tracking_model_forward.1} parent=0 // pred_region
    _
  $region33: #{tracking_model_forward.1} parent=0 // pred_fallthru
    _
  // Predicated region
  $region34: #{tracking_model_forward.1} parent=0 // pred_check
    _
  $region35: #{tracking_model_forward.1} parent=0 // pred_check_branch
    %35 = sbr.rel (0) target = $region37
  $region36: #{tracking_model_forward.1} parent=0 // pred_region
    _
  $region37: #{tracking_model_forward.1} parent=0 // pred_fallthru
    _
  // Predicated region
  $region38: #{tracking_model_forward.1} parent=0 // pred_check
    _
  $region39: #{tracking_model_forward.1} parent=0 // pred_check_branch
    %37 = sbr.rel (0) target = $region41
  $region40: #{tracking_model_forward.1} parent=0 // pred_region
    _
  $region41: #{tracking_model_forward.1} parent=0 // pred_fallthru
    _
  // Predicated region
  $region42: #{tracking_model_forward.1} parent=0 // pred_check
    _
  $region43: #{tracking_model_forward.1} parent=0 // pred_check_branch
    %39 = sbr.rel (0) target = $region45
  $region44: #{tracking_model_forward.1} parent=0 // pred_region
    _
  $region45: #{tracking_model_forward.1} parent=0 // pred_fallthru
    _
  // Predicated region
  $region46: #{tracking_model_forward.1} parent=0 // pred_check
    _
  $region47: #{tracking_model_forward.1} parent=0 // pred_check_branch
    %41 = sbr.rel (0) target = $region49
  $region48: #{tracking_model_forward.1} parent=0 // pred_region
    _
  $region49: #{tracking_model_forward.1} parent=0 // pred_fallthru
    _
  // Predicated region
  $region50: #{tracking_model_forward.1} parent=0 // pred_check
    _
  $region51: #{tracking_model_forward.1} parent=0 // pred_check_branch
    %43 = sbr.rel (0) target = $region53
  $region52: #{tracking_model_forward.1} parent=0 // pred_region
    _
  $region53: #{tracking_model_forward.1} parent=0 // pred_fallthru
    _
  %v45 = vld [vmem:[%s0] sm:$0xff]
  %v46 = vld [vmem:[%s0 + $0x8] sm:$0xff]
  %v47 = vld [vmem:[%s1] sm:$0xff]
  %v48 = vld [vmem:[%s1 + $0x8] sm:$0xff]
  %v49 = vld [vmem:[%s2] sm:$0xff]
  %v50 = vld [vmem:[%s2 + $0x8] sm:$0xff]
  %v51 = vld [vmem:[%s3] sm:$0xff]
  %v52 = vld [vmem:[%s3 + $0x8] sm:$0xff]
  %v53 = vld [vmem:[%s4] sm:$0xff]
  %v54 = vld [vmem:[%s4 + $0x8] sm:$0xff]
  %v55 = vld [vmem:[%s5] sm:$0xff]
  %v56 = vld [vmem:[%s5 + $0x8] sm:$0xff]
  %v57 = vld [vmem:[%s6] sm:$0xff]
  %v58 = vld [vmem:[%s6 + $0x8] sm:$0xff]
  %v59 = vld [vmem:[%s7] sm:$0xf]
  %v60 = vld [vmem:[%s7 + $0x4] sm:$0xf]
  %v61 = vld [vmem:[%s7 + $0x8] sm:$0xf]
  %v62 = vld [vmem:[%s7 + $0xc] sm:$0xf]
  %v63 = vld [vmem:[%s7 + $0x10] sm:$0xf]
  %v64 = vld [vmem:[%s7 + $0x14] sm:$0xf]
  %v65 = vld [vmem:[%s7 + $0x18] sm:$0xf]
  %v66 = vld [vmem:[%s7 + $0x1c] sm:$0xf]
  %v67 = vld [vmem:[%s7 + $0x20] sm:$0xf]
  %v68 = vld [vmem:[%s7 + $0x24] sm:$0xf]
  %v69 = vld [vmem:[%s7 + $0x28] sm:$0xf]
  %v70 = vld [vmem:[%s7 + $0x2c] sm:$0xf]
  %v71 = vld [vmem:[%s7 + $0x30] sm:$0xf]
  %v72 = vld [vmem:[%s7 + $0x34] sm:$0xf]
  %v73 = vld [vmem:[%s7 + $0x38] sm:$0xf]
  %v74 = vld [vmem:[%s7 + $0x3c] sm:$0xf]
  %v75 = vld [vmem:[%s7 + $0x40] sm:$0xf]
  %v76 = vld [vmem:[%s7 + $0x44] sm:$0xf]
  %v77 = vld [vmem:[%s7 + $0x48] sm:$0xf]
  %v78 = vld [vmem:[%s7 + $0x4c] sm:$0xf]
  %v79 = vld [vmem:[%s8] sm:$0xf]
  %v80 = vld [vmem:[%s8 + $0x4] sm:$0xf]
  %v81 = vld [vmem:[%s8 + $0x8] sm:$0xf]
  %v82 = vld [vmem:[%s8 + $0xc] sm:$0xf]
  %v83 = vld [vmem:[%s8 + $0x10] sm:$0xf]
  %v84 = vld [vmem:[%s8 + $0x14] sm:$0xf]
  %v85 = vld [vmem:[%s8 + $0x18] sm:$0xf]
  %v86 = vld [vmem:[%s8 + $0x1c] sm:$0xf]
  %v87 = vld [vmem:[%s8 + $0x20] sm:$0xf]
  %v88 = vld [vmem:[%s8 + $0x24] sm:$0xf]
  %v89 = vld [vmem:[%s8 + $0x28] sm:$0xf]
  %v90 = vld [vmem:[%s8 + $0x2c] sm:$0xf]
  %v91 = vld [vmem:[%s8 + $0x30] sm:$0xf]
  %v92 = vld [vmem:[%s8 + $0x34] sm:$0xf]
  %v93 = vld [vmem:[%s8 + $0x38] sm:$0xf]
  %v94 = vld [vmem:[%s8 + $0x3c] sm:$0xf]
  %v95 = vld [vmem:[%s8 + $0x40] sm:$0xf]
  %v96 = vld [vmem:[%s8 + $0x44] sm:$0xf]
  %v97 = vld [vmem:[%s8 + $0x48] sm:$0xf]
  %v98 = vld [vmem:[%s8 + $0x4c] sm:$0xf]
  %v99 = vld [vmem:[%s9] sm:$0xf]
  %v100 = vld [vmem:[%s9 + $0x4] sm:$0xf]
  %v101 = vld [vmem:[%s9 + $0x8] sm:$0xf]
  %v102 = vld [vmem:[%s9 + $0xc] sm:$0xf]
  %v103 = vld [vmem:[%s9 + $0x10] sm:$0xf]
  %v104 = vld [vmem:[%s9 + $0x14] sm:$0xf]
  %v105 = vld [vmem:[%s9 + $0x18] sm:$0xf]
  %v106 = vld [vmem:[%s9 + $0x1c] sm:$0xf]
  %v107 = vld [vmem:[%s9 + $0x20] sm:$0xf]
  %v108 = vld [vmem:[%s9 + $0x24] sm:$0xf]
  %v109 = vld [vmem:[%s9 + $0x28] sm:$0xf]
  %v110 = vld [vmem:[%s9 + $0x2c] sm:$0xf]
  %v111 = vld [vmem:[%s10] sm:$0xf]
  %v112 = vld [vmem:[%s10 + $0x4] sm:$0xf]
  %v113 = vld [vmem:[%s10 + $0x8] sm:$0xf]
  %v114 = vld [vmem:[%s10 + $0xc] sm:$0xf]
  %v115 = vld [vmem:[%s10 + $0x10] sm:$0xf]
  %v116 = vld [vmem:[%s10 + $0x14] sm:$0xf]
  %v117 = vld [vmem:[%s10 + $0x18] sm:$0xf]
  %v118 = vld [vmem:[%s10 + $0x1c] sm:$0xf]
  %v119 = vld [vmem:[%s10 + $0x20] sm:$0xf]
  %v120 = vld [vmem:[%s10 + $0x24] sm:$0xf]
  %v121 = vld [vmem:[%s10 + $0x28] sm:$0xf]
  %v122 = vld [vmem:[%s10 + $0x2c] sm:$0xf]
  %v123 = vld [vmem:[%s10 + $0x30] sm:$0xf]
  %v124 = vld [vmem:[%s10 + $0x34] sm:$0xf]
  %v125 = vld [vmem:[%s10 + $0x38] sm:$0xf]
  %v126 = vld [vmem:[%s10 + $0x3c] sm:$0xf]
  %v127 = vld [vmem:[%s10 + $0x40] sm:$0xf]
  %v128 = vld [vmem:[%s10 + $0x44] sm:$0xf]
  %v129 = vld [vmem:[%s10 + $0x48] sm:$0xf]
  %v130 = vld [vmem:[%s10 + $0x4c] sm:$0xf]
  %v131 = vld [vmem:[%s10 + $0x50] sm:$0xf]
  %v132 = vld [vmem:[%s10 + $0x54] sm:$0xf]
  %v133 = vld [vmem:[%s10 + $0x58] sm:$0xf]
  %v134 = vld [vmem:[%s10 + $0x5c] sm:$0xf]
  %v135 = vld [vmem:[%s11] sm:$0xf]
  %v136 = vld [vmem:[%s11 + $0x4] sm:$0xf]
  %v137 = vld [vmem:[%s11 + $0x8] sm:$0xf]
  %v138 = vld [vmem:[%s11 + $0xc] sm:$0xf]
  %v139 = vld [vmem:[%s12] sm:$0xff]
  %v140 = vld [vmem:[%s12 + $0x8] sm:$0xff]
  %v141 = vld [vmem:[%s12 + $0x10] sm:$0xff]
  %v142 = vld [vmem:[%s12 + $0x18] sm:$0xff]
  %v143 = vld [vmem:[%s12 + $0x20] sm:$0x1]
  %v144 = vadd.f32 %v45, %v49
  %v145 = vadd.f32 %v46, %v50
  %v146 = vlaneseq
  %v147 = vshrl.u32 %v146, 7
  %v148 = vadd.s32 %v147, 8
  %v149 = vadd.s32 %v147, 16
  %v150 = vadd.s32 %v147, 24
  %v151 = vlaneseq
  %v152 = vand.u32 %v151, 127
  %vm153 = vcmp.ge.s32.totalorder %v147, 0
  %vm154 = vcmp.ge.s32.totalorder %v148, 0
  %vm155 = vcmp.ge.s32.totalorder %v149, 0
  %vm156 = vcmp.ge.s32.totalorder %v150, 0
  %vm157 = vcmp.lt.s32.totalorder %v147, 8
  %vm158 = vcmp.lt.s32.totalorder %v148, 8
  %vm159 = vcmp.lt.s32.totalorder %v149, 8
  %vm160 = vcmp.lt.s32.totalorder %v150, 8
  %vm161 = vmand %vm153, %vm157
  %vm162 = vmand %vm154, %vm158
  %vm163 = vmand %vm155, %vm159
  %vm164 = vmand %vm156, %vm160
  %vm165 = vcmp.ge.s32.totalorder %v152, 0
  %vm166 = vmand %vm161, %vm165
  %vm167 = vmand %vm162, %vm165
  %vm168 = vmand %vm163, %vm165
  %vm169 = vmand %vm164, %vm165
  %vm170 = vcmp.lt.s32.totalorder %v152, 16
  %vm171 = vmand %vm166, %vm170
  %vm172 = vmand %vm167, %vm170
  %vm173 = vmand %vm168, %vm170
  %vm174 = vmand %vm169, %vm170
  %vm175 = vcmp.ge.s32.totalorder %v147, 8
  %vm176 = vcmp.ge.s32.totalorder %v148, 8
  %vm177 = vcmp.ge.s32.totalorder %v149, 8
  %vm178 = vcmp.ge.s32.totalorder %v150, 8
  %vm179 = vcmp.lt.s32.totalorder %v147, 16
  %vm180 = vcmp.lt.s32.totalorder %v148, 16
  %vm181 = vcmp.lt.s32.totalorder %v149, 16
  %vm182 = vcmp.lt.s32.totalorder %v150, 16
  %vm183 = vmand %vm175, %vm179
  %vm184 = vmand %vm176, %vm180
  %vm185 = vmand %vm177, %vm181
  %vm186 = vmand %vm178, %vm182
  %vm187 = vcmp.ge.s32.totalorder %v152, 16
  %vm188 = vmand %vm183, %vm187
  %vm189 = vmand %vm184, %vm187
  %vm190 = vmand %vm185, %vm187
  %vm191 = vmand %vm186, %vm187
  %vm192 = vcmp.lt.s32.totalorder %v152, 32
  %vm193 = vmand %vm188, %vm192
  %vm194 = vmand %vm189, %vm192
  %vm195 = vmand %vm190, %vm192
  %vm196 = vmand %vm191, %vm192
  %vm197 = vmor %vm171, %vm193
  %vm198 = vmor %vm172, %vm194
  %vm199 = vmor %vm173, %vm195
  %vm200 = vmor %vm174, %vm196
  %vm201 = vcmp.ge.s32.totalorder %v147, 16
  %vm202 = vcmp.ge.s32.totalorder %v148, 16
  %vm203 = vcmp.ge.s32.totalorder %v149, 16
  %vm204 = vcmp.ge.s32.totalorder %v150, 16
  %vm205 = vcmp.lt.s32.totalorder %v147, 24
  %vm206 = vcmp.lt.s32.totalorder %v148, 24
  %vm207 = vcmp.lt.s32.totalorder %v149, 24
  %vm208 = vcmp.lt.s32.totalorder %v150, 24
  %vm209 = vmand %vm201, %vm205
  %vm210 = vmand %vm202, %vm206
  %vm211 = vmand %vm203, %vm207
  %vm212 = vmand %vm204, %vm208
  %vm213 = vcmp.ge.s32.totalorder %v152, 32
  %vm214 = vmand %vm209, %vm213
  %vm215 = vmand %vm210, %vm213
  %vm216 = vmand %vm211, %vm213
  %vm217 = vmand %vm212, %vm213
  %vm218 = vcmp.lt.s32.totalorder %v152, 48
  %vm219 = vmand %vm214, %vm218
  %vm220 = vmand %vm215, %vm218
  %vm221 = vmand %vm216, %vm218
  %vm222 = vmand %vm217, %vm218
  %vm223 = vmor %vm197, %vm219
  %vm224 = vmor %vm198, %vm220
  %vm225 = vmor %vm199, %vm221
  %vm226 = vmor %vm200, %vm222
  %vm227 = vcmp.ge.s32.totalorder %v147, 24
  %vm228 = vcmp.ge.s32.totalorder %v148, 24
  %vm229 = vcmp.ge.s32.totalorder %v149, 24
  %vm230 = vcmp.ge.s32.totalorder %v150, 24
  %vm231 = vcmp.lt.s32.totalorder %v147, 32
  %vm232 = vcmp.lt.s32.totalorder %v148, 32
  %vm233 = vcmp.lt.s32.totalorder %v149, 32
  %vm234 = vcmp.lt.s32.totalorder %v150, 32
  %vm235 = vmand %vm227, %vm231
  %vm236 = vmand %vm228, %vm232
  %vm237 = vmand %vm229, %vm233
  %vm238 = vmand %vm230, %vm234
  %vm239 = vcmp.ge.s32.totalorder %v152, 48
  %vm240 = vmand %vm235, %vm239
  %vm241 = vmand %vm236, %vm239
  %vm242 = vmand %vm237, %vm239
  %vm243 = vmand %vm238, %vm239
  %vm244 = vcmp.lt.s32.totalorder %v152, 64
  %vm245 = vmand %vm240, %vm244
  %vm246 = vmand %vm241, %vm244
  %vm247 = vmand %vm242, %vm244
  %vm248 = vmand %vm243, %vm244
  %vm249 = vmor %vm223, %vm245
  %vm250 = vmor %vm224, %vm246
  %vm251 = vmor %vm225, %vm247
  %vm252 = vmor %vm226, %vm248
  %v253 = vsel %vm249, 1, 0
  %v254 = vsel %vm250, 1, 0
  %v255 = vsel %vm251, 1, 0
  %v256 = vsel %vm252, 1, 0
  %v257 = vcvt.s32.f32 %v253
  %v258 = vcvt.s32.f32 %v254
  %v259 = vcvt.s32.f32 %v255
  %v260 = vcvt.s32.f32 %v256
  %v261 = vadd.s32 %v147, 32
  %v262 = vadd.s32 %v147, 40
  %v263 = vadd.s32 %v147, 48
  %v264 = vadd.s32 %v147, 56
  %vm265 = vcmp.ge.s32.totalorder %v261, 0
  %vm266 = vcmp.ge.s32.totalorder %v262, 0
  %vm267 = vcmp.ge.s32.totalorder %v263, 0
  %vm268 = vcmp.ge.s32.totalorder %v264, 0
  %vm269 = vcmp.lt.s32.totalorder %v261, 16
  %vm270 = vcmp.lt.s32.totalorder %v262, 16
  %vm271 = vcmp.lt.s32.totalorder %v263, 16
  %vm272 = vcmp.lt.s32.totalorder %v264, 16
  %vm273 = vmand %vm153, %vm179
  %vm274 = vmand %vm154, %vm180
  %vm275 = vmand %vm155, %vm181
  %vm276 = vmand %vm156, %vm182
  %vm277 = vmand %vm265, %vm269
  %vm278 = vmand %vm266, %vm270
  %vm279 = vmand %vm267, %vm271
  %vm280 = vmand %vm268, %vm272
  %vm281 = vmand %vm273, %vm165
  %vm282 = vmand %vm274, %vm165
  %vm283 = vmand %vm275, %vm165
  %vm284 = vmand %vm276, %vm165
  %vm285 = vmand %vm277, %vm165
  %vm286 = vmand %vm278, %vm165
  %vm287 = vmand %vm279, %vm165
  %vm288 = vmand %vm280, %vm165
  %vm289 = vcmp.lt.s32.totalorder %v152, 8
  %vm290 = vmand %vm281, %vm289
  %vm291 = vmand %vm282, %vm289
  %vm292 = vmand %vm283, %vm289
  %vm293 = vmand %vm284, %vm289
  %vm294 = vmand %vm285, %vm289
  %vm295 = vmand %vm286, %vm289
  %vm296 = vmand %vm287, %vm289
  %vm297 = vmand %vm288, %vm289
  %vm298 = vcmp.ge.s32.totalorder %v261, 16
  %vm299 = vcmp.ge.s32.totalorder %v262, 16
  %vm300 = vcmp.ge.s32.totalorder %v263, 16
  %vm301 = vcmp.ge.s32.totalorder %v264, 16
  %vm302 = vcmp.lt.s32.totalorder %v261, 32
  %vm303 = vcmp.lt.s32.totalorder %v262, 32
  %vm304 = vcmp.lt.s32.totalorder %v263, 32
  %vm305 = vcmp.lt.s32.totalorder %v264, 32
  %vm306 = vmand %vm201, %vm231
  %vm307 = vmand %vm202, %vm232
  %vm308 = vmand %vm203, %vm233
  %vm309 = vmand %vm204, %vm234
  %vm310 = vmand %vm298, %vm302
  %vm311 = vmand %vm299, %vm303
  %vm312 = vmand %vm300, %vm304
  %vm313 = vmand %vm301, %vm305
  %vm314 = vcmp.ge.s32.totalorder %v152, 8
  %vm315 = vmand %vm306, %vm314
  %vm316 = vmand %vm307, %vm314
  %vm317 = vmand %vm308, %vm314
  %vm318 = vmand %vm309, %vm314
  %vm319 = vmand %vm310, %vm314
  %vm320 = vmand %vm311, %vm314
  %vm321 = vmand %vm312, %vm314
  %vm322 = vmand %vm313, %vm314
  %vm323 = vmand %vm315, %vm170
  %vm324 = vmand %vm316, %vm170
  %vm325 = vmand %vm317, %vm170
  %vm326 = vmand %vm318, %vm170
  %vm327 = vmand %vm319, %vm170
  %vm328 = vmand %vm320, %vm170
  %vm329 = vmand %vm321, %vm170
  %vm330 = vmand %vm322, %vm170
  %vm331 = vmor %vm290, %vm323
  %vm332 = vmor %vm291, %vm324
  %vm333 = vmor %vm292, %vm325
  %vm334 = vmor %vm293, %vm326
  %vm335 = vmor %vm294, %vm327
  %vm336 = vmor %vm295, %vm328
  %vm337 = vmor %vm296, %vm329
  %vm338 = vmor %vm297, %vm330
  %vm339 = vcmp.ge.s32.totalorder %v147, 32
  %vm340 = vcmp.ge.s32.totalorder %v148, 32
  %vm341 = vcmp.ge.s32.totalorder %v149, 32
  %vm342 = vcmp.ge.s32.totalorder %v150, 32
  %vm343 = vcmp.ge.s32.totalorder %v261, 32
  %vm344 = vcmp.ge.s32.totalorder %v262, 32
  %vm345 = vcmp.ge.s32.totalorder %v263, 32
  %vm346 = vcmp.ge.s32.totalorder %v264, 32
  %vm347 = vcmp.lt.s32.totalorder %v147, 48
  %vm348 = vcmp.lt.s32.totalorder %v148, 48
  %vm349 = vcmp.lt.s32.totalorder %v149, 48
  %vm350 = vcmp.lt.s32.totalorder %v150, 48
  %vm351 = vcmp.lt.s32.totalorder %v261, 48
  %vm352 = vcmp.lt.s32.totalorder %v262, 48
  %vm353 = vcmp.lt.s32.totalorder %v263, 48
  %vm354 = vcmp.lt.s32.totalorder %v264, 48
  %vm355 = vmand %vm339, %vm347
  %vm356 = vmand %vm340, %vm348
  %vm357 = vmand %vm341, %vm349
  %vm358 = vmand %vm342, %vm350
  %vm359 = vmand %vm343, %vm351
  %vm360 = vmand %vm344, %vm352
  %vm361 = vmand %vm345, %vm353
  %vm362 = vmand %vm346, %vm354
  %vm363 = vmand %vm355, %vm187
  %vm364 = vmand %vm356, %vm187
  %vm365 = vmand %vm357, %vm187
  %vm366 = vmand %vm358, %vm187
  %vm367 = vmand %vm359, %vm187
  %vm368 = vmand %vm360, %vm187
  %vm369 = vmand %vm361, %vm187
  %vm370 = vmand %vm362, %vm187
  %vm371 = vcmp.lt.s32.totalorder %v152, 24
  %vm372 = vmand %vm363, %vm371
  %vm373 = vmand %vm364, %vm371
  %vm374 = vmand %vm365, %vm371
  %vm375 = vmand %vm366, %vm371
  %vm376 = vmand %vm367, %vm371
  %vm377 = vmand %vm368, %vm371
  %vm378 = vmand %vm369, %vm371
  %vm379 = vmand %vm370, %vm371
  %vm380 = vmor %vm331, %vm372
  %vm381 = vmor %vm332, %vm373
  %vm382 = vmor %vm333, %vm374
  %vm383 = vmor %vm334, %vm375
  %vm384 = vmor %vm335, %vm376
  %vm385 = vmor %vm336, %vm377
  %vm386 = vmor %vm337, %vm378
  %vm387 = vmor %vm338, %vm379
  %vm388 = vcmp.ge.s32.totalorder %v147, 48
  %vm389 = vcmp.ge.s32.totalorder %v148, 48
  %vm390 = vcmp.ge.s32.totalorder %v149, 48
  %vm391 = vcmp.ge.s32.totalorder %v150, 48
  %vm392 = vcmp.ge.s32.totalorder %v261, 48
  %vm393 = vcmp.ge.s32.totalorder %v262, 48
  %vm394 = vcmp.ge.s32.totalorder %v263, 48
  %vm395 = vcmp.ge.s32.totalorder %v264, 48
  %vm396 = vcmp.lt.s32.totalorder %v147, 64
  %vm397 = vcmp.lt.s32.totalorder %v148, 64
  %vm398 = vcmp.lt.s32.totalorder %v149, 64
  %vm399 = vcmp.lt.s32.totalorder %v150, 64
  %vm400 = vcmp.lt.s32.totalorder %v261, 64
  %vm401 = vcmp.lt.s32.totalorder %v262, 64
  %vm402 = vcmp.lt.s32.totalorder %v263, 64
  %vm403 = vcmp.lt.s32.totalorder %v264, 64
  %vm404 = vmand %vm388, %vm396
  %vm405 = vmand %vm389, %vm397
  %vm406 = vmand %vm390, %vm398
  %vm407 = vmand %vm391, %vm399
  %vm408 = vmand %vm392, %vm400
  %vm409 = vmand %vm393, %vm401
  %vm410 = vmand %vm394, %vm402
  %vm411 = vmand %vm395, %vm403
  %vm412 = vcmp.ge.s32.totalorder %v152, 24
  %vm413 = vmand %vm404, %vm412
  %vm414 = vmand %vm405, %vm412
  %vm415 = vmand %vm406, %vm412
  %vm416 = vmand %vm407, %vm412
  %vm417 = vmand %vm408, %vm412
  %vm418 = vmand %vm409, %vm412
  %vm419 = vmand %vm410, %vm412
  %vm420 = vmand %vm411, %vm412
  %vm421 = vmand %vm413, %vm192
  %vm422 = vmand %vm414, %vm192
  %vm423 = vmand %vm415, %vm192
  %vm424 = vmand %vm416, %vm192
  %vm425 = vmand %vm417, %vm192
  %vm426 = vmand %vm418, %vm192
  %vm427 = vmand %vm419, %vm192
  %vm428 = vmand %vm420, %vm192
  %vm429 = vmor %vm380, %vm421
  %vm430 = vmor %vm381, %vm422
  %vm431 = vmor %vm382, %vm423
  %vm432 = vmor %vm383, %vm424
  %vm433 = vmor %vm384, %vm425
  %vm434 = vmor %vm385, %vm426
  %vm435 = vmor %vm386, %vm427
  %vm436 = vmor %vm387, %vm428
  %v437 = vsel %vm429, 1, 0
  %v438 = vsel %vm430, 1, 0
  %v439 = vsel %vm431, 1, 0
  %v440 = vsel %vm432, 1, 0
  %v441 = vsel %vm433, 1, 0
  %v442 = vsel %vm434, 1, 0
  %v443 = vsel %vm435, 1, 0
  %v444 = vsel %vm436, 1, 0
  %v445 = vcvt.s32.f32 %v437
  %v446 = vcvt.s32.f32 %v438
  %v447 = vcvt.s32.f32 %v439
  %v448 = vcvt.s32.f32 %v440
  %v449 = vcvt.s32.f32 %v441
  %v450 = vcvt.s32.f32 %v442
  %v451 = vcvt.s32.f32 %v443
  %v452 = vcvt.s32.f32 %v444
  %v453 = vpack.c.bf16 %v145, %v144
  %v454 = vlaneseq
  %v455 = vshrl.u32 %v454, 7
  %v456 = vsub.s32 0, %v455
  %v457 = vrot.slane %v139, %v456
  %v462 = vunpack.c.l.b16 %v59
  %v463 = vunpack.c.l.b16 %v60
  %v464 = vunpack.c.l.b16 %v61
  %v465 = vunpack.c.l.b16 %v62
  %v466 = vpack.c.b16 %v463, %v462
  %v467 = vpack.c.b16 %v465, %v464
  %vm470 = vcmask 261120
  %v472 = vsel %vm470, %v453, 0
  %474 = vmatprep.subr.bf16.mxu0 0
  %475 = vmatpush1.bf16.msra.mxu0 0
  %476 = vmatprep.subr.bf16.mxu0 0
  %477 = vmatpush1.bf16.msra.mxu0 0
  %478 = vmatprep.subr.bf16.mxu0 0
  %479 = vmatpush1.bf16.msra.mxu0 0
  %480 = vmatprep.subr.bf16.mxu0 0
  %481 = vmatpush1.bf16.msra.mxu0 0
  %482 = vmatprep.subr.bf16.mxu0 0
  %483 = vmatpush1.bf16.msra.mxu0 0
  %484 = vmatprep.subr.bf16.mxu0 0
  %485 = vmatpush1.bf16.msra.mxu0 0
  %486 = vmatprep.subr.bf16.mxu0 0
  %487 = vmatpush1.bf16.msra.mxu0 %v467
  %488 = vmatprep.subr.bf16.mxu0 0
  %489 = vmatpush1.bf16.msra.mxu0 %v466
  %490 = vmatprep.subr.bf16.mxu0 0
  %491 = vmatpush2.bf16.msra.mxu0 0
  %492 = vmatprep.subr.bf16.mxu0 0
  %493 = vmatpush2.bf16.msra.mxu0 0
  %494 = vmatprep.subr.bf16.mxu0 0
  %495 = vmatpush2.bf16.msra.mxu0 0
  %496 = vmatprep.subr.bf16.mxu0 0
  %497 = vmatpush2.bf16.msra.mxu0 0
  %498 = vmatprep.subr.bf16.mxu0 0
  %499 = vmatpush2.bf16.msra.mxu0 0
  %500 = vmatprep.subr.bf16.mxu0 0
  %501 = vmatpush2.bf16.msra.mxu0 0
  %502 = vmatprep.subr.bf16.mxu0 0
  %503 = vmatpush2.bf16.msra.mxu0 0
  %504 = vmatprep.subr.bf16.mxu0 0
  %505 = vmatpush2.bf16.msra.mxu0 0
  %506 = vmatprep.mubr.bf16.mxu0 0
  %507 = vmatmul.mubr.bf16.gmra.mxu0 %v472
  %v508 = vpop.f32.mrf.mxu0
  %v509 = vadd.f32 %v457, %v508
  %v510 = vpop.f32.mrf.mxu0
  %v511 = vpop.f32.mrf.mxu0
  %v512 = vadd.f32 %v457, %v511
  %v513 = vpop.f32.mrf.mxu0
  %514 = vdwg.mxu0
  %v515 = vmul.f32 %v509, 0.35355338
  %v516 = vmul.f32 %v512, 0.35355338
  %v517 = vpack.c.bf16 %v46, %v45
  %518 = vrot.lane.b32.xlu0 %v466, 64
  %v519 = vpop.permute.xlu0 %518
  %520 = vrot.lane.b32.xlu0 %v467, 64
  %v521 = vpop.permute.xlu0 %520
  %525 = vrot.lane.b32.xlu0 %v457, 64
  %v526 = vpop.permute.xlu0 %525
  %v529 = vsel %vm470, %v517, 0
  %531 = vmatprep.subr.bf16.mxu0 0
  %532 = vmatpush1.bf16.msra.mxu0 0
  %533 = vmatprep.subr.bf16.mxu0 0
  %534 = vmatpush1.bf16.msra.mxu0 0
  %535 = vmatprep.subr.bf16.mxu0 0
  %536 = vmatpush1.bf16.msra.mxu0 0
  %537 = vmatprep.subr.bf16.mxu0 0
  %538 = vmatpush1.bf16.msra.mxu0 0
  %539 = vmatprep.subr.bf16.mxu0 0
  %540 = vmatpush1.bf16.msra.mxu0 0
  %541 = vmatprep.subr.bf16.mxu0 0
  %542 = vmatpush1.bf16.msra.mxu0 0
  %543 = vmatprep.subr.bf16.mxu0 0
  %544 = vmatpush1.bf16.msra.mxu0 %v521
  %545 = vmatprep.subr.bf16.mxu0 0
  %546 = vmatpush1.bf16.msra.mxu0 %v519
  %547 = vmatprep.subr.bf16.mxu0 0
  %548 = vmatpush2.bf16.msra.mxu0 0
  %549 = vmatprep.subr.bf16.mxu0 0
  %550 = vmatpush2.bf16.msra.mxu0 0
  %551 = vmatprep.subr.bf16.mxu0 0
  %552 = vmatpush2.bf16.msra.mxu0 0
  %553 = vmatprep.subr.bf16.mxu0 0
  %554 = vmatpush2.bf16.msra.mxu0 0
  %555 = vmatprep.subr.bf16.mxu0 0
  %556 = vmatpush2.bf16.msra.mxu0 0
  %557 = vmatprep.subr.bf16.mxu0 0
  %558 = vmatpush2.bf16.msra.mxu0 0
  %559 = vmatprep.subr.bf16.mxu0 0
  %560 = vmatpush2.bf16.msra.mxu0 0
  %561 = vmatprep.subr.bf16.mxu0 0
  %562 = vmatpush2.bf16.msra.mxu0 0
  %563 = vmatprep.mubr.bf16.mxu0 0
  %564 = vmatmul.mubr.bf16.gmra.mxu0 %v529
  %v565 = vpop.f32.mrf.mxu0
  %v566 = vadd.f32 %v526, %v565
  %v567 = vpop.f32.mrf.mxu0
  %v568 = vpop.f32.mrf.mxu0
  %v569 = vadd.f32 %v526, %v568
  %v570 = vpop.f32.mrf.mxu0
  %571 = vdwg.mxu0
  %574 = vrot.lane.b32.xlu0 %v509, 96
  %v575 = vpop.permute.xlu0 %574
  %576 = vrot.lane.b32.xlu0 %v512, 96
  %v577 = vpop.permute.xlu0 %576
  %580 = vxpose.xlu0.b32.start [1/16] %v575, 128
  %581 = vxpose.xlu0.b32.cont [2/16] %v577, 128
  %582 = vxpose.xlu0.b32.cont [3/16] 0.0, 128
  %583 = vxpose.xlu0.b32.cont [4/16] 0.0, 128
  %584 = vxpose.xlu0.b32.cont [5/16] 0.0, 128
  %585 = vxpose.xlu0.b32.cont [6/16] 0.0, 128
  %586 = vxpose.xlu0.b32.cont [7/16] 0.0, 128
  %587 = vxpose.xlu0.b32.cont [8/16] 0.0, 128
  %588 = vxpose.xlu0.b32.cont [9/16] 0.0, 128
  %589 = vxpose.xlu0.b32.cont [10/16] 0.0, 128
  %590 = vxpose.xlu0.b32.cont [11/16] 0.0, 128
  %591 = vxpose.xlu0.b32.cont [12/16] 0.0, 128
  %592 = vxpose.xlu0.b32.cont [13/16] 0.0, 128
  %593 = vxpose.xlu0.b32.cont [14/16] 0.0, 128
  %594 = vxpose.xlu0.b32.cont [15/16] 0.0, 128
  %595 = vxpose.xlu0.b32.end [16/16] 0.0, 128
  %v596 = vpop.trf.xlu0
  %v597 = vpop.trf.xlu0
  %v598 = vpop.trf.xlu0
  %v599 = vpop.trf.xlu0
  %v600 = vpop.trf.xlu0
  %v601 = vpop.trf.xlu0
  %v602 = vpop.trf.xlu0
  %v603 = vpop.trf.xlu0
  %v604 = vpop.trf.xlu0
  %v605 = vpop.trf.xlu0
  %v606 = vpop.trf.xlu0
  %v607 = vpop.trf.xlu0
  %v608 = vpop.trf.xlu0
  %v609 = vpop.trf.xlu0
  %v610 = vpop.trf.xlu0
  %v611 = vpop.trf.xlu0
  %616 = vrot.lane.b32.xlu0 %v596, 16
  %v617 = vpop.permute.xlu0 %616
  %618 = vrot.lane.b32.xlu0 %v597, 16
  %v619 = vpop.permute.xlu0 %618
  %620 = vrot.lane.b32.xlu0 %v598, 16
  %v621 = vpop.permute.xlu0 %620
  %622 = vrot.lane.b32.xlu0 %v599, 16
  %v623 = vpop.permute.xlu0 %622
  %628 = vrot.lane.b32.xlu0 %v596, 32
  %v629 = vpop.permute.xlu0 %628
  %630 = vrot.lane.b32.xlu0 %v597, 32
  %v631 = vpop.permute.xlu0 %630
  %632 = vrot.lane.b32.xlu0 %v598, 32
  %v633 = vpop.permute.xlu0 %632
  %634 = vrot.lane.b32.xlu0 %v599, 32
  %v635 = vpop.permute.xlu0 %634
  %640 = vrot.lane.b32.xlu0 %v596, 48
  %v641 = vpop.permute.xlu0 %640
  %642 = vrot.lane.b32.xlu0 %v597, 48
  %v643 = vpop.permute.xlu0 %642
  %644 = vrot.lane.b32.xlu0 %v598, 48
  %v645 = vpop.permute.xlu0 %644
  %646 = vrot.lane.b32.xlu0 %v599, 48
  %v647 = vpop.permute.xlu0 %646
  %vm652 = vcmask 130048
  %v653 = vsel %vm652, %v596, %v617
  %v654 = vsel %vm652, %v597, %v619
  %v655 = vsel %vm652, %v598, %v621
  %v656 = vsel %vm652, %v599, %v623
  %v657 = vsel %vm470, %v653, %v629
  %v658 = vsel %vm470, %v654, %v631
  %v659 = vsel %vm470, %v655, %v633
  %v660 = vsel %vm470, %v656, %v635
  %vm661 = vcmask 392192
  %v662 = vsel %vm661, %v657, %v641
  %v663 = vsel %vm661, %v658, %v643
  %v664 = vsel %vm661, %v659, %v645
  %v665 = vsel %vm661, %v660, %v647
  %v666 = vmul.f32 %v662, %v257
  %v667 = vmul.f32 %v663, %v258
  %v668 = vmul.f32 %v664, %v259
  %v669 = vmul.f32 %v665, %v260
  %v670 = vpack.c.bf16 %v516, %v515
  %v671 = vpack.c.bf16 %v667, %v666
  %v672 = vpack.c.bf16 %v669, %v668
  %v674 = vsel %vm470, %v670, 0
  %676 = vmatprep.subr.bf16.mxu0 0
  %677 = vmatpush1.bf16.msra.mxu0 0
  %678 = vmatprep.subr.bf16.mxu0 0
  %679 = vmatpush1.bf16.msra.mxu0 0
  %680 = vmatprep.subr.bf16.mxu0 0
  %681 = vmatpush1.bf16.msra.mxu0 0
  %682 = vmatprep.subr.bf16.mxu0 0
  %683 = vmatpush1.bf16.msra.mxu0 0
  %684 = vmatprep.subr.bf16.mxu0 0
  %685 = vmatpush1.bf16.msra.mxu0 0
  %686 = vmatprep.subr.bf16.mxu0 0
  %687 = vmatpush1.bf16.msra.mxu0 0
  %688 = vmatprep.subr.bf16.mxu0 0
  %689 = vmatpush1.bf16.msra.mxu0 %v672
  %690 = vmatprep.subr.bf16.mxu0 0
  %691 = vmatpush1.bf16.msra.mxu0 %v671
  %692 = vmatprep.subr.bf16.mxu0 0
  %693 = vmatpush2.bf16.msra.mxu0 0
  %694 = vmatprep.subr.bf16.mxu0 0
  %695 = vmatpush2.bf16.msra.mxu0 0
  %696 = vmatprep.subr.bf16.mxu0 0
  %697 = vmatpush2.bf16.msra.mxu0 0
  %698 = vmatprep.subr.bf16.mxu0 0
  %699 = vmatpush2.bf16.msra.mxu0 0
  %700 = vmatprep.subr.bf16.mxu0 0
  %701 = vmatpush2.bf16.msra.mxu0 0
  %702 = vmatprep.subr.bf16.mxu0 0
  %703 = vmatpush2.bf16.msra.mxu0 0
  %704 = vmatprep.subr.bf16.mxu0 0
  %705 = vmatpush2.bf16.msra.mxu0 0
  %706 = vmatprep.subr.bf16.mxu0 0
  %707 = vmatpush2.bf16.msra.mxu0 0
  %708 = vmatprep.mubr.bf16.mxu0 0
  %709 = vmatmul.mubr.bf16.gmra.mxu0 %v674
  %v710 = vpop.f32.mrf.mxu0
  %v711 = vadd.f32 %v53, %v710
  %v712 = vpop.f32.mrf.mxu0
  %v713 = vpop.f32.mrf.mxu0
  %v714 = vadd.f32 %v54, %v713
  %v715 = vpop.f32.mrf.mxu0
  %716 = vdwg.mxu0
  %vm717 = vcmask 523264
  %v718 = vsel %vm717, %v711, -inf
  %719 = vmax.xlane.f32.xlu0 %v718
  %v720 = vpop.xlane.xlu0 %719
  %v721 = vsel %vm717, %v714, -inf
  %722 = vmax.xlane.f32.xlu0 %v721
  %v723 = vpop.xlane.xlu0 %722
  %v724 = vsub.f32 %v711, %v720
  %v725 = vsub.f32 %v714, %v723
  %v726 = vmul.f32 %v724, 1.442695
  %v727 = vpow.pop %v726
  %v728 = vmul.f32 %v725, 1.442695
  %v729 = vpow.pop %v728
  %v730 = vmul.f32 %v566, %v445
  %v731 = vmul.f32 %v569, %v446
  %v732 = vmul.f32 %v566, %v447
  %v733 = vmul.f32 %v569, %v448
  %v734 = vmul.f32 %v566, %v449
  %v735 = vmul.f32 %v569, %v450
  %v736 = vmul.f32 %v566, %v451
  %v737 = vmul.f32 %v569, %v452
  %v738 = vpack.c.bf16 %v729, %v727
  %v739 = vpack.c.bf16 %v731, %v730
  %v740 = vpack.c.bf16 %v733, %v732
  %v741 = vpack.c.bf16 %v735, %v734
  %v742 = vpack.c.bf16 %v737, %v736
  %v744 = vsel %vm717, %v738, 0
  %746 = vmatprep.subr.bf16.mxu0 0
  %747 = vmatpush1.bf16.msra.mxu0 0
  %748 = vmatprep.subr.bf16.mxu0 0
  %749 = vmatpush1.bf16.msra.mxu0 0
  %750 = vmatprep.subr.bf16.mxu0 0
  %751 = vmatpush1.bf16.msra.mxu0 0
  %752 = vmatprep.subr.bf16.mxu0 0
  %753 = vmatpush1.bf16.msra.mxu0 0
  %754 = vmatprep.subr.bf16.mxu0 0
  %755 = vmatpush1.bf16.msra.mxu0 %v742
  %756 = vmatprep.subr.bf16.mxu0 0
  %757 = vmatpush1.bf16.msra.mxu0 %v741
  %758 = vmatprep.subr.bf16.mxu0 0
  %759 = vmatpush1.bf16.msra.mxu0 %v740
  %760 = vmatprep.subr.bf16.mxu0 0
  %761 = vmatpush1.bf16.msra.mxu0 %v739
  %762 = vmatprep.subr.bf16.mxu0 0
  %763 = vmatpush2.bf16.msra.mxu0 0
  %764 = vmatprep.subr.bf16.mxu0 0
  %765 = vmatpush2.bf16.msra.mxu0 0
  %766 = vmatprep.subr.bf16.mxu0 0
  %767 = vmatpush2.bf16.msra.mxu0 0
  %768 = vmatprep.subr.bf16.mxu0 0
  %769 = vmatpush2.bf16.msra.mxu0 0
  %770 = vmatprep.subr.bf16.mxu0 0
  %771 = vmatpush2.bf16.msra.mxu0 0
  %772 = vmatprep.subr.bf16.mxu0 0
  %773 = vmatpush2.bf16.msra.mxu0 0
  %774 = vmatprep.subr.bf16.mxu0 0
  %775 = vmatpush2.bf16.msra.mxu0 0
  %776 = vmatprep.subr.bf16.mxu0 0
  %777 = vmatpush2.bf16.msra.mxu0 0
  %778 = vmatprep.mubr.bf16.mxu0 0
  %779 = vmatmul.mubr.bf16.gmra.mxu0 %v744
  %v780 = vpop.f32.mrf.mxu0
  %v781 = vadd.f32 0.0, %v780
  %v782 = vpop.f32.mrf.mxu0
  %v783 = vpop.f32.mrf.mxu0
  %v784 = vadd.f32 0.0, %v783
  %v785 = vpop.f32.mrf.mxu0
  %786 = vdwg.mxu0
  %v787 = vpack.c.bf16 %v446, %v445
  %v788 = vpack.c.bf16 %v448, %v447
  %v789 = vpack.c.bf16 %v450, %v449
  %v790 = vpack.c.bf16 %v452, %v451
  %791 = vmatprep.subr.bf16.mxu0 0
  %792 = vmatpush1.bf16.msra.mxu0 0
  %793 = vmatprep.subr.bf16.mxu0 0
  %794 = vmatpush1.bf16.msra.mxu0 0
  %795 = vmatprep.subr.bf16.mxu0 0
  %796 = vmatpush1.bf16.msra.mxu0 0
  %797 = vmatprep.subr.bf16.mxu0 0
  %798 = vmatpush1.bf16.msra.mxu0 0
  %799 = vmatprep.subr.bf16.mxu0 0
  %800 = vmatpush1.bf16.msra.mxu0 %v790
  %801 = vmatprep.subr.bf16.mxu0 0
  %802 = vmatpush1.bf16.msra.mxu0 %v789
  %803 = vmatprep.subr.bf16.mxu0 0
  %804 = vmatpush1.bf16.msra.mxu0 %v788
  %805 = vmatprep.subr.bf16.mxu0 0
  %806 = vmatpush1.bf16.msra.mxu0 %v787
  %807 = vmatprep.subr.bf16.mxu0 0
  %808 = vmatpush2.bf16.msra.mxu0 0
  %809 = vmatprep.subr.bf16.mxu0 0
  %810 = vmatpush2.bf16.msra.mxu0 0
  %811 = vmatprep.subr.bf16.mxu0 0
  %812 = vmatpush2.bf16.msra.mxu0 0
  %813 = vmatprep.subr.bf16.mxu0 0
  %814 = vmatpush2.bf16.msra.mxu0 0
  %815 = vmatprep.subr.bf16.mxu0 0
  %816 = vmatpush2.bf16.msra.mxu0 0
  %817 = vmatprep.subr.bf16.mxu0 0
  %818 = vmatpush2.bf16.msra.mxu0 0
  %819 = vmatprep.subr.bf16.mxu0 0
  %820 = vmatpush2.bf16.msra.mxu0 0
  %821 = vmatprep.subr.bf16.mxu0 0
  %822 = vmatpush2.bf16.msra.mxu0 0
  %823 = vmatprep.mubr.bf16.mxu0 0
  %824 = vmatmul.mubr.bf16.gmra.mxu0 %v744
  %v825 = vpop.f32.mrf.mxu0
  %v826 = vadd.f32 0.0, %v825
  %v827 = vpop.f32.mrf.mxu0
  %v828 = vpop.f32.mrf.mxu0
  %v829 = vadd.f32 0.0, %v828
  %v830 = vpop.f32.mrf.mxu0
  %831 = vdwg.mxu0
  %v832 = vrcp.pop %v826
  %v833 = vrcp.pop %v829
  %v834 = vmul.f32 %v781, %v832
  %v835 = vmul.f32 %v784, %v833
  %v836 = vpack.c.bf16 %v835, %v834
  %v837 = vlaneseq
  %v838 = vshrl.u32 %v837, 7
  %v839 = vsub.s32 1, %v838
  %v840 = vrot.slane %v139, %v839
  %v845 = vunpack.c.l.b16 %v79
  %v846 = vunpack.c.l.b16 %v80
  %v847 = vunpack.c.l.b16 %v81
  %v848 = vunpack.c.l.b16 %v82
  %v849 = vpack.c.b16 %v846, %v845
  %v850 = vpack.c.b16 %v848, %v847
  %v854 = vsel %vm470, %v836, 0
  %856 = vmatprep.subr.bf16.mxu0 0
  %857 = vmatpush1.bf16.msra.mxu0 0
  %858 = vmatprep.subr.bf16.mxu0 0
  %859 = vmatpush1.bf16.msra.mxu0 0
  %860 = vmatprep.subr.bf16.mxu0 0
  %861 = vmatpush1.bf16.msra.mxu0 0
  %862 = vmatprep.subr.bf16.mxu0 0
  %863 = vmatpush1.bf16.msra.mxu0 0
  %864 = vmatprep.subr.bf16.mxu0 0
  %865 = vmatpush1.bf16.msra.mxu0 0
  %866 = vmatprep.subr.bf16.mxu0 0
  %867 = vmatpush1.bf16.msra.mxu0 0
  %868 = vmatprep.subr.bf16.mxu0 0
  %869 = vmatpush1.bf16.msra.mxu0 %v850
  %870 = vmatprep.subr.bf16.mxu0 0
  %871 = vmatpush1.bf16.msra.mxu0 %v849
  %872 = vmatprep.subr.bf16.mxu0 0
  %873 = vmatpush2.bf16.msra.mxu0 0
  %874 = vmatprep.subr.bf16.mxu0 0
  %875 = vmatpush2.bf16.msra.mxu0 0
  %876 = vmatprep.subr.bf16.mxu0 0
  %877 = vmatpush2.bf16.msra.mxu0 0
  %878 = vmatprep.subr.bf16.mxu0 0
  %879 = vmatpush2.bf16.msra.mxu0 0
  %880 = vmatprep.subr.bf16.mxu0 0
  %881 = vmatpush2.bf16.msra.mxu0 0
  %882 = vmatprep.subr.bf16.mxu0 0
  %883 = vmatpush2.bf16.msra.mxu0 0
  %884 = vmatprep.subr.bf16.mxu0 0
  %885 = vmatpush2.bf16.msra.mxu0 0
  %886 = vmatprep.subr.bf16.mxu0 0
  %887 = vmatpush2.bf16.msra.mxu0 0
  %888 = vmatprep.mubr.bf16.mxu0 0
  %889 = vmatmul.mubr.bf16.gmra.mxu0 %v854
  %v890 = vpop.f32.mrf.mxu0
  %v891 = vadd.f32 %v840, %v890
  %v892 = vpop.f32.mrf.mxu0
  %v893 = vpop.f32.mrf.mxu0
  %v894 = vadd.f32 %v840, %v893
  %v895 = vpop.f32.mrf.mxu0
  %896 = vdwg.mxu0
  %v897 = vadd.f32 %v45, %v891
  %v898 = vadd.f32 %v46, %v894
  %v899 = vsel %vm470, %v897, 0.0
  %900 = vadd.xlane.f32.xlu0 %v899
  %v901 = vpop.xlane.xlu0 %900
  %v902 = vsel %vm470, %v898, 0.0
  %903 = vadd.xlane.f32.xlu0 %v902
  %v904 = vpop.xlane.xlu0 %903
  %v905 = vrcp.pop 32.0
  %v906 = vmul.f32 %v901, %v905
  %v907 = vmul.f32 %v904, %v905
  %v908 = vsub.f32 %v897, %v906
  %v909 = vsub.f32 %v898, %v907
  %v910 = vmul.f32 %v908, %v908
  %v911 = vmul.f32 %v909, %v909
  %v912 = vsel %vm470, %v910, 0.0
  %913 = vadd.xlane.f32.xlu0 %v912
  %v914 = vpop.xlane.xlu0 %913
  %v915 = vsel %vm470, %v911, 0.0
  %916 = vadd.xlane.f32.xlu0 %v915
  %v917 = vpop.xlane.xlu0 %916
  %v918 = vmul.f32 %v914, %v905
  %v919 = vmul.f32 %v917, %v905
  %v920 = vadd.f32 %v918, 1e-05
  %v921 = vadd.f32 %v919, 1e-05
  %v922 = vrsqrt.pop %v920
  %v923 = vrsqrt.pop %v921
  %v924 = vmul.f32 %v908, %v922
  %v925 = vmul.f32 %v909, %v923
  %v926 = vlaneseq
  %v927 = vshrl.u32 %v926, 7
  %v928 = vsub.s32 4, %v927
  %v929 = vrot.slane %v140, %v928
  %v930 = vmul.f32 %v924, %v929
  %v931 = vmul.f32 %v925, %v929
  %v932 = vlaneseq
  %v933 = vshrl.u32 %v932, 7
  %v934 = vsub.s32 5, %v933
  %v935 = vrot.slane %v140, %v934
  %v936 = vadd.f32 %v930, %v935
  %v937 = vadd.f32 %v931, %v935
  %v938 = vpack.c.bf16 %v937, %v936
  %v939 = vlaneseq
  %v940 = vshrl.u32 %v939, 7
  %v941 = vsub.s32 2, %v940
  %v942 = vrot.slane %v140, %v941
  %v947 = vunpack.c.l.b16 %v99
  %v948 = vunpack.c.l.b16 %v100
  %v949 = vunpack.c.l.b16 %v101
  %v950 = vunpack.c.l.b16 %v102
  %v951 = vpack.c.b16 %v948, %v947
  %v952 = vpack.c.b16 %v950, %v949
  %v956 = vsel %vm470, %v938, 0
  %958 = vmatprep.subr.bf16.mxu0 0
  %959 = vmatpush1.bf16.msra.mxu0 0
  %960 = vmatprep.subr.bf16.mxu0 0
  %961 = vmatpush1.bf16.msra.mxu0 0
  %962 = vmatprep.subr.bf16.mxu0 0
  %963 = vmatpush1.bf16.msra.mxu0 0
  %964 = vmatprep.subr.bf16.mxu0 0
  %965 = vmatpush1.bf16.msra.mxu0 0
  %966 = vmatprep.subr.bf16.mxu0 0
  %967 = vmatpush1.bf16.msra.mxu0 0
  %968 = vmatprep.subr.bf16.mxu0 0
  %969 = vmatpush1.bf16.msra.mxu0 0
  %970 = vmatprep.subr.bf16.mxu0 0
  %971 = vmatpush1.bf16.msra.mxu0 %v952
  %972 = vmatprep.subr.bf16.mxu0 0
  %973 = vmatpush1.bf16.msra.mxu0 %v951
  %974 = vmatprep.subr.bf16.mxu0 0
  %975 = vmatpush2.bf16.msra.mxu0 0
  %976 = vmatprep.subr.bf16.mxu0 0
  %977 = vmatpush2.bf16.msra.mxu0 0
  %978 = vmatprep.subr.bf16.mxu0 0
  %979 = vmatpush2.bf16.msra.mxu0 0
  %980 = vmatprep.subr.bf16.mxu0 0
  %981 = vmatpush2.bf16.msra.mxu0 0
  %982 = vmatprep.subr.bf16.mxu0 0
  %983 = vmatpush2.bf16.msra.mxu0 0
  %984 = vmatprep.subr.bf16.mxu0 0
  %985 = vmatpush2.bf16.msra.mxu0 0
  %986 = vmatprep.subr.bf16.mxu0 0
  %987 = vmatpush2.bf16.msra.mxu0 0
  %988 = vmatprep.subr.bf16.mxu0 0
  %989 = vmatpush2.bf16.msra.mxu0 0
  %990 = vmatprep.mubr.bf16.mxu0 0
  %991 = vmatmul.mubr.bf16.gmra.mxu0 %v956
  %v992 = vpop.f32.mrf.mxu0
  %v993 = vadd.f32 %v942, %v992
  %v994 = vpop.f32.mrf.mxu0
  %v995 = vpop.f32.mrf.mxu0
  %v996 = vadd.f32 %v942, %v995
  %v997 = vpop.f32.mrf.mxu0
  %998 = vdwg.mxu0
  %v999 = vmax.f32 %v993, 0.0
  %v1000 = vmax.f32 %v996, 0.0
  %v1001 = vpack.c.bf16 %v1000, %v999
  %v1002 = vlaneseq
  %v1003 = vshrl.u32 %v1002, 7
  %v1004 = vsub.s32 3, %v1003
  %v1005 = vrot.slane %v140, %v1004
  %v1014 = vunpack.c.l.b16 %v111
  %v1015 = vunpack.c.l.b16 %v112
  %v1016 = vunpack.c.l.b16 %v113
  %v1017 = vunpack.c.l.b16 %v114
  %v1018 = vunpack.c.l.b16 %v115
  %v1019 = vunpack.c.l.b16 %v116
  %v1020 = vunpack.c.l.b16 %v117
  %v1021 = vunpack.c.l.b16 %v118
  %v1022 = vpack.c.b16 %v1015, %v1014
  %v1023 = vpack.c.b16 %v1017, %v1016
  %v1024 = vpack.c.b16 %v1019, %v1018
  %v1025 = vpack.c.b16 %v1021, %v1020
  %v1031 = vsel %vm717, %v1001, 0
  %1033 = vmatprep.subr.bf16.mxu0 0
  %1034 = vmatpush1.bf16.msra.mxu0 0
  %1035 = vmatprep.subr.bf16.mxu0 0
  %1036 = vmatpush1.bf16.msra.mxu0 0
  %1037 = vmatprep.subr.bf16.mxu0 0
  %1038 = vmatpush1.bf16.msra.mxu0 0
  %1039 = vmatprep.subr.bf16.mxu0 0
  %1040 = vmatpush1.bf16.msra.mxu0 0
  %1041 = vmatprep.subr.bf16.mxu0 0
  %1042 = vmatpush1.bf16.msra.mxu0 %v1025
  %1043 = vmatprep.subr.bf16.mxu0 0
  %1044 = vmatpush1.bf16.msra.mxu0 %v1024
  %1045 = vmatprep.subr.bf16.mxu0 0
  %1046 = vmatpush1.bf16.msra.mxu0 %v1023
  %1047 = vmatprep.subr.bf16.mxu0 0
  %1048 = vmatpush1.bf16.msra.mxu0 %v1022
  %1049 = vmatprep.subr.bf16.mxu0 0
  %1050 = vmatpush2.bf16.msra.mxu0 0
  %1051 = vmatprep.subr.bf16.mxu0 0
  %1052 = vmatpush2.bf16.msra.mxu0 0
  %1053 = vmatprep.subr.bf16.mxu0 0
  %1054 = vmatpush2.bf16.msra.mxu0 0
  %1055 = vmatprep.subr.bf16.mxu0 0
  %1056 = vmatpush2.bf16.msra.mxu0 0
  %1057 = vmatprep.subr.bf16.mxu0 0
  %1058 = vmatpush2.bf16.msra.mxu0 0
  %1059 = vmatprep.subr.bf16.mxu0 0
  %1060 = vmatpush2.bf16.msra.mxu0 0
  %1061 = vmatprep.subr.bf16.mxu0 0
  %1062 = vmatpush2.bf16.msra.mxu0 0
  %1063 = vmatprep.subr.bf16.mxu0 0
  %1064 = vmatpush2.bf16.msra.mxu0 0
  %1065 = vmatprep.mubr.bf16.mxu0 0
  %1066 = vmatmul.mubr.bf16.gmra.mxu0 %v1031
  %v1067 = vpop.f32.mrf.mxu0
  %v1068 = vadd.f32 %v1005, %v1067
  %v1069 = vpop.f32.mrf.mxu0
  %v1070 = vpop.f32.mrf.mxu0
  %v1071 = vadd.f32 %v1005, %v1070
  %v1072 = vpop.f32.mrf.mxu0
  %1073 = vdwg.mxu0
  %v1074 = vadd.f32 %v936, %v1068
  %v1075 = vadd.f32 %v937, %v1071
  %v1076 = vsel %vm470, %v1074, 0.0
  %1077 = vadd.xlane.f32.xlu0 %v1076
  %v1078 = vpop.xlane.xlu0 %1077
  %v1079 = vsel %vm470, %v1075, 0.0
  %1080 = vadd.xlane.f32.xlu0 %v1079
  %v1081 = vpop.xlane.xlu0 %1080
  %v1082 = vmul.f32 %v1078, %v905
  %v1083 = vmul.f32 %v1081, %v905
  %v1084 = vsub.f32 %v1074, %v1082
  %v1085 = vsub.f32 %v1075, %v1083
  %v1086 = vmul.f32 %v1084, %v1084
  %v1087 = vmul.f32 %v1085, %v1085
  %v1088 = vsel %vm470, %v1086, 0.0
  %1089 = vadd.xlane.f32.xlu0 %v1088
  %v1090 = vpop.xlane.xlu0 %1089
  %v1091 = vsel %vm470, %v1087, 0.0
  %1092 = vadd.xlane.f32.xlu0 %v1091
  %v1093 = vpop.xlane.xlu0 %1092
  %v1094 = vmul.f32 %v1090, %v905
  %v1095 = vmul.f32 %v1093, %v905
  %v1096 = vadd.f32 %v1094, 1e-05
  %v1097 = vadd.f32 %v1095, 1e-05
  %v1098 = vrsqrt.pop %v1096
  %v1099 = vrsqrt.pop %v1097
  %v1100 = vmul.f32 %v1084, %v1098
  %v1101 = vmul.f32 %v1085, %v1099
  %v1102 = vlaneseq
  %v1103 = vshrl.u32 %v1102, 7
  %v1104 = vsub.s32 6, %v1103
  %v1105 = vrot.slane %v140, %v1104
  %v1106 = vmul.f32 %v1100, %v1105
  %v1107 = vmul.f32 %v1101, %v1105
  %v1108 = vlaneseq
  %v1109 = vshrl.u32 %v1108, 7
  %v1110 = vsub.s32 7, %v1109
  %v1111 = vrot.slane %v140, %v1110
  %v1112 = vadd.f32 %v1106, %v1111
  %v1113 = vadd.f32 %v1107, %v1111
  %v1114 = vadd.f32 %v1112, %v49
  %v1115 = vadd.f32 %v1113, %v50
  %v1116 = vadd.f32 %v47, %v51
  %v1117 = vadd.f32 %v48, %v52
  %v1118 = vpack.c.bf16 %v1117, %v1116
  %v1119 = vlaneseq
  %v1120 = vshrl.u32 %v1119, 7
  %v1121 = vsub.s32 2, %v1120
  %v1122 = vrot.slane %v139, %v1121
  %v1127 = vunpack.c.l.b16 %v63
  %v1128 = vunpack.c.l.b16 %v64
  %v1129 = vunpack.c.l.b16 %v65
  %v1130 = vunpack.c.l.b16 %v66
  %v1131 = vpack.c.b16 %v1128, %v1127
  %v1132 = vpack.c.b16 %v1130, %v1129
  %v1136 = vsel %vm470, %v1118, 0
  %1138 = vmatprep.subr.bf16.mxu0 0
  %1139 = vmatpush1.bf16.msra.mxu0 0
  %1140 = vmatprep.subr.bf16.mxu0 0
  %1141 = vmatpush1.bf16.msra.mxu0 0
  %1142 = vmatprep.subr.bf16.mxu0 0
  %1143 = vmatpush1.bf16.msra.mxu0 0
  %1144 = vmatprep.subr.bf16.mxu0 0
  %1145 = vmatpush1.bf16.msra.mxu0 0
  %1146 = vmatprep.subr.bf16.mxu0 0
  %1147 = vmatpush1.bf16.msra.mxu0 0
  %1148 = vmatprep.subr.bf16.mxu0 0
  %1149 = vmatpush1.bf16.msra.mxu0 0
  %1150 = vmatprep.subr.bf16.mxu0 0
  %1151 = vmatpush1.bf16.msra.mxu0 %v1132
  %1152 = vmatprep.subr.bf16.mxu0 0
  %1153 = vmatpush1.bf16.msra.mxu0 %v1131
  %1154 = vmatprep.subr.bf16.mxu0 0
  %1155 = vmatpush2.bf16.msra.mxu0 0
  %1156 = vmatprep.subr.bf16.mxu0 0
  %1157 = vmatpush2.bf16.msra.mxu0 0
  %1158 = vmatprep.subr.bf16.mxu0 0
  %1159 = vmatpush2.bf16.msra.mxu0 0
  %1160 = vmatprep.subr.bf16.mxu0 0
  %1161 = vmatpush2.bf16.msra.mxu0 0
  %1162 = vmatprep.subr.bf16.mxu0 0
  %1163 = vmatpush2.bf16.msra.mxu0 0
  %1164 = vmatprep.subr.bf16.mxu0 0
  %1165 = vmatpush2.bf16.msra.mxu0 0
  %1166 = vmatprep.subr.bf16.mxu0 0
  %1167 = vmatpush2.bf16.msra.mxu0 0
  %1168 = vmatprep.subr.bf16.mxu0 0
  %1169 = vmatpush2.bf16.msra.mxu0 0
  %1170 = vmatprep.mubr.bf16.mxu0 0
  %1171 = vmatmul.mubr.bf16.gmra.mxu0 %v1136
  %v1172 = vpop.f32.mrf.mxu0
  %v1173 = vadd.f32 %v1122, %v1172
  %v1174 = vpop.f32.mrf.mxu0
  %v1175 = vpop.f32.mrf.mxu0
  %v1176 = vadd.f32 %v1122, %v1175
  %v1177 = vpop.f32.mrf.mxu0
  %1178 = vdwg.mxu0
  %v1179 = vmul.f32 %v1173, 0.35355338
  %v1180 = vmul.f32 %v1176, 0.35355338
  %v1181 = vpack.c.bf16 %v48, %v47
  %1182 = vrot.lane.b32.xlu0 %v1131, 64
  %v1183 = vpop.permute.xlu0 %1182
  %1184 = vrot.lane.b32.xlu0 %v1132, 64
  %v1185 = vpop.permute.xlu0 %1184
  %1189 = vrot.lane.b32.xlu0 %v1122, 64
  %v1190 = vpop.permute.xlu0 %1189
  %v1193 = vsel %vm470, %v1181, 0
  %1195 = vmatprep.subr.bf16.mxu0 0
  %1196 = vmatpush1.bf16.msra.mxu0 0
  %1197 = vmatprep.subr.bf16.mxu0 0
  %1198 = vmatpush1.bf16.msra.mxu0 0
  %1199 = vmatprep.subr.bf16.mxu0 0
  %1200 = vmatpush1.bf16.msra.mxu0 0
  %1201 = vmatprep.subr.bf16.mxu0 0
  %1202 = vmatpush1.bf16.msra.mxu0 0
  %1203 = vmatprep.subr.bf16.mxu0 0
  %1204 = vmatpush1.bf16.msra.mxu0 0
  %1205 = vmatprep.subr.bf16.mxu0 0
  %1206 = vmatpush1.bf16.msra.mxu0 0
  %1207 = vmatprep.subr.bf16.mxu0 0
  %1208 = vmatpush1.bf16.msra.mxu0 %v1185
  %1209 = vmatprep.subr.bf16.mxu0 0
  %1210 = vmatpush1.bf16.msra.mxu0 %v1183
  %1211 = vmatprep.subr.bf16.mxu0 0
  %1212 = vmatpush2.bf16.msra.mxu0 0
  %1213 = vmatprep.subr.bf16.mxu0 0
  %1214 = vmatpush2.bf16.msra.mxu0 0
  %1215 = vmatprep.subr.bf16.mxu0 0
  %1216 = vmatpush2.bf16.msra.mxu0 0
  %1217 = vmatprep.subr.bf16.mxu0 0
  %1218 = vmatpush2.bf16.msra.mxu0 0
  %1219 = vmatprep.subr.bf16.mxu0 0
  %1220 = vmatpush2.bf16.msra.mxu0 0
  %1221 = vmatprep.subr.bf16.mxu0 0
  %1222 = vmatpush2.bf16.msra.mxu0 0
  %1223 = vmatprep.subr.bf16.mxu0 0
  %1224 = vmatpush2.bf16.msra.mxu0 0
  %1225 = vmatprep.subr.bf16.mxu0 0
  %1226 = vmatpush2.bf16.msra.mxu0 0
  %1227 = vmatprep.mubr.bf16.mxu0 0
  %1228 = vmatmul.mubr.bf16.gmra.mxu0 %v1193
  %v1229 = vpop.f32.mrf.mxu0
  %v1230 = vadd.f32 %v1190, %v1229
  %v1231 = vpop.f32.mrf.mxu0
  %v1232 = vpop.f32.mrf.mxu0
  %v1233 = vadd.f32 %v1190, %v1232
  %v1234 = vpop.f32.mrf.mxu0
  %1235 = vdwg.mxu0
  %1238 = vrot.lane.b32.xlu0 %v1173, 96
  %v1239 = vpop.permute.xlu0 %1238
  %1240 = vrot.lane.b32.xlu0 %v1176, 96
  %v1241 = vpop.permute.xlu0 %1240
  %1244 = vxpose.xlu0.b32.start [1/16] %v1239, 128
  %1245 = vxpose.xlu0.b32.cont [2/16] %v1241, 128
  %1246 = vxpose.xlu0.b32.cont [3/16] 0.0, 128
  %1247 = vxpose.xlu0.b32.cont [4/16] 0.0, 128
  %1248 = vxpose.xlu0.b32.cont [5/16] 0.0, 128
  %1249 = vxpose.xlu0.b32.cont [6/16] 0.0, 128
  %1250 = vxpose.xlu0.b32.cont [7/16] 0.0, 128
  %1251 = vxpose.xlu0.b32.cont [8/16] 0.0, 128
  %1252 = vxpose.xlu0.b32.cont [9/16] 0.0, 128
  %1253 = vxpose.xlu0.b32.cont [10/16] 0.0, 128
  %1254 = vxpose.xlu0.b32.cont [11/16] 0.0, 128
  %1255 = vxpose.xlu0.b32.cont [12/16] 0.0, 128
  %1256 = vxpose.xlu0.b32.cont [13/16] 0.0, 128
  %1257 = vxpose.xlu0.b32.cont [14/16] 0.0, 128
  %1258 = vxpose.xlu0.b32.cont [15/16] 0.0, 128
  %1259 = vxpose.xlu0.b32.end [16/16] 0.0, 128
  %v1260 = vpop.trf.xlu0
  %v1261 = vpop.trf.xlu0
  %v1262 = vpop.trf.xlu0
  %v1263 = vpop.trf.xlu0
  %v1264 = vpop.trf.xlu0
  %v1265 = vpop.trf.xlu0
  %v1266 = vpop.trf.xlu0
  %v1267 = vpop.trf.xlu0
  %v1268 = vpop.trf.xlu0
  %v1269 = vpop.trf.xlu0
  %v1270 = vpop.trf.xlu0
  %v1271 = vpop.trf.xlu0
  %v1272 = vpop.trf.xlu0
  %v1273 = vpop.trf.xlu0
  %v1274 = vpop.trf.xlu0
  %v1275 = vpop.trf.xlu0
  %1280 = vrot.lane.b32.xlu0 %v1260, 16
  %v1281 = vpop.permute.xlu0 %1280
  %1282 = vrot.lane.b32.xlu0 %v1261, 16
  %v1283 = vpop.permute.xlu0 %1282
  %1284 = vrot.lane.b32.xlu0 %v1262, 16
  %v1285 = vpop.permute.xlu0 %1284
  %1286 = vrot.lane.b32.xlu0 %v1263, 16
  %v1287 = vpop.permute.xlu0 %1286
  %1292 = vrot.lane.b32.xlu0 %v1260, 32
  %v1293 = vpop.permute.xlu0 %1292
  %1294 = vrot.lane.b32.xlu0 %v1261, 32
  %v1295 = vpop.permute.xlu0 %1294
  %1296 = vrot.lane.b32.xlu0 %v1262, 32
  %v1297 = vpop.permute.xlu0 %1296
  %1298 = vrot.lane.b32.xlu0 %v1263, 32
  %v1299 = vpop.permute.xlu0 %1298
  %1304 = vrot.lane.b32.xlu0 %v1260, 48
  %v1305 = vpop.permute.xlu0 %1304
  %1306 = vrot.lane.b32.xlu0 %v1261, 48
  %v1307 = vpop.permute.xlu0 %1306
  %1308 = vrot.lane.b32.xlu0 %v1262, 48
  %v1309 = vpop.permute.xlu0 %1308
  %1310 = vrot.lane.b32.xlu0 %v1263, 48
  %v1311 = vpop.permute.xlu0 %1310
  %v1316 = vsel %vm652, %v1260, %v1281
  %v1317 = vsel %vm652, %v1261, %v1283
  %v1318 = vsel %vm652, %v1262, %v1285
  %v1319 = vsel %vm652, %v1263, %v1287
  %v1320 = vsel %vm470, %v1316, %v1293
  %v1321 = vsel %vm470, %v1317, %v1295
  %v1322 = vsel %vm470, %v1318, %v1297
  %v1323 = vsel %vm470, %v1319, %v1299
  %v1324 = vsel %vm661, %v1320, %v1305
  %v1325 = vsel %vm661, %v1321, %v1307
  %v1326 = vsel %vm661, %v1322, %v1309
  %v1327 = vsel %vm661, %v1323, %v1311
  %v1328 = vmul.f32 %v1324, %v257
  %v1329 = vmul.f32 %v1325, %v258
  %v1330 = vmul.f32 %v1326, %v259
  %v1331 = vmul.f32 %v1327, %v260
  %v1332 = vpack.c.bf16 %v1180, %v1179
  %v1333 = vpack.c.bf16 %v1329, %v1328
  %v1334 = vpack.c.bf16 %v1331, %v1330
  %v1336 = vsel %vm470, %v1332, 0
  %1338 = vmatprep.subr.bf16.mxu0 0
  %1339 = vmatpush1.bf16.msra.mxu0 0
  %1340 = vmatprep.subr.bf16.mxu0 0
  %1341 = vmatpush1.bf16.msra.mxu0 0
  %1342 = vmatprep.subr.bf16.mxu0 0
  %1343 = vmatpush1.bf16.msra.mxu0 0
  %1344 = vmatprep.subr.bf16.mxu0 0
  %1345 = vmatpush1.bf16.msra.mxu0 0
  %1346 = vmatprep.subr.bf16.mxu0 0
  %1347 = vmatpush1.bf16.msra.mxu0 0
  %1348 = vmatprep.subr.bf16.mxu0 0
  %1349 = vmatpush1.bf16.msra.mxu0 0
  %1350 = vmatprep.subr.bf16.mxu0 0
  %1351 = vmatpush1.bf16.msra.mxu0 %v1334
  %1352 = vmatprep.subr.bf16.mxu0 0
  %1353 = vmatpush1.bf16.msra.mxu0 %v1333
  %1354 = vmatprep.subr.bf16.mxu0 0
  %1355 = vmatpush2.bf16.msra.mxu0 0
  %1356 = vmatprep.subr.bf16.mxu0 0
  %1357 = vmatpush2.bf16.msra.mxu0 0
  %1358 = vmatprep.subr.bf16.mxu0 0
  %1359 = vmatpush2.bf16.msra.mxu0 0
  %1360 = vmatprep.subr.bf16.mxu0 0
  %1361 = vmatpush2.bf16.msra.mxu0 0
  %1362 = vmatprep.subr.bf16.mxu0 0
  %1363 = vmatpush2.bf16.msra.mxu0 0
  %1364 = vmatprep.subr.bf16.mxu0 0
  %1365 = vmatpush2.bf16.msra.mxu0 0
  %1366 = vmatprep.subr.bf16.mxu0 0
  %1367 = vmatpush2.bf16.msra.mxu0 0
  %1368 = vmatprep.subr.bf16.mxu0 0
  %1369 = vmatpush2.bf16.msra.mxu0 0
  %1370 = vmatprep.mubr.bf16.mxu0 0
  %1371 = vmatmul.mubr.bf16.gmra.mxu0 %v1336
  %v1372 = vpop.f32.mrf.mxu0
  %v1373 = vadd.f32 %v55, %v1372
  %v1374 = vpop.f32.mrf.mxu0
  %v1375 = vpop.f32.mrf.mxu0
  %v1376 = vadd.f32 %v56, %v1375
  %v1377 = vpop.f32.mrf.mxu0
  %1378 = vdwg.mxu0
  %v1379 = vsel %vm717, %v1373, -inf
  %1380 = vmax.xlane.f32.xlu0 %v1379
  %v1381 = vpop.xlane.xlu0 %1380
  %v1382 = vsel %vm717, %v1376, -inf
  %1383 = vmax.xlane.f32.xlu0 %v1382
  %v1384 = vpop.xlane.xlu0 %1383
  %v1385 = vsub.f32 %v1373, %v1381
  %v1386 = vsub.f32 %v1376, %v1384
  %v1387 = vmul.f32 %v1385, 1.442695
  %v1388 = vpow.pop %v1387
  %v1389 = vmul.f32 %v1386, 1.442695
  %v1390 = vpow.pop %v1389
  %v1391 = vmul.f32 %v1230, %v445
  %v1392 = vmul.f32 %v1233, %v446
  %v1393 = vmul.f32 %v1230, %v447
  %v1394 = vmul.f32 %v1233, %v448
  %v1395 = vmul.f32 %v1230, %v449
  %v1396 = vmul.f32 %v1233, %v450
  %v1397 = vmul.f32 %v1230, %v451
  %v1398 = vmul.f32 %v1233, %v452
  %v1399 = vpack.c.bf16 %v1390, %v1388
  %v1400 = vpack.c.bf16 %v1392, %v1391
  %v1401 = vpack.c.bf16 %v1394, %v1393
  %v1402 = vpack.c.bf16 %v1396, %v1395
  %v1403 = vpack.c.bf16 %v1398, %v1397
  %v1405 = vsel %vm717, %v1399, 0
  %1407 = vmatprep.subr.bf16.mxu0 0
  %1408 = vmatpush1.bf16.msra.mxu0 0
  %1409 = vmatprep.subr.bf16.mxu0 0
  %1410 = vmatpush1.bf16.msra.mxu0 0
  %1411 = vmatprep.subr.bf16.mxu0 0
  %1412 = vmatpush1.bf16.msra.mxu0 0
  %1413 = vmatprep.subr.bf16.mxu0 0
  %1414 = vmatpush1.bf16.msra.mxu0 0
  %1415 = vmatprep.subr.bf16.mxu0 0
  %1416 = vmatpush1.bf16.msra.mxu0 %v1403
  %1417 = vmatprep.subr.bf16.mxu0 0
  %1418 = vmatpush1.bf16.msra.mxu0 %v1402
  %1419 = vmatprep.subr.bf16.mxu0 0
  %1420 = vmatpush1.bf16.msra.mxu0 %v1401
  %1421 = vmatprep.subr.bf16.mxu0 0
  %1422 = vmatpush1.bf16.msra.mxu0 %v1400
  %1423 = vmatprep.subr.bf16.mxu0 0
  %1424 = vmatpush2.bf16.msra.mxu0 0
  %1425 = vmatprep.subr.bf16.mxu0 0
  %1426 = vmatpush2.bf16.msra.mxu0 0
  %1427 = vmatprep.subr.bf16.mxu0 0
  %1428 = vmatpush2.bf16.msra.mxu0 0
  %1429 = vmatprep.subr.bf16.mxu0 0
  %1430 = vmatpush2.bf16.msra.mxu0 0
  %1431 = vmatprep.subr.bf16.mxu0 0
  %1432 = vmatpush2.bf16.msra.mxu0 0
  %1433 = vmatprep.subr.bf16.mxu0 0
  %1434 = vmatpush2.bf16.msra.mxu0 0
  %1435 = vmatprep.subr.bf16.mxu0 0
  %1436 = vmatpush2.bf16.msra.mxu0 0
  %1437 = vmatprep.subr.bf16.mxu0 0
  %1438 = vmatpush2.bf16.msra.mxu0 0
  %1439 = vmatprep.mubr.bf16.mxu0 0
  %1440 = vmatmul.mubr.bf16.gmra.mxu0 %v1405
  %v1441 = vpop.f32.mrf.mxu0
  %v1442 = vadd.f32 0.0, %v1441
  %v1443 = vpop.f32.mrf.mxu0
  %v1444 = vpop.f32.mrf.mxu0
  %v1445 = vadd.f32 0.0, %v1444
  %v1446 = vpop.f32.mrf.mxu0
  %1447 = vdwg.mxu0
  %1448 = vmatprep.subr.bf16.mxu0 0
  %1449 = vmatpush1.bf16.msra.mxu0 0
  %1450 = vmatprep.subr.bf16.mxu0 0
  %1451 = vmatpush1.bf16.msra.mxu0 0
  %1452 = vmatprep.subr.bf16.mxu0 0
  %1453 = vmatpush1.bf16.msra.mxu0 0
  %1454 = vmatprep.subr.bf16.mxu0 0
  %1455 = vmatpush1.bf16.msra.mxu0 0
  %1456 = vmatprep.subr.bf16.mxu0 0
  %1457 = vmatpush1.bf16.msra.mxu0 %v790
  %1458 = vmatprep.subr.bf16.mxu0 0
  %1459 = vmatpush1.bf16.msra.mxu0 %v789
  %1460 = vmatprep.subr.bf16.mxu0 0
  %1461 = vmatpush1.bf16.msra.mxu0 %v788
  %1462 = vmatprep.subr.bf16.mxu0 0
  %1463 = vmatpush1.bf16.msra.mxu0 %v787
  %1464 = vmatprep.subr.bf16.mxu0 0
  %1465 = vmatpush2.bf16.msra.mxu0 0
  %1466 = vmatprep.subr.bf16.mxu0 0
  %1467 = vmatpush2.bf16.msra.mxu0 0
  %1468 = vmatprep.subr.bf16.mxu0 0
  %1469 = vmatpush2.bf16.msra.mxu0 0
  %1470 = vmatprep.subr.bf16.mxu0 0
  %1471 = vmatpush2.bf16.msra.mxu0 0
  %1472 = vmatprep.subr.bf16.mxu0 0
  %1473 = vmatpush2.bf16.msra.mxu0 0
  %1474 = vmatprep.subr.bf16.mxu0 0
  %1475 = vmatpush2.bf16.msra.mxu0 0
  %1476 = vmatprep.subr.bf16.mxu0 0
  %1477 = vmatpush2.bf16.msra.mxu0 0
  %1478 = vmatprep.subr.bf16.mxu0 0
  %1479 = vmatpush2.bf16.msra.mxu0 0
  %1480 = vmatprep.mubr.bf16.mxu0 0
  %1481 = vmatmul.mubr.bf16.gmra.mxu0 %v1405
  %v1482 = vpop.f32.mrf.mxu0
  %v1483 = vadd.f32 0.0, %v1482
  %v1484 = vpop.f32.mrf.mxu0
  %v1485 = vpop.f32.mrf.mxu0
  %v1486 = vadd.f32 0.0, %v1485
  %v1487 = vpop.f32.mrf.mxu0
  %1488 = vdwg.mxu0
  %v1489 = vrcp.pop %v1483
  %v1490 = vrcp.pop %v1486
  %v1491 = vmul.f32 %v1442, %v1489
  %v1492 = vmul.f32 %v1445, %v1490
  %v1493 = vpack.c.bf16 %v1492, %v1491
  %v1494 = vlaneseq
  %v1495 = vshrl.u32 %v1494, 7
  %v1496 = vsub.s32 3, %v1495
  %v1497 = vrot.slane %v139, %v1496
  %v1502 = vunpack.c.l.b16 %v83
  %v1503 = vunpack.c.l.b16 %v84
  %v1504 = vunpack.c.l.b16 %v85
  %v1505 = vunpack.c.l.b16 %v86
  %v1506 = vpack.c.b16 %v1503, %v1502
  %v1507 = vpack.c.b16 %v1505, %v1504
  %v1511 = vsel %vm470, %v1493, 0
  %1513 = vmatprep.subr.bf16.mxu0 0
  %1514 = vmatpush1.bf16.msra.mxu0 0
  %1515 = vmatprep.subr.bf16.mxu0 0
  %1516 = vmatpush1.bf16.msra.mxu0 0
  %1517 = vmatprep.subr.bf16.mxu0 0
  %1518 = vmatpush1.bf16.msra.mxu0 0
  %1519 = vmatprep.subr.bf16.mxu0 0
  %1520 = vmatpush1.bf16.msra.mxu0 0
  %1521 = vmatprep.subr.bf16.mxu0 0
  %1522 = vmatpush1.bf16.msra.mxu0 0
  %1523 = vmatprep.subr.bf16.mxu0 0
  %1524 = vmatpush1.bf16.msra.mxu0 0
  %1525 = vmatprep.subr.bf16.mxu0 0
  %1526 = vmatpush1.bf16.msra.mxu0 %v1507
  %1527 = vmatprep.subr.bf16.mxu0 0
  %1528 = vmatpush1.bf16.msra.mxu0 %v1506
  %1529 = vmatprep.subr.bf16.mxu0 0
  %1530 = vmatpush2.bf16.msra.mxu0 0
  %1531 = vmatprep.subr.bf16.mxu0 0
  %1532 = vmatpush2.bf16.msra.mxu0 0
  %1533 = vmatprep.subr.bf16.mxu0 0
  %1534 = vmatpush2.bf16.msra.mxu0 0
  %1535 = vmatprep.subr.bf16.mxu0 0
  %1536 = vmatpush2.bf16.msra.mxu0 0
  %1537 = vmatprep.subr.bf16.mxu0 0
  %1538 = vmatpush2.bf16.msra.mxu0 0
  %1539 = vmatprep.subr.bf16.mxu0 0
  %1540 = vmatpush2.bf16.msra.mxu0 0
  %1541 = vmatprep.subr.bf16.mxu0 0
  %1542 = vmatpush2.bf16.msra.mxu0 0
  %1543 = vmatprep.subr.bf16.mxu0 0
  %1544 = vmatpush2.bf16.msra.mxu0 0
  %1545 = vmatprep.mubr.bf16.mxu0 0
  %1546 = vmatmul.mubr.bf16.gmra.mxu0 %v1511
  %v1547 = vpop.f32.mrf.mxu0
  %v1548 = vadd.f32 %v1497, %v1547
  %v1549 = vpop.f32.mrf.mxu0
  %v1550 = vpop.f32.mrf.mxu0
  %v1551 = vadd.f32 %v1497, %v1550
  %v1552 = vpop.f32.mrf.mxu0
  %1553 = vdwg.mxu0
  %v1554 = vadd.f32 %v47, %v1548
  %v1555 = vadd.f32 %v48, %v1551
  %v1556 = vsel %vm470, %v1554, 0.0
  %1557 = vadd.xlane.f32.xlu0 %v1556
  %v1558 = vpop.xlane.xlu0 %1557
  %v1559 = vsel %vm470, %v1555, 0.0
  %1560 = vadd.xlane.f32.xlu0 %v1559
  %v1561 = vpop.xlane.xlu0 %1560
  %v1562 = vmul.f32 %v1558, %v905
  %v1563 = vmul.f32 %v1561, %v905
  %v1564 = vsub.f32 %v1554, %v1562
  %v1565 = vsub.f32 %v1555, %v1563
  %v1566 = vmul.f32 %v1564, %v1564
  %v1567 = vmul.f32 %v1565, %v1565
  %v1568 = vsel %vm470, %v1566, 0.0
  %1569 = vadd.xlane.f32.xlu0 %v1568
  %v1570 = vpop.xlane.xlu0 %1569
  %v1571 = vsel %vm470, %v1567, 0.0
  %1572 = vadd.xlane.f32.xlu0 %v1571
  %v1573 = vpop.xlane.xlu0 %1572
  %v1574 = vmul.f32 %v1570, %v905
  %v1575 = vmul.f32 %v1573, %v905
  %v1576 = vadd.f32 %v1574, 1e-05
  %v1577 = vadd.f32 %v1575, 1e-05
  %v1578 = vrsqrt.pop %v1576
  %v1579 = vrsqrt.pop %v1577
  %v1580 = vmul.f32 %v1564, %v1578
  %v1581 = vmul.f32 %v1565, %v1579
  %v1582 = vlaneseq
  %v1583 = vshrl.u32 %v1582, 7
  %v1584 = vsub.s32 2, %v1583
  %v1585 = vrot.slane %v141, %v1584
  %v1586 = vmul.f32 %v1580, %v1585
  %v1587 = vmul.f32 %v1581, %v1585
  %v1588 = vlaneseq
  %v1589 = vshrl.u32 %v1588, 7
  %v1590 = vsub.s32 3, %v1589
  %v1591 = vrot.slane %v141, %v1590
  %v1592 = vadd.f32 %v1586, %v1591
  %v1593 = vadd.f32 %v1587, %v1591
  %v1594 = vadd.f32 %v1592, %v51
  %v1595 = vadd.f32 %v1593, %v52
  %v1596 = vpack.c.bf16 %v1595, %v1594
  %v1597 = vlaneseq
  %v1598 = vshrl.u32 %v1597, 7
  %v1599 = vsub.s32 4, %v1598
  %v1600 = vrot.slane %v139, %v1599
  %v1605 = vunpack.c.l.b16 %v67
  %v1606 = vunpack.c.l.b16 %v68
  %v1607 = vunpack.c.l.b16 %v69
  %v1608 = vunpack.c.l.b16 %v70
  %v1609 = vpack.c.b16 %v1606, %v1605
  %v1610 = vpack.c.b16 %v1608, %v1607
  %v1614 = vsel %vm470, %v1596, 0
  %1616 = vmatprep.subr.bf16.mxu0 0
  %1617 = vmatpush1.bf16.msra.mxu0 0
  %1618 = vmatprep.subr.bf16.mxu0 0
  %1619 = vmatpush1.bf16.msra.mxu0 0
  %1620 = vmatprep.subr.bf16.mxu0 0
  %1621 = vmatpush1.bf16.msra.mxu0 0
  %1622 = vmatprep.subr.bf16.mxu0 0
  %1623 = vmatpush1.bf16.msra.mxu0 0
  %1624 = vmatprep.subr.bf16.mxu0 0
  %1625 = vmatpush1.bf16.msra.mxu0 0
  %1626 = vmatprep.subr.bf16.mxu0 0
  %1627 = vmatpush1.bf16.msra.mxu0 0
  %1628 = vmatprep.subr.bf16.mxu0 0
  %1629 = vmatpush1.bf16.msra.mxu0 %v1610
  %1630 = vmatprep.subr.bf16.mxu0 0
  %1631 = vmatpush1.bf16.msra.mxu0 %v1609
  %1632 = vmatprep.subr.bf16.mxu0 0
  %1633 = vmatpush2.bf16.msra.mxu0 0
  %1634 = vmatprep.subr.bf16.mxu0 0
  %1635 = vmatpush2.bf16.msra.mxu0 0
  %1636 = vmatprep.subr.bf16.mxu0 0
  %1637 = vmatpush2.bf16.msra.mxu0 0
  %1638 = vmatprep.subr.bf16.mxu0 0
  %1639 = vmatpush2.bf16.msra.mxu0 0
  %1640 = vmatprep.subr.bf16.mxu0 0
  %1641 = vmatpush2.bf16.msra.mxu0 0
  %1642 = vmatprep.subr.bf16.mxu0 0
  %1643 = vmatpush2.bf16.msra.mxu0 0
  %1644 = vmatprep.subr.bf16.mxu0 0
  %1645 = vmatpush2.bf16.msra.mxu0 0
  %1646 = vmatprep.subr.bf16.mxu0 0
  %1647 = vmatpush2.bf16.msra.mxu0 0
  %1648 = vmatprep.mubr.bf16.mxu0 0
  %1649 = vmatmul.mubr.bf16.gmra.mxu0 %v1614
  %v1650 = vpop.f32.mrf.mxu0
  %v1651 = vadd.f32 %v1600, %v1650
  %v1652 = vpop.f32.mrf.mxu0
  %v1653 = vpop.f32.mrf.mxu0
  %v1654 = vadd.f32 %v1600, %v1653
  %v1655 = vpop.f32.mrf.mxu0
  %1656 = vdwg.mxu0
  %v1657 = vmul.f32 %v1651, 0.35355338
  %v1658 = vmul.f32 %v1654, 0.35355338
  %v1659 = vpack.c.bf16 %v1115, %v1114
  %1660 = vrot.lane.b32.xlu0 %v1609, 96
  %v1661 = vpop.permute.xlu0 %1660
  %1662 = vrot.lane.b32.xlu0 %v1610, 96
  %v1663 = vpop.permute.xlu0 %1662
  %1667 = vrot.lane.b32.xlu0 %v1600, 96
  %v1668 = vpop.permute.xlu0 %1667
  %v1671 = vsel %vm470, %v1659, 0
  %1673 = vmatprep.subr.bf16.mxu0 0
  %1674 = vmatpush1.bf16.msra.mxu0 0
  %1675 = vmatprep.subr.bf16.mxu0 0
  %1676 = vmatpush1.bf16.msra.mxu0 0
  %1677 = vmatprep.subr.bf16.mxu0 0
  %1678 = vmatpush1.bf16.msra.mxu0 0
  %1679 = vmatprep.subr.bf16.mxu0 0
  %1680 = vmatpush1.bf16.msra.mxu0 0
  %1681 = vmatprep.subr.bf16.mxu0 0
  %1682 = vmatpush1.bf16.msra.mxu0 0
  %1683 = vmatprep.subr.bf16.mxu0 0
  %1684 = vmatpush1.bf16.msra.mxu0 0
  %1685 = vmatprep.subr.bf16.mxu0 0
  %1686 = vmatpush1.bf16.msra.mxu0 %v1663
  %1687 = vmatprep.subr.bf16.mxu0 0
  %1688 = vmatpush1.bf16.msra.mxu0 %v1661
  %1689 = vmatprep.subr.bf16.mxu0 0
  %1690 = vmatpush2.bf16.msra.mxu0 0
  %1691 = vmatprep.subr.bf16.mxu0 0
  %1692 = vmatpush2.bf16.msra.mxu0 0
  %1693 = vmatprep.subr.bf16.mxu0 0
  %1694 = vmatpush2.bf16.msra.mxu0 0
  %1695 = vmatprep.subr.bf16.mxu0 0
  %1696 = vmatpush2.bf16.msra.mxu0 0
  %1697 = vmatprep.subr.bf16.mxu0 0
  %1698 = vmatpush2.bf16.msra.mxu0 0
  %1699 = vmatprep.subr.bf16.mxu0 0
  %1700 = vmatpush2.bf16.msra.mxu0 0
  %1701 = vmatprep.subr.bf16.mxu0 0
  %1702 = vmatpush2.bf16.msra.mxu0 0
  %1703 = vmatprep.subr.bf16.mxu0 0
  %1704 = vmatpush2.bf16.msra.mxu0 0
  %1705 = vmatprep.mubr.bf16.mxu0 0
  %1706 = vmatmul.mubr.bf16.gmra.mxu0 %v1671
  %v1707 = vpop.f32.mrf.mxu0
  %v1708 = vadd.f32 %v1668, %v1707
  %v1709 = vpop.f32.mrf.mxu0
  %v1710 = vpop.f32.mrf.mxu0
  %v1711 = vadd.f32 %v1668, %v1710
  %v1712 = vpop.f32.mrf.mxu0
  %1713 = vdwg.mxu0
  %v1714 = vpack.c.bf16 %v1113, %v1112
  %1715 = vrot.lane.b32.xlu0 %v1609, 64
  %v1716 = vpop.permute.xlu0 %1715
  %1717 = vrot.lane.b32.xlu0 %v1610, 64
  %v1718 = vpop.permute.xlu0 %1717
  %1721 = vrot.lane.b32.xlu0 %v1600, 64
  %v1722 = vpop.permute.xlu0 %1721
  %v1725 = vsel %vm470, %v1714, 0
  %1727 = vmatprep.subr.bf16.mxu0 0
  %1728 = vmatpush1.bf16.msra.mxu0 0
  %1729 = vmatprep.subr.bf16.mxu0 0
  %1730 = vmatpush1.bf16.msra.mxu0 0
  %1731 = vmatprep.subr.bf16.mxu0 0
  %1732 = vmatpush1.bf16.msra.mxu0 0
  %1733 = vmatprep.subr.bf16.mxu0 0
  %1734 = vmatpush1.bf16.msra.mxu0 0
  %1735 = vmatprep.subr.bf16.mxu0 0
  %1736 = vmatpush1.bf16.msra.mxu0 0
  %1737 = vmatprep.subr.bf16.mxu0 0
  %1738 = vmatpush1.bf16.msra.mxu0 0
  %1739 = vmatprep.subr.bf16.mxu0 0
  %1740 = vmatpush1.bf16.msra.mxu0 %v1718
  %1741 = vmatprep.subr.bf16.mxu0 0
  %1742 = vmatpush1.bf16.msra.mxu0 %v1716
  %1743 = vmatprep.subr.bf16.mxu0 0
  %1744 = vmatpush2.bf16.msra.mxu0 0
  %1745 = vmatprep.subr.bf16.mxu0 0
  %1746 = vmatpush2.bf16.msra.mxu0 0
  %1747 = vmatprep.subr.bf16.mxu0 0
  %1748 = vmatpush2.bf16.msra.mxu0 0
  %1749 = vmatprep.subr.bf16.mxu0 0
  %1750 = vmatpush2.bf16.msra.mxu0 0
  %1751 = vmatprep.subr.bf16.mxu0 0
  %1752 = vmatpush2.bf16.msra.mxu0 0
  %1753 = vmatprep.subr.bf16.mxu0 0
  %1754 = vmatpush2.bf16.msra.mxu0 0
  %1755 = vmatprep.subr.bf16.mxu0 0
  %1756 = vmatpush2.bf16.msra.mxu0 0
  %1757 = vmatprep.subr.bf16.mxu0 0
  %1758 = vmatpush2.bf16.msra.mxu0 0
  %1759 = vmatprep.mubr.bf16.mxu0 0
  %1760 = vmatmul.mubr.bf16.gmra.mxu0 %v1725
  %v1761 = vpop.f32.mrf.mxu0
  %v1762 = vadd.f32 %v1722, %v1761
  %v1763 = vpop.f32.mrf.mxu0
  %v1764 = vpop.f32.mrf.mxu0
  %v1765 = vadd.f32 %v1722, %v1764
  %v1766 = vpop.f32.mrf.mxu0
  %1767 = vdwg.mxu0
  %1768 = vxpose.xlu0.b32.start [1/16] %v1708, 128
  %1769 = vxpose.xlu0.b32.cont [2/16] %v1711, 128
  %1770 = vxpose.xlu0.b32.cont [3/16] 0.0, 128
  %1771 = vxpose.xlu0.b32.cont [4/16] 0.0, 128
  %1772 = vxpose.xlu0.b32.cont [5/16] 0.0, 128
  %1773 = vxpose.xlu0.b32.cont [6/16] 0.0, 128
  %1774 = vxpose.xlu0.b32.cont [7/16] 0.0, 128
  %1775 = vxpose.xlu0.b32.cont [8/16] 0.0, 128
  %1776 = vxpose.xlu0.b32.cont [9/16] 0.0, 128
  %1777 = vxpose.xlu0.b32.cont [10/16] 0.0, 128
  %1778 = vxpose.xlu0.b32.cont [11/16] 0.0, 128
  %1779 = vxpose.xlu0.b32.cont [12/16] 0.0, 128
  %1780 = vxpose.xlu0.b32.cont [13/16] 0.0, 128
  %1781 = vxpose.xlu0.b32.cont [14/16] 0.0, 128
  %1782 = vxpose.xlu0.b32.cont [15/16] 0.0, 128
  %1783 = vxpose.xlu0.b32.end [16/16] 0.0, 128
  %v1784 = vpop.trf.xlu0
  %v1785 = vpop.trf.xlu0
  %v1786 = vpop.trf.xlu0
  %v1787 = vpop.trf.xlu0
  %v1788 = vpop.trf.xlu0
  %v1789 = vpop.trf.xlu0
  %v1790 = vpop.trf.xlu0
  %v1791 = vpop.trf.xlu0
  %v1792 = vpop.trf.xlu0
  %v1793 = vpop.trf.xlu0
  %v1794 = vpop.trf.xlu0
  %v1795 = vpop.trf.xlu0
  %v1796 = vpop.trf.xlu0
  %v1797 = vpop.trf.xlu0
  %v1798 = vpop.trf.xlu0
  %v1799 = vpop.trf.xlu0
  %1804 = vrot.lane.b32.xlu0 %v1784, 16
  %v1805 = vpop.permute.xlu0 %1804
  %1806 = vrot.lane.b32.xlu0 %v1785, 16
  %v1807 = vpop.permute.xlu0 %1806
  %1808 = vrot.lane.b32.xlu0 %v1786, 16
  %v1809 = vpop.permute.xlu0 %1808
  %1810 = vrot.lane.b32.xlu0 %v1787, 16
  %v1811 = vpop.permute.xlu0 %1810
  %1816 = vrot.lane.b32.xlu0 %v1784, 32
  %v1817 = vpop.permute.xlu0 %1816
  %1818 = vrot.lane.b32.xlu0 %v1785, 32
  %v1819 = vpop.permute.xlu0 %1818
  %1820 = vrot.lane.b32.xlu0 %v1786, 32
  %v1821 = vpop.permute.xlu0 %1820
  %1822 = vrot.lane.b32.xlu0 %v1787, 32
  %v1823 = vpop.permute.xlu0 %1822
  %1828 = vrot.lane.b32.xlu0 %v1784, 48
  %v1829 = vpop.permute.xlu0 %1828
  %1830 = vrot.lane.b32.xlu0 %v1785, 48
  %v1831 = vpop.permute.xlu0 %1830
  %1832 = vrot.lane.b32.xlu0 %v1786, 48
  %v1833 = vpop.permute.xlu0 %1832
  %1834 = vrot.lane.b32.xlu0 %v1787, 48
  %v1835 = vpop.permute.xlu0 %1834
  %v1840 = vsel %vm652, %v1784, %v1805
  %v1841 = vsel %vm652, %v1785, %v1807
  %v1842 = vsel %vm652, %v1786, %v1809
  %v1843 = vsel %vm652, %v1787, %v1811
  %v1844 = vsel %vm470, %v1840, %v1817
  %v1845 = vsel %vm470, %v1841, %v1819
  %v1846 = vsel %vm470, %v1842, %v1821
  %v1847 = vsel %vm470, %v1843, %v1823
  %v1848 = vsel %vm661, %v1844, %v1829
  %v1849 = vsel %vm661, %v1845, %v1831
  %v1850 = vsel %vm661, %v1846, %v1833
  %v1851 = vsel %vm661, %v1847, %v1835
  %v1852 = vmul.f32 %v1848, %v257
  %v1853 = vmul.f32 %v1849, %v258
  %v1854 = vmul.f32 %v1850, %v259
  %v1855 = vmul.f32 %v1851, %v260
  %v1856 = vpack.c.bf16 %v1658, %v1657
  %v1857 = vpack.c.bf16 %v1853, %v1852
  %v1858 = vpack.c.bf16 %v1855, %v1854
  %v1860 = vsel %vm470, %v1856, 0
  %1862 = vmatprep.subr.bf16.mxu0 0
  %1863 = vmatpush1.bf16.msra.mxu0 0
  %1864 = vmatprep.subr.bf16.mxu0 0
  %1865 = vmatpush1.bf16.msra.mxu0 0
  %1866 = vmatprep.subr.bf16.mxu0 0
  %1867 = vmatpush1.bf16.msra.mxu0 0
  %1868 = vmatprep.subr.bf16.mxu0 0
  %1869 = vmatpush1.bf16.msra.mxu0 0
  %1870 = vmatprep.subr.bf16.mxu0 0
  %1871 = vmatpush1.bf16.msra.mxu0 0
  %1872 = vmatprep.subr.bf16.mxu0 0
  %1873 = vmatpush1.bf16.msra.mxu0 0
  %1874 = vmatprep.subr.bf16.mxu0 0
  %1875 = vmatpush1.bf16.msra.mxu0 %v1858
  %1876 = vmatprep.subr.bf16.mxu0 0
  %1877 = vmatpush1.bf16.msra.mxu0 %v1857
  %1878 = vmatprep.subr.bf16.mxu0 0
  %1879 = vmatpush2.bf16.msra.mxu0 0
  %1880 = vmatprep.subr.bf16.mxu0 0
  %1881 = vmatpush2.bf16.msra.mxu0 0
  %1882 = vmatprep.subr.bf16.mxu0 0
  %1883 = vmatpush2.bf16.msra.mxu0 0
  %1884 = vmatprep.subr.bf16.mxu0 0
  %1885 = vmatpush2.bf16.msra.mxu0 0
  %1886 = vmatprep.subr.bf16.mxu0 0
  %1887 = vmatpush2.bf16.msra.mxu0 0
  %1888 = vmatprep.subr.bf16.mxu0 0
  %1889 = vmatpush2.bf16.msra.mxu0 0
  %1890 = vmatprep.subr.bf16.mxu0 0
  %1891 = vmatpush2.bf16.msra.mxu0 0
  %1892 = vmatprep.subr.bf16.mxu0 0
  %1893 = vmatpush2.bf16.msra.mxu0 0
  %1894 = vmatprep.mubr.bf16.mxu0 0
  %1895 = vmatmul.mubr.bf16.gmra.mxu0 %v1860
  %v1896 = vpop.f32.mrf.mxu0
  %v1897 = vadd.f32 %v57, %v1896
  %v1898 = vpop.f32.mrf.mxu0
  %v1899 = vpop.f32.mrf.mxu0
  %v1900 = vadd.f32 %v58, %v1899
  %v1901 = vpop.f32.mrf.mxu0
  %1902 = vdwg.mxu0
  %v1903 = vsel %vm717, %v1897, -inf
  %1904 = vmax.xlane.f32.xlu0 %v1903
  %v1905 = vpop.xlane.xlu0 %1904
  %v1906 = vsel %vm717, %v1900, -inf
  %1907 = vmax.xlane.f32.xlu0 %v1906
  %v1908 = vpop.xlane.xlu0 %1907
  %v1909 = vsub.f32 %v1897, %v1905
  %v1910 = vsub.f32 %v1900, %v1908
  %v1911 = vmul.f32 %v1909, 1.442695
  %v1912 = vpow.pop %v1911
  %v1913 = vmul.f32 %v1910, 1.442695
  %v1914 = vpow.pop %v1913
  %v1915 = vmul.f32 %v1762, %v445
  %v1916 = vmul.f32 %v1765, %v446
  %v1917 = vmul.f32 %v1762, %v447
  %v1918 = vmul.f32 %v1765, %v448
  %v1919 = vmul.f32 %v1762, %v449
  %v1920 = vmul.f32 %v1765, %v450
  %v1921 = vmul.f32 %v1762, %v451
  %v1922 = vmul.f32 %v1765, %v452
  %v1923 = vpack.c.bf16 %v1914, %v1912
  %v1924 = vpack.c.bf16 %v1916, %v1915
  %v1925 = vpack.c.bf16 %v1918, %v1917
  %v1926 = vpack.c.bf16 %v1920, %v1919
  %v1927 = vpack.c.bf16 %v1922, %v1921
  %v1929 = vsel %vm717, %v1923, 0
  %1931 = vmatprep.subr.bf16.mxu0 0
  %1932 = vmatpush1.bf16.msra.mxu0 0
  %1933 = vmatprep.subr.bf16.mxu0 0
  %1934 = vmatpush1.bf16.msra.mxu0 0
  %1935 = vmatprep.subr.bf16.mxu0 0
  %1936 = vmatpush1.bf16.msra.mxu0 0
  %1937 = vmatprep.subr.bf16.mxu0 0
  %1938 = vmatpush1.bf16.msra.mxu0 0
  %1939 = vmatprep.subr.bf16.mxu0 0
  %1940 = vmatpush1.bf16.msra.mxu0 %v1927
  %1941 = vmatprep.subr.bf16.mxu0 0
  %1942 = vmatpush1.bf16.msra.mxu0 %v1926
  %1943 = vmatprep.subr.bf16.mxu0 0
  %1944 = vmatpush1.bf16.msra.mxu0 %v1925
  %1945 = vmatprep.subr.bf16.mxu0 0
  %1946 = vmatpush1.bf16.msra.mxu0 %v1924
  %1947 = vmatprep.subr.bf16.mxu0 0
  %1948 = vmatpush2.bf16.msra.mxu0 0
  %1949 = vmatprep.subr.bf16.mxu0 0
  %1950 = vmatpush2.bf16.msra.mxu0 0
  %1951 = vmatprep.subr.bf16.mxu0 0
  %1952 = vmatpush2.bf16.msra.mxu0 0
  %1953 = vmatprep.subr.bf16.mxu0 0
  %1954 = vmatpush2.bf16.msra.mxu0 0
  %1955 = vmatprep.subr.bf16.mxu0 0
  %1956 = vmatpush2.bf16.msra.mxu0 0
  %1957 = vmatprep.subr.bf16.mxu0 0
  %1958 = vmatpush2.bf16.msra.mxu0 0
  %1959 = vmatprep.subr.bf16.mxu0 0
  %1960 = vmatpush2.bf16.msra.mxu0 0
  %1961 = vmatprep.subr.bf16.mxu0 0
  %1962 = vmatpush2.bf16.msra.mxu0 0
  %1963 = vmatprep.mubr.bf16.mxu0 0
  %1964 = vmatmul.mubr.bf16.gmra.mxu0 %v1929
  %v1965 = vpop.f32.mrf.mxu0
  %v1966 = vadd.f32 0.0, %v1965
  %v1967 = vpop.f32.mrf.mxu0
  %v1968 = vpop.f32.mrf.mxu0
  %v1969 = vadd.f32 0.0, %v1968
  %v1970 = vpop.f32.mrf.mxu0
  %1971 = vdwg.mxu0
  %1972 = vmatprep.subr.bf16.mxu0 0
  %1973 = vmatpush1.bf16.msra.mxu0 0
  %1974 = vmatprep.subr.bf16.mxu0 0
  %1975 = vmatpush1.bf16.msra.mxu0 0
  %1976 = vmatprep.subr.bf16.mxu0 0
  %1977 = vmatpush1.bf16.msra.mxu0 0
  %1978 = vmatprep.subr.bf16.mxu0 0
  %1979 = vmatpush1.bf16.msra.mxu0 0
  %1980 = vmatprep.subr.bf16.mxu0 0
  %1981 = vmatpush1.bf16.msra.mxu0 %v790
  %1982 = vmatprep.subr.bf16.mxu0 0
  %1983 = vmatpush1.bf16.msra.mxu0 %v789
  %1984 = vmatprep.subr.bf16.mxu0 0
  %1985 = vmatpush1.bf16.msra.mxu0 %v788
  %1986 = vmatprep.subr.bf16.mxu0 0
  %1987 = vmatpush1.bf16.msra.mxu0 %v787
  %1988 = vmatprep.subr.bf16.mxu0 0
  %1989 = vmatpush2.bf16.msra.mxu0 0
  %1990 = vmatprep.subr.bf16.mxu0 0
  %1991 = vmatpush2.bf16.msra.mxu0 0
  %1992 = vmatprep.subr.bf16.mxu0 0
  %1993 = vmatpush2.bf16.msra.mxu0 0
  %1994 = vmatprep.subr.bf16.mxu0 0
  %1995 = vmatpush2.bf16.msra.mxu0 0
  %1996 = vmatprep.subr.bf16.mxu0 0
  %1997 = vmatpush2.bf16.msra.mxu0 0
  %1998 = vmatprep.subr.bf16.mxu0 0
  %1999 = vmatpush2.bf16.msra.mxu0 0
  %2000 = vmatprep.subr.bf16.mxu0 0
  %2001 = vmatpush2.bf16.msra.mxu0 0
  %2002 = vmatprep.subr.bf16.mxu0 0
  %2003 = vmatpush2.bf16.msra.mxu0 0
  %2004 = vmatprep.mubr.bf16.mxu0 0
  %2005 = vmatmul.mubr.bf16.gmra.mxu0 %v1929
  %v2006 = vpop.f32.mrf.mxu0
  %v2007 = vadd.f32 0.0, %v2006
  %v2008 = vpop.f32.mrf.mxu0
  %v2009 = vpop.f32.mrf.mxu0
  %v2010 = vadd.f32 0.0, %v2009
  %v2011 = vpop.f32.mrf.mxu0
  %2012 = vdwg.mxu0
  %v2013 = vrcp.pop %v2007
  %v2014 = vrcp.pop %v2010
  %v2015 = vmul.f32 %v1966, %v2013
  %v2016 = vmul.f32 %v1969, %v2014
  %v2017 = vpack.c.bf16 %v2016, %v2015
  %v2018 = vlaneseq
  %v2019 = vshrl.u32 %v2018, 7
  %v2020 = vsub.s32 5, %v2019
  %v2021 = vrot.slane %v139, %v2020
  %v2026 = vunpack.c.l.b16 %v87
  %v2027 = vunpack.c.l.b16 %v88
  %v2028 = vunpack.c.l.b16 %v89
  %v2029 = vunpack.c.l.b16 %v90
  %v2030 = vpack.c.b16 %v2027, %v2026
  %v2031 = vpack.c.b16 %v2029, %v2028
  %v2035 = vsel %vm470, %v2017, 0
  %2037 = vmatprep.subr.bf16.mxu0 0
  %2038 = vmatpush1.bf16.msra.mxu0 0
  %2039 = vmatprep.subr.bf16.mxu0 0
  %2040 = vmatpush1.bf16.msra.mxu0 0
  %2041 = vmatprep.subr.bf16.mxu0 0
  %2042 = vmatpush1.bf16.msra.mxu0 0
  %2043 = vmatprep.subr.bf16.mxu0 0
  %2044 = vmatpush1.bf16.msra.mxu0 0
  %2045 = vmatprep.subr.bf16.mxu0 0
  %2046 = vmatpush1.bf16.msra.mxu0 0
  %2047 = vmatprep.subr.bf16.mxu0 0
  %2048 = vmatpush1.bf16.msra.mxu0 0
  %2049 = vmatprep.subr.bf16.mxu0 0
  %2050 = vmatpush1.bf16.msra.mxu0 %v2031
  %2051 = vmatprep.subr.bf16.mxu0 0
  %2052 = vmatpush1.bf16.msra.mxu0 %v2030
  %2053 = vmatprep.subr.bf16.mxu0 0
  %2054 = vmatpush2.bf16.msra.mxu0 0
  %2055 = vmatprep.subr.bf16.mxu0 0
  %2056 = vmatpush2.bf16.msra.mxu0 0
  %2057 = vmatprep.subr.bf16.mxu0 0
  %2058 = vmatpush2.bf16.msra.mxu0 0
  %2059 = vmatprep.subr.bf16.mxu0 0
  %2060 = vmatpush2.bf16.msra.mxu0 0
  %2061 = vmatprep.subr.bf16.mxu0 0
  %2062 = vmatpush2.bf16.msra.mxu0 0
  %2063 = vmatprep.subr.bf16.mxu0 0
  %2064 = vmatpush2.bf16.msra.mxu0 0
  %2065 = vmatprep.subr.bf16.mxu0 0
  %2066 = vmatpush2.bf16.msra.mxu0 0
  %2067 = vmatprep.subr.bf16.mxu0 0
  %2068 = vmatpush2.bf16.msra.mxu0 0
  %2069 = vmatprep.mubr.bf16.mxu0 0
  %2070 = vmatmul.mubr.bf16.gmra.mxu0 %v2035
  %v2071 = vpop.f32.mrf.mxu0
  %v2072 = vadd.f32 %v2021, %v2071
  %v2073 = vpop.f32.mrf.mxu0
  %v2074 = vpop.f32.mrf.mxu0
  %v2075 = vadd.f32 %v2021, %v2074
  %v2076 = vpop.f32.mrf.mxu0
  %2077 = vdwg.mxu0
  %v2078 = vadd.f32 %v1592, %v2072
  %v2079 = vadd.f32 %v1593, %v2075
  %v2080 = vsel %vm470, %v2078, 0.0
  %2081 = vadd.xlane.f32.xlu0 %v2080
  %v2082 = vpop.xlane.xlu0 %2081
  %v2083 = vsel %vm470, %v2079, 0.0
  %2084 = vadd.xlane.f32.xlu0 %v2083
  %v2085 = vpop.xlane.xlu0 %2084
  %v2086 = vmul.f32 %v2082, %v905
  %v2087 = vmul.f32 %v2085, %v905
  %v2088 = vsub.f32 %v2078, %v2086
  %v2089 = vsub.f32 %v2079, %v2087
  %v2090 = vmul.f32 %v2088, %v2088
  %v2091 = vmul.f32 %v2089, %v2089
  %v2092 = vsel %vm470, %v2090, 0.0
  %2093 = vadd.xlane.f32.xlu0 %v2092
  %v2094 = vpop.xlane.xlu0 %2093
  %v2095 = vsel %vm470, %v2091, 0.0
  %2096 = vadd.xlane.f32.xlu0 %v2095
  %v2097 = vpop.xlane.xlu0 %2096
  %v2098 = vmul.f32 %v2094, %v905
  %v2099 = vmul.f32 %v2097, %v905
  %v2100 = vadd.f32 %v2098, 1e-05
  %v2101 = vadd.f32 %v2099, 1e-05
  %v2102 = vrsqrt.pop %v2100
  %v2103 = vrsqrt.pop %v2101
  %v2104 = vmul.f32 %v2088, %v2102
  %v2105 = vmul.f32 %v2089, %v2103
  %v2106 = vlaneseq
  %v2107 = vshrl.u32 %v2106, 7
  %v2108 = vsub.s32 4, %v2107
  %v2109 = vrot.slane %v141, %v2108
  %v2110 = vmul.f32 %v2104, %v2109
  %v2111 = vmul.f32 %v2105, %v2109
  %v2112 = vlaneseq
  %v2113 = vshrl.u32 %v2112, 7
  %v2114 = vsub.s32 5, %v2113
  %v2115 = vrot.slane %v141, %v2114
  %v2116 = vadd.f32 %v2110, %v2115
  %v2117 = vadd.f32 %v2111, %v2115
  %v2118 = vpack.c.bf16 %v2117, %v2116
  %v2119 = vlaneseq
  %v2120 = vshrl.u32 %v2119, 7
  %v2121 = vsub.s32 0, %v2120
  %v2122 = vrot.slane %v141, %v2121
  %v2127 = vunpack.c.l.b16 %v103
  %v2128 = vunpack.c.l.b16 %v104
  %v2129 = vunpack.c.l.b16 %v105
  %v2130 = vunpack.c.l.b16 %v106
  %v2131 = vpack.c.b16 %v2128, %v2127
  %v2132 = vpack.c.b16 %v2130, %v2129
  %v2136 = vsel %vm470, %v2118, 0
  %2138 = vmatprep.subr.bf16.mxu0 0
  %2139 = vmatpush1.bf16.msra.mxu0 0
  %2140 = vmatprep.subr.bf16.mxu0 0
  %2141 = vmatpush1.bf16.msra.mxu0 0
  %2142 = vmatprep.subr.bf16.mxu0 0
  %2143 = vmatpush1.bf16.msra.mxu0 0
  %2144 = vmatprep.subr.bf16.mxu0 0
  %2145 = vmatpush1.bf16.msra.mxu0 0
  %2146 = vmatprep.subr.bf16.mxu0 0
  %2147 = vmatpush1.bf16.msra.mxu0 0
  %2148 = vmatprep.subr.bf16.mxu0 0
  %2149 = vmatpush1.bf16.msra.mxu0 0
  %2150 = vmatprep.subr.bf16.mxu0 0
  %2151 = vmatpush1.bf16.msra.mxu0 %v2132
  %2152 = vmatprep.subr.bf16.mxu0 0
  %2153 = vmatpush1.bf16.msra.mxu0 %v2131
  %2154 = vmatprep.subr.bf16.mxu0 0
  %2155 = vmatpush2.bf16.msra.mxu0 0
  %2156 = vmatprep.subr.bf16.mxu0 0
  %2157 = vmatpush2.bf16.msra.mxu0 0
  %2158 = vmatprep.subr.bf16.mxu0 0
  %2159 = vmatpush2.bf16.msra.mxu0 0
  %2160 = vmatprep.subr.bf16.mxu0 0
  %2161 = vmatpush2.bf16.msra.mxu0 0
  %2162 = vmatprep.subr.bf16.mxu0 0
  %2163 = vmatpush2.bf16.msra.mxu0 0
  %2164 = vmatprep.subr.bf16.mxu0 0
  %2165 = vmatpush2.bf16.msra.mxu0 0
  %2166 = vmatprep.subr.bf16.mxu0 0
  %2167 = vmatpush2.bf16.msra.mxu0 0
  %2168 = vmatprep.subr.bf16.mxu0 0
  %2169 = vmatpush2.bf16.msra.mxu0 0
  %2170 = vmatprep.mubr.bf16.mxu0 0
  %2171 = vmatmul.mubr.bf16.gmra.mxu0 %v2136
  %v2172 = vpop.f32.mrf.mxu0
  %v2173 = vadd.f32 %v2122, %v2172
  %v2174 = vpop.f32.mrf.mxu0
  %v2175 = vpop.f32.mrf.mxu0
  %v2176 = vadd.f32 %v2122, %v2175
  %v2177 = vpop.f32.mrf.mxu0
  %2178 = vdwg.mxu0
  %v2179 = vmax.f32 %v2173, 0.0
  %v2180 = vmax.f32 %v2176, 0.0
  %v2181 = vpack.c.bf16 %v2180, %v2179
  %v2182 = vlaneseq
  %v2183 = vshrl.u32 %v2182, 7
  %v2184 = vsub.s32 1, %v2183
  %v2185 = vrot.slane %v141, %v2184
  %v2194 = vunpack.c.l.b16 %v119
  %v2195 = vunpack.c.l.b16 %v120
  %v2196 = vunpack.c.l.b16 %v121
  %v2197 = vunpack.c.l.b16 %v122
  %v2198 = vunpack.c.l.b16 %v123
  %v2199 = vunpack.c.l.b16 %v124
  %v2200 = vunpack.c.l.b16 %v125
  %v2201 = vunpack.c.l.b16 %v126
  %v2202 = vpack.c.b16 %v2195, %v2194
  %v2203 = vpack.c.b16 %v2197, %v2196
  %v2204 = vpack.c.b16 %v2199, %v2198
  %v2205 = vpack.c.b16 %v2201, %v2200
  %v2211 = vsel %vm717, %v2181, 0
  %2213 = vmatprep.subr.bf16.mxu0 0
  %2214 = vmatpush1.bf16.msra.mxu0 0
  %2215 = vmatprep.subr.bf16.mxu0 0
  %2216 = vmatpush1.bf16.msra.mxu0 0
  %2217 = vmatprep.subr.bf16.mxu0 0
  %2218 = vmatpush1.bf16.msra.mxu0 0
  %2219 = vmatprep.subr.bf16.mxu0 0
  %2220 = vmatpush1.bf16.msra.mxu0 0
  %2221 = vmatprep.subr.bf16.mxu0 0
  %2222 = vmatpush1.bf16.msra.mxu0 %v2205
  %2223 = vmatprep.subr.bf16.mxu0 0
  %2224 = vmatpush1.bf16.msra.mxu0 %v2204
  %2225 = vmatprep.subr.bf16.mxu0 0
  %2226 = vmatpush1.bf16.msra.mxu0 %v2203
  %2227 = vmatprep.subr.bf16.mxu0 0
  %2228 = vmatpush1.bf16.msra.mxu0 %v2202
  %2229 = vmatprep.subr.bf16.mxu0 0
  %2230 = vmatpush2.bf16.msra.mxu0 0
  %2231 = vmatprep.subr.bf16.mxu0 0
  %2232 = vmatpush2.bf16.msra.mxu0 0
  %2233 = vmatprep.subr.bf16.mxu0 0
  %2234 = vmatpush2.bf16.msra.mxu0 0
  %2235 = vmatprep.subr.bf16.mxu0 0
  %2236 = vmatpush2.bf16.msra.mxu0 0
  %2237 = vmatprep.subr.bf16.mxu0 0
  %2238 = vmatpush2.bf16.msra.mxu0 0
  %2239 = vmatprep.subr.bf16.mxu0 0
  %2240 = vmatpush2.bf16.msra.mxu0 0
  %2241 = vmatprep.subr.bf16.mxu0 0
  %2242 = vmatpush2.bf16.msra.mxu0 0
  %2243 = vmatprep.subr.bf16.mxu0 0
  %2244 = vmatpush2.bf16.msra.mxu0 0
  %2245 = vmatprep.mubr.bf16.mxu0 0
  %2246 = vmatmul.mubr.bf16.gmra.mxu0 %v2211
  %v2247 = vpop.f32.mrf.mxu0
  %v2248 = vadd.f32 %v2185, %v2247
  %v2249 = vpop.f32.mrf.mxu0
  %v2250 = vpop.f32.mrf.mxu0
  %v2251 = vadd.f32 %v2185, %v2250
  %v2252 = vpop.f32.mrf.mxu0
  %2253 = vdwg.mxu0
  %v2254 = vadd.f32 %v2116, %v2248
  %v2255 = vadd.f32 %v2117, %v2251
  %v2256 = vsel %vm470, %v2254, 0.0
  %2257 = vadd.xlane.f32.xlu0 %v2256
  %v2258 = vpop.xlane.xlu0 %2257
  %v2259 = vsel %vm470, %v2255, 0.0
  %2260 = vadd.xlane.f32.xlu0 %v2259
  %v2261 = vpop.xlane.xlu0 %2260
  %v2262 = vmul.f32 %v2258, %v905
  %v2263 = vmul.f32 %v2261, %v905
  %v2264 = vsub.f32 %v2254, %v2262
  %v2265 = vsub.f32 %v2255, %v2263
  %v2266 = vmul.f32 %v2264, %v2264
  %v2267 = vmul.f32 %v2265, %v2265
  %v2268 = vsel %vm470, %v2266, 0.0
  %2269 = vadd.xlane.f32.xlu0 %v2268
  %v2270 = vpop.xlane.xlu0 %2269
  %v2271 = vsel %vm470, %v2267, 0.0
  %2272 = vadd.xlane.f32.xlu0 %v2271
  %v2273 = vpop.xlane.xlu0 %2272
  %v2274 = vmul.f32 %v2270, %v905
  %v2275 = vmul.f32 %v2273, %v905
  %v2276 = vadd.f32 %v2274, 1e-05
  %v2277 = vadd.f32 %v2275, 1e-05
  %v2278 = vrsqrt.pop %v2276
  %v2279 = vrsqrt.pop %v2277
  %v2280 = vmul.f32 %v2264, %v2278
  %v2281 = vmul.f32 %v2265, %v2279
  %v2282 = vlaneseq
  %v2283 = vshrl.u32 %v2282, 7
  %v2284 = vsub.s32 6, %v2283
  %v2285 = vrot.slane %v141, %v2284
  %v2286 = vmul.f32 %v2280, %v2285
  %v2287 = vmul.f32 %v2281, %v2285
  %v2288 = vlaneseq
  %v2289 = vshrl.u32 %v2288, 7
  %v2290 = vsub.s32 7, %v2289
  %v2291 = vrot.slane %v141, %v2290
  %v2292 = vadd.f32 %v2286, %v2291
  %v2293 = vadd.f32 %v2287, %v2291
  %v2294 = vadd.f32 %v2292, %v51
  %v2295 = vadd.f32 %v2293, %v52
  %v2296 = vpack.c.bf16 %v2295, %v2294
  %v2297 = vlaneseq
  %v2298 = vshrl.u32 %v2297, 7
  %v2299 = vsub.s32 6, %v2298
  %v2300 = vrot.slane %v139, %v2299
  %v2305 = vunpack.c.l.b16 %v71
  %v2306 = vunpack.c.l.b16 %v72
  %v2307 = vunpack.c.l.b16 %v73
  %v2308 = vunpack.c.l.b16 %v74
  %v2309 = vpack.c.b16 %v2306, %v2305
  %v2310 = vpack.c.b16 %v2308, %v2307
  %v2314 = vsel %vm470, %v2296, 0
  %2316 = vmatprep.subr.bf16.mxu0 0
  %2317 = vmatpush1.bf16.msra.mxu0 0
  %2318 = vmatprep.subr.bf16.mxu0 0
  %2319 = vmatpush1.bf16.msra.mxu0 0
  %2320 = vmatprep.subr.bf16.mxu0 0
  %2321 = vmatpush1.bf16.msra.mxu0 0
  %2322 = vmatprep.subr.bf16.mxu0 0
  %2323 = vmatpush1.bf16.msra.mxu0 0
  %2324 = vmatprep.subr.bf16.mxu0 0
  %2325 = vmatpush1.bf16.msra.mxu0 0
  %2326 = vmatprep.subr.bf16.mxu0 0
  %2327 = vmatpush1.bf16.msra.mxu0 0
  %2328 = vmatprep.subr.bf16.mxu0 0
  %2329 = vmatpush1.bf16.msra.mxu0 %v2310
  %2330 = vmatprep.subr.bf16.mxu0 0
  %2331 = vmatpush1.bf16.msra.mxu0 %v2309
  %2332 = vmatprep.subr.bf16.mxu0 0
  %2333 = vmatpush2.bf16.msra.mxu0 0
  %2334 = vmatprep.subr.bf16.mxu0 0
  %2335 = vmatpush2.bf16.msra.mxu0 0
  %2336 = vmatprep.subr.bf16.mxu0 0
  %2337 = vmatpush2.bf16.msra.mxu0 0
  %2338 = vmatprep.subr.bf16.mxu0 0
  %2339 = vmatpush2.bf16.msra.mxu0 0
  %2340 = vmatprep.subr.bf16.mxu0 0
  %2341 = vmatpush2.bf16.msra.mxu0 0
  %2342 = vmatprep.subr.bf16.mxu0 0
  %2343 = vmatpush2.bf16.msra.mxu0 0
  %2344 = vmatprep.subr.bf16.mxu0 0
  %2345 = vmatpush2.bf16.msra.mxu0 0
  %2346 = vmatprep.subr.bf16.mxu0 0
  %2347 = vmatpush2.bf16.msra.mxu0 0
  %2348 = vmatprep.mubr.bf16.mxu0 0
  %2349 = vmatmul.mubr.bf16.gmra.mxu0 %v2314
  %v2350 = vpop.f32.mrf.mxu0
  %v2351 = vadd.f32 %v2300, %v2350
  %v2352 = vpop.f32.mrf.mxu0
  %v2353 = vpop.f32.mrf.mxu0
  %v2354 = vadd.f32 %v2300, %v2353
  %v2355 = vpop.f32.mrf.mxu0
  %2356 = vdwg.mxu0
  %v2357 = vmul.f32 %v2351, 0.35355338
  %v2358 = vmul.f32 %v2354, 0.35355338
  %v2359 = vpack.c.bf16 %v2293, %v2292
  %2360 = vrot.lane.b32.xlu0 %v2309, 64
  %v2361 = vpop.permute.xlu0 %2360
  %2362 = vrot.lane.b32.xlu0 %v2310, 64
  %v2363 = vpop.permute.xlu0 %2362
  %2367 = vrot.lane.b32.xlu0 %v2300, 64
  %v2368 = vpop.permute.xlu0 %2367
  %v2371 = vsel %vm470, %v2359, 0
  %2373 = vmatprep.subr.bf16.mxu0 0
  %2374 = vmatpush1.bf16.msra.mxu0 0
  %2375 = vmatprep.subr.bf16.mxu0 0
  %2376 = vmatpush1.bf16.msra.mxu0 0
  %2377 = vmatprep.subr.bf16.mxu0 0
  %2378 = vmatpush1.bf16.msra.mxu0 0
  %2379 = vmatprep.subr.bf16.mxu0 0
  %2380 = vmatpush1.bf16.msra.mxu0 0
  %2381 = vmatprep.subr.bf16.mxu0 0
  %2382 = vmatpush1.bf16.msra.mxu0 0
  %2383 = vmatprep.subr.bf16.mxu0 0
  %2384 = vmatpush1.bf16.msra.mxu0 0
  %2385 = vmatprep.subr.bf16.mxu0 0
  %2386 = vmatpush1.bf16.msra.mxu0 %v2363
  %2387 = vmatprep.subr.bf16.mxu0 0
  %2388 = vmatpush1.bf16.msra.mxu0 %v2361
  %2389 = vmatprep.subr.bf16.mxu0 0
  %2390 = vmatpush2.bf16.msra.mxu0 0
  %2391 = vmatprep.subr.bf16.mxu0 0
  %2392 = vmatpush2.bf16.msra.mxu0 0
  %2393 = vmatprep.subr.bf16.mxu0 0
  %2394 = vmatpush2.bf16.msra.mxu0 0
  %2395 = vmatprep.subr.bf16.mxu0 0
  %2396 = vmatpush2.bf16.msra.mxu0 0
  %2397 = vmatprep.subr.bf16.mxu0 0
  %2398 = vmatpush2.bf16.msra.mxu0 0
  %2399 = vmatprep.subr.bf16.mxu0 0
  %2400 = vmatpush2.bf16.msra.mxu0 0
  %2401 = vmatprep.subr.bf16.mxu0 0
  %2402 = vmatpush2.bf16.msra.mxu0 0
  %2403 = vmatprep.subr.bf16.mxu0 0
  %2404 = vmatpush2.bf16.msra.mxu0 0
  %2405 = vmatprep.mubr.bf16.mxu0 0
  %2406 = vmatmul.mubr.bf16.gmra.mxu0 %v2371
  %v2407 = vpop.f32.mrf.mxu0
  %v2408 = vadd.f32 %v2368, %v2407
  %v2409 = vpop.f32.mrf.mxu0
  %v2410 = vpop.f32.mrf.mxu0
  %v2411 = vadd.f32 %v2368, %v2410
  %v2412 = vpop.f32.mrf.mxu0
  %2413 = vdwg.mxu0
  %2416 = vrot.lane.b32.xlu0 %v2351, 96
  %v2417 = vpop.permute.xlu0 %2416
  %2418 = vrot.lane.b32.xlu0 %v2354, 96
  %v2419 = vpop.permute.xlu0 %2418
  %2422 = vxpose.xlu0.b32.start [1/16] %v2417, 128
  %2423 = vxpose.xlu0.b32.cont [2/16] %v2419, 128
  %2424 = vxpose.xlu0.b32.cont [3/16] 0.0, 128
  %2425 = vxpose.xlu0.b32.cont [4/16] 0.0, 128
  %2426 = vxpose.xlu0.b32.cont [5/16] 0.0, 128
  %2427 = vxpose.xlu0.b32.cont [6/16] 0.0, 128
  %2428 = vxpose.xlu0.b32.cont [7/16] 0.0, 128
  %2429 = vxpose.xlu0.b32.cont [8/16] 0.0, 128
  %2430 = vxpose.xlu0.b32.cont [9/16] 0.0, 128
  %2431 = vxpose.xlu0.b32.cont [10/16] 0.0, 128
  %2432 = vxpose.xlu0.b32.cont [11/16] 0.0, 128
  %2433 = vxpose.xlu0.b32.cont [12/16] 0.0, 128
  %2434 = vxpose.xlu0.b32.cont [13/16] 0.0, 128
  %2435 = vxpose.xlu0.b32.cont [14/16] 0.0, 128
  %2436 = vxpose.xlu0.b32.cont [15/16] 0.0, 128
  %2437 = vxpose.xlu0.b32.end [16/16] 0.0, 128
  %v2438 = vpop.trf.xlu0
  %v2439 = vpop.trf.xlu0
  %v2440 = vpop.trf.xlu0
  %v2441 = vpop.trf.xlu0
  %v2442 = vpop.trf.xlu0
  %v2443 = vpop.trf.xlu0
  %v2444 = vpop.trf.xlu0
  %v2445 = vpop.trf.xlu0
  %v2446 = vpop.trf.xlu0
  %v2447 = vpop.trf.xlu0
  %v2448 = vpop.trf.xlu0
  %v2449 = vpop.trf.xlu0
  %v2450 = vpop.trf.xlu0
  %v2451 = vpop.trf.xlu0
  %v2452 = vpop.trf.xlu0
  %v2453 = vpop.trf.xlu0
  %2458 = vrot.lane.b32.xlu0 %v2438, 16
  %v2459 = vpop.permute.xlu0 %2458
  %2460 = vrot.lane.b32.xlu0 %v2439, 16
  %v2461 = vpop.permute.xlu0 %2460
  %2462 = vrot.lane.b32.xlu0 %v2440, 16
  %v2463 = vpop.permute.xlu0 %2462
  %2464 = vrot.lane.b32.xlu0 %v2441, 16
  %v2465 = vpop.permute.xlu0 %2464
  %2470 = vrot.lane.b32.xlu0 %v2438, 32
  %v2471 = vpop.permute.xlu0 %2470
  %2472 = vrot.lane.b32.xlu0 %v2439, 32
  %v2473 = vpop.permute.xlu0 %2472
  %2474 = vrot.lane.b32.xlu0 %v2440, 32
  %v2475 = vpop.permute.xlu0 %2474
  %2476 = vrot.lane.b32.xlu0 %v2441, 32
  %v2477 = vpop.permute.xlu0 %2476
  %2482 = vrot.lane.b32.xlu0 %v2438, 48
  %v2483 = vpop.permute.xlu0 %2482
  %2484 = vrot.lane.b32.xlu0 %v2439, 48
  %v2485 = vpop.permute.xlu0 %2484
  %2486 = vrot.lane.b32.xlu0 %v2440, 48
  %v2487 = vpop.permute.xlu0 %2486
  %2488 = vrot.lane.b32.xlu0 %v2441, 48
  %v2489 = vpop.permute.xlu0 %2488
  %v2494 = vsel %vm652, %v2438, %v2459
  %v2495 = vsel %vm652, %v2439, %v2461
  %v2496 = vsel %vm652, %v2440, %v2463
  %v2497 = vsel %vm652, %v2441, %v2465
  %v2498 = vsel %vm470, %v2494, %v2471
  %v2499 = vsel %vm470, %v2495, %v2473
  %v2500 = vsel %vm470, %v2496, %v2475
  %v2501 = vsel %vm470, %v2497, %v2477
  %v2502 = vsel %vm661, %v2498, %v2483
  %v2503 = vsel %vm661, %v2499, %v2485
  %v2504 = vsel %vm661, %v2500, %v2487
  %v2505 = vsel %vm661, %v2501, %v2489
  %v2506 = vmul.f32 %v2502, %v257
  %v2507 = vmul.f32 %v2503, %v258
  %v2508 = vmul.f32 %v2504, %v259
  %v2509 = vmul.f32 %v2505, %v260
  %v2510 = vpack.c.bf16 %v2358, %v2357
  %v2511 = vpack.c.bf16 %v2507, %v2506
  %v2512 = vpack.c.bf16 %v2509, %v2508
  %v2514 = vsel %vm470, %v2510, 0
  %2516 = vmatprep.subr.bf16.mxu0 0
  %2517 = vmatpush1.bf16.msra.mxu0 0
  %2518 = vmatprep.subr.bf16.mxu0 0
  %2519 = vmatpush1.bf16.msra.mxu0 0
  %2520 = vmatprep.subr.bf16.mxu0 0
  %2521 = vmatpush1.bf16.msra.mxu0 0
  %2522 = vmatprep.subr.bf16.mxu0 0
  %2523 = vmatpush1.bf16.msra.mxu0 0
  %2524 = vmatprep.subr.bf16.mxu0 0
  %2525 = vmatpush1.bf16.msra.mxu0 0
  %2526 = vmatprep.subr.bf16.mxu0 0
  %2527 = vmatpush1.bf16.msra.mxu0 0
  %2528 = vmatprep.subr.bf16.mxu0 0
  %2529 = vmatpush1.bf16.msra.mxu0 %v2512
  %2530 = vmatprep.subr.bf16.mxu0 0
  %2531 = vmatpush1.bf16.msra.mxu0 %v2511
  %2532 = vmatprep.subr.bf16.mxu0 0
  %2533 = vmatpush2.bf16.msra.mxu0 0
  %2534 = vmatprep.subr.bf16.mxu0 0
  %2535 = vmatpush2.bf16.msra.mxu0 0
  %2536 = vmatprep.subr.bf16.mxu0 0
  %2537 = vmatpush2.bf16.msra.mxu0 0
  %2538 = vmatprep.subr.bf16.mxu0 0
  %2539 = vmatpush2.bf16.msra.mxu0 0
  %2540 = vmatprep.subr.bf16.mxu0 0
  %2541 = vmatpush2.bf16.msra.mxu0 0
  %2542 = vmatprep.subr.bf16.mxu0 0
  %2543 = vmatpush2.bf16.msra.mxu0 0
  %2544 = vmatprep.subr.bf16.mxu0 0
  %2545 = vmatpush2.bf16.msra.mxu0 0
  %2546 = vmatprep.subr.bf16.mxu0 0
  %2547 = vmatpush2.bf16.msra.mxu0 0
  %2548 = vmatprep.mubr.bf16.mxu0 0
  %2549 = vmatmul.mubr.bf16.gmra.mxu0 %v2514
  %v2550 = vpop.f32.mrf.mxu0
  %v2551 = vadd.f32 %v55, %v2550
  %v2552 = vpop.f32.mrf.mxu0
  %v2553 = vpop.f32.mrf.mxu0
  %v2554 = vadd.f32 %v56, %v2553
  %v2555 = vpop.f32.mrf.mxu0
  %2556 = vdwg.mxu0
  %v2557 = vsel %vm717, %v2551, -inf
  %2558 = vmax.xlane.f32.xlu0 %v2557
  %v2559 = vpop.xlane.xlu0 %2558
  %v2560 = vsel %vm717, %v2554, -inf
  %2561 = vmax.xlane.f32.xlu0 %v2560
  %v2562 = vpop.xlane.xlu0 %2561
  %v2563 = vsub.f32 %v2551, %v2559
  %v2564 = vsub.f32 %v2554, %v2562
  %v2565 = vmul.f32 %v2563, 1.442695
  %v2566 = vpow.pop %v2565
  %v2567 = vmul.f32 %v2564, 1.442695
  %v2568 = vpow.pop %v2567
  %v2569 = vmul.f32 %v2408, %v445
  %v2570 = vmul.f32 %v2411, %v446
  %v2571 = vmul.f32 %v2408, %v447
  %v2572 = vmul.f32 %v2411, %v448
  %v2573 = vmul.f32 %v2408, %v449
  %v2574 = vmul.f32 %v2411, %v450
  %v2575 = vmul.f32 %v2408, %v451
  %v2576 = vmul.f32 %v2411, %v452
  %v2577 = vpack.c.bf16 %v2568, %v2566
  %v2578 = vpack.c.bf16 %v2570, %v2569
  %v2579 = vpack.c.bf16 %v2572, %v2571
  %v2580 = vpack.c.bf16 %v2574, %v2573
  %v2581 = vpack.c.bf16 %v2576, %v2575
  %v2583 = vsel %vm717, %v2577, 0
  %2585 = vmatprep.subr.bf16.mxu0 0
  %2586 = vmatpush1.bf16.msra.mxu0 0
  %2587 = vmatprep.subr.bf16.mxu0 0
  %2588 = vmatpush1.bf16.msra.mxu0 0
  %2589 = vmatprep.subr.bf16.mxu0 0
  %2590 = vmatpush1.bf16.msra.mxu0 0
  %2591 = vmatprep.subr.bf16.mxu0 0
  %2592 = vmatpush1.bf16.msra.mxu0 0
  %2593 = vmatprep.subr.bf16.mxu0 0
  %2594 = vmatpush1.bf16.msra.mxu0 %v2581
  %2595 = vmatprep.subr.bf16.mxu0 0
  %2596 = vmatpush1.bf16.msra.mxu0 %v2580
  %2597 = vmatprep.subr.bf16.mxu0 0
  %2598 = vmatpush1.bf16.msra.mxu0 %v2579
  %2599 = vmatprep.subr.bf16.mxu0 0
  %2600 = vmatpush1.bf16.msra.mxu0 %v2578
  %2601 = vmatprep.subr.bf16.mxu0 0
  %2602 = vmatpush2.bf16.msra.mxu0 0
  %2603 = vmatprep.subr.bf16.mxu0 0
  %2604 = vmatpush2.bf16.msra.mxu0 0
  %2605 = vmatprep.subr.bf16.mxu0 0
  %2606 = vmatpush2.bf16.msra.mxu0 0
  %2607 = vmatprep.subr.bf16.mxu0 0
  %2608 = vmatpush2.bf16.msra.mxu0 0
  %2609 = vmatprep.subr.bf16.mxu0 0
  %2610 = vmatpush2.bf16.msra.mxu0 0
  %2611 = vmatprep.subr.bf16.mxu0 0
  %2612 = vmatpush2.bf16.msra.mxu0 0
  %2613 = vmatprep.subr.bf16.mxu0 0
  %2614 = vmatpush2.bf16.msra.mxu0 0
  %2615 = vmatprep.subr.bf16.mxu0 0
  %2616 = vmatpush2.bf16.msra.mxu0 0
  %2617 = vmatprep.mubr.bf16.mxu0 0
  %2618 = vmatmul.mubr.bf16.gmra.mxu0 %v2583
  %v2619 = vpop.f32.mrf.mxu0
  %v2620 = vadd.f32 0.0, %v2619
  %v2621 = vpop.f32.mrf.mxu0
  %v2622 = vpop.f32.mrf.mxu0
  %v2623 = vadd.f32 0.0, %v2622
  %v2624 = vpop.f32.mrf.mxu0
  %2625 = vdwg.mxu0
  %2626 = vmatprep.subr.bf16.mxu0 0
  %2627 = vmatpush1.bf16.msra.mxu0 0
  %2628 = vmatprep.subr.bf16.mxu0 0
  %2629 = vmatpush1.bf16.msra.mxu0 0
  %2630 = vmatprep.subr.bf16.mxu0 0
  %2631 = vmatpush1.bf16.msra.mxu0 0
  %2632 = vmatprep.subr.bf16.mxu0 0
  %2633 = vmatpush1.bf16.msra.mxu0 0
  %2634 = vmatprep.subr.bf16.mxu0 0
  %2635 = vmatpush1.bf16.msra.mxu0 %v790
  %2636 = vmatprep.subr.bf16.mxu0 0
  %2637 = vmatpush1.bf16.msra.mxu0 %v789
  %2638 = vmatprep.subr.bf16.mxu0 0
  %2639 = vmatpush1.bf16.msra.mxu0 %v788
  %2640 = vmatprep.subr.bf16.mxu0 0
  %2641 = vmatpush1.bf16.msra.mxu0 %v787
  %2642 = vmatprep.subr.bf16.mxu0 0
  %2643 = vmatpush2.bf16.msra.mxu0 0
  %2644 = vmatprep.subr.bf16.mxu0 0
  %2645 = vmatpush2.bf16.msra.mxu0 0
  %2646 = vmatprep.subr.bf16.mxu0 0
  %2647 = vmatpush2.bf16.msra.mxu0 0
  %2648 = vmatprep.subr.bf16.mxu0 0
  %2649 = vmatpush2.bf16.msra.mxu0 0
  %2650 = vmatprep.subr.bf16.mxu0 0
  %2651 = vmatpush2.bf16.msra.mxu0 0
  %2652 = vmatprep.subr.bf16.mxu0 0
  %2653 = vmatpush2.bf16.msra.mxu0 0
  %2654 = vmatprep.subr.bf16.mxu0 0
  %2655 = vmatpush2.bf16.msra.mxu0 0
  %2656 = vmatprep.subr.bf16.mxu0 0
  %2657 = vmatpush2.bf16.msra.mxu0 0
  %2658 = vmatprep.mubr.bf16.mxu0 0
  %2659 = vmatmul.mubr.bf16.gmra.mxu0 %v2583
  %v2660 = vpop.f32.mrf.mxu0
  %v2661 = vadd.f32 0.0, %v2660
  %v2662 = vpop.f32.mrf.mxu0
  %v2663 = vpop.f32.mrf.mxu0
  %v2664 = vadd.f32 0.0, %v2663
  %v2665 = vpop.f32.mrf.mxu0
  %2666 = vdwg.mxu0
  %v2667 = vrcp.pop %v2661
  %v2668 = vrcp.pop %v2664
  %v2669 = vmul.f32 %v2620, %v2667
  %v2670 = vmul.f32 %v2623, %v2668
  %v2671 = vpack.c.bf16 %v2670, %v2669
  %v2672 = vlaneseq
  %v2673 = vshrl.u32 %v2672, 7
  %v2674 = vsub.s32 7, %v2673
  %v2675 = vrot.slane %v139, %v2674
  %v2680 = vunpack.c.l.b16 %v91
  %v2681 = vunpack.c.l.b16 %v92
  %v2682 = vunpack.c.l.b16 %v93
  %v2683 = vunpack.c.l.b16 %v94
  %v2684 = vpack.c.b16 %v2681, %v2680
  %v2685 = vpack.c.b16 %v2683, %v2682
  %v2689 = vsel %vm470, %v2671, 0
  %2691 = vmatprep.subr.bf16.mxu0 0
  %2692 = vmatpush1.bf16.msra.mxu0 0
  %2693 = vmatprep.subr.bf16.mxu0 0
  %2694 = vmatpush1.bf16.msra.mxu0 0
  %2695 = vmatprep.subr.bf16.mxu0 0
  %2696 = vmatpush1.bf16.msra.mxu0 0
  %2697 = vmatprep.subr.bf16.mxu0 0
  %2698 = vmatpush1.bf16.msra.mxu0 0
  %2699 = vmatprep.subr.bf16.mxu0 0
  %2700 = vmatpush1.bf16.msra.mxu0 0
  %2701 = vmatprep.subr.bf16.mxu0 0
  %2702 = vmatpush1.bf16.msra.mxu0 0
  %2703 = vmatprep.subr.bf16.mxu0 0
  %2704 = vmatpush1.bf16.msra.mxu0 %v2685
  %2705 = vmatprep.subr.bf16.mxu0 0
  %2706 = vmatpush1.bf16.msra.mxu0 %v2684
  %2707 = vmatprep.subr.bf16.mxu0 0
  %2708 = vmatpush2.bf16.msra.mxu0 0
  %2709 = vmatprep.subr.bf16.mxu0 0
  %2710 = vmatpush2.bf16.msra.mxu0 0
  %2711 = vmatprep.subr.bf16.mxu0 0
  %2712 = vmatpush2.bf16.msra.mxu0 0
  %2713 = vmatprep.subr.bf16.mxu0 0
  %2714 = vmatpush2.bf16.msra.mxu0 0
  %2715 = vmatprep.subr.bf16.mxu0 0
  %2716 = vmatpush2.bf16.msra.mxu0 0
  %2717 = vmatprep.subr.bf16.mxu0 0
  %2718 = vmatpush2.bf16.msra.mxu0 0
  %2719 = vmatprep.subr.bf16.mxu0 0
  %2720 = vmatpush2.bf16.msra.mxu0 0
  %2721 = vmatprep.subr.bf16.mxu0 0
  %2722 = vmatpush2.bf16.msra.mxu0 0
  %2723 = vmatprep.mubr.bf16.mxu0 0
  %2724 = vmatmul.mubr.bf16.gmra.mxu0 %v2689
  %v2725 = vpop.f32.mrf.mxu0
  %v2726 = vadd.f32 %v2675, %v2725
  %v2727 = vpop.f32.mrf.mxu0
  %v2728 = vpop.f32.mrf.mxu0
  %v2729 = vadd.f32 %v2675, %v2728
  %v2730 = vpop.f32.mrf.mxu0
  %2731 = vdwg.mxu0
  %v2732 = vadd.f32 %v2292, %v2726
  %v2733 = vadd.f32 %v2293, %v2729
  %v2734 = vsel %vm470, %v2732, 0.0
  %2735 = vadd.xlane.f32.xlu0 %v2734
  %v2736 = vpop.xlane.xlu0 %2735
  %v2737 = vsel %vm470, %v2733, 0.0
  %2738 = vadd.xlane.f32.xlu0 %v2737
  %v2739 = vpop.xlane.xlu0 %2738
  %v2740 = vmul.f32 %v2736, %v905
  %v2741 = vmul.f32 %v2739, %v905
  %v2742 = vsub.f32 %v2732, %v2740
  %v2743 = vsub.f32 %v2733, %v2741
  %v2744 = vmul.f32 %v2742, %v2742
  %v2745 = vmul.f32 %v2743, %v2743
  %v2746 = vsel %vm470, %v2744, 0.0
  %2747 = vadd.xlane.f32.xlu0 %v2746
  %v2748 = vpop.xlane.xlu0 %2747
  %v2749 = vsel %vm470, %v2745, 0.0
  %2750 = vadd.xlane.f32.xlu0 %v2749
  %v2751 = vpop.xlane.xlu0 %2750
  %v2752 = vmul.f32 %v2748, %v905
  %v2753 = vmul.f32 %v2751, %v905
  %v2754 = vadd.f32 %v2752, 1e-05
  %v2755 = vadd.f32 %v2753, 1e-05
  %v2756 = vrsqrt.pop %v2754
  %v2757 = vrsqrt.pop %v2755
  %v2758 = vmul.f32 %v2742, %v2756
  %v2759 = vmul.f32 %v2743, %v2757
  %v2760 = vlaneseq
  %v2761 = vshrl.u32 %v2760, 7
  %v2762 = vsub.s32 2, %v2761
  %v2763 = vrot.slane %v142, %v2762
  %v2764 = vmul.f32 %v2758, %v2763
  %v2765 = vmul.f32 %v2759, %v2763
  %v2766 = vlaneseq
  %v2767 = vshrl.u32 %v2766, 7
  %v2768 = vsub.s32 3, %v2767
  %v2769 = vrot.slane %v142, %v2768
  %v2770 = vadd.f32 %v2764, %v2769
  %v2771 = vadd.f32 %v2765, %v2769
  %v2772 = vadd.f32 %v2770, %v51
  %v2773 = vadd.f32 %v2771, %v52
  %v2774 = vpack.c.bf16 %v2773, %v2772
  %v2775 = vlaneseq
  %v2776 = vshrl.u32 %v2775, 7
  %v2777 = vsub.s32 0, %v2776
  %v2778 = vrot.slane %v140, %v2777
  %v2783 = vunpack.c.l.b16 %v75
  %v2784 = vunpack.c.l.b16 %v76
  %v2785 = vunpack.c.l.b16 %v77
  %v2786 = vunpack.c.l.b16 %v78
  %v2787 = vpack.c.b16 %v2784, %v2783
  %v2788 = vpack.c.b16 %v2786, %v2785
  %v2792 = vsel %vm470, %v2774, 0
  %2794 = vmatprep.subr.bf16.mxu0 0
  %2795 = vmatpush1.bf16.msra.mxu0 0
  %2796 = vmatprep.subr.bf16.mxu0 0
  %2797 = vmatpush1.bf16.msra.mxu0 0
  %2798 = vmatprep.subr.bf16.mxu0 0
  %2799 = vmatpush1.bf16.msra.mxu0 0
  %2800 = vmatprep.subr.bf16.mxu0 0
  %2801 = vmatpush1.bf16.msra.mxu0 0
  %2802 = vmatprep.subr.bf16.mxu0 0
  %2803 = vmatpush1.bf16.msra.mxu0 0
  %2804 = vmatprep.subr.bf16.mxu0 0
  %2805 = vmatpush1.bf16.msra.mxu0 0
  %2806 = vmatprep.subr.bf16.mxu0 0
  %2807 = vmatpush1.bf16.msra.mxu0 %v2788
  %2808 = vmatprep.subr.bf16.mxu0 0
  %2809 = vmatpush1.bf16.msra.mxu0 %v2787
  %2810 = vmatprep.subr.bf16.mxu0 0
  %2811 = vmatpush2.bf16.msra.mxu0 0
  %2812 = vmatprep.subr.bf16.mxu0 0
  %2813 = vmatpush2.bf16.msra.mxu0 0
  %2814 = vmatprep.subr.bf16.mxu0 0
  %2815 = vmatpush2.bf16.msra.mxu0 0
  %2816 = vmatprep.subr.bf16.mxu0 0
  %2817 = vmatpush2.bf16.msra.mxu0 0
  %2818 = vmatprep.subr.bf16.mxu0 0
  %2819 = vmatpush2.bf16.msra.mxu0 0
  %2820 = vmatprep.subr.bf16.mxu0 0
  %2821 = vmatpush2.bf16.msra.mxu0 0
  %2822 = vmatprep.subr.bf16.mxu0 0
  %2823 = vmatpush2.bf16.msra.mxu0 0
  %2824 = vmatprep.subr.bf16.mxu0 0
  %2825 = vmatpush2.bf16.msra.mxu0 0
  %2826 = vmatprep.mubr.bf16.mxu0 0
  %2827 = vmatmul.mubr.bf16.gmra.mxu0 %v2792
  %v2828 = vpop.f32.mrf.mxu0
  %v2829 = vadd.f32 %v2778, %v2828
  %v2830 = vpop.f32.mrf.mxu0
  %v2831 = vpop.f32.mrf.mxu0
  %v2832 = vadd.f32 %v2778, %v2831
  %v2833 = vpop.f32.mrf.mxu0
  %2834 = vdwg.mxu0
  %v2835 = vmul.f32 %v2829, 0.35355338
  %v2836 = vmul.f32 %v2832, 0.35355338
  %2837 = vrot.lane.b32.xlu0 %v2787, 96
  %v2838 = vpop.permute.xlu0 %2837
  %2839 = vrot.lane.b32.xlu0 %v2788, 96
  %v2840 = vpop.permute.xlu0 %2839
  %2844 = vrot.lane.b32.xlu0 %v2778, 96
  %v2845 = vpop.permute.xlu0 %2844
  %2847 = vmatprep.subr.bf16.mxu0 0
  %2848 = vmatpush1.bf16.msra.mxu0 0
  %2849 = vmatprep.subr.bf16.mxu0 0
  %2850 = vmatpush1.bf16.msra.mxu0 0
  %2851 = vmatprep.subr.bf16.mxu0 0
  %2852 = vmatpush1.bf16.msra.mxu0 0
  %2853 = vmatprep.subr.bf16.mxu0 0
  %2854 = vmatpush1.bf16.msra.mxu0 0
  %2855 = vmatprep.subr.bf16.mxu0 0
  %2856 = vmatpush1.bf16.msra.mxu0 0
  %2857 = vmatprep.subr.bf16.mxu0 0
  %2858 = vmatpush1.bf16.msra.mxu0 0
  %2859 = vmatprep.subr.bf16.mxu0 0
  %2860 = vmatpush1.bf16.msra.mxu0 %v2840
  %2861 = vmatprep.subr.bf16.mxu0 0
  %2862 = vmatpush1.bf16.msra.mxu0 %v2838
  %2863 = vmatprep.subr.bf16.mxu0 0
  %2864 = vmatpush2.bf16.msra.mxu0 0
  %2865 = vmatprep.subr.bf16.mxu0 0
  %2866 = vmatpush2.bf16.msra.mxu0 0
  %2867 = vmatprep.subr.bf16.mxu0 0
  %2868 = vmatpush2.bf16.msra.mxu0 0
  %2869 = vmatprep.subr.bf16.mxu0 0
  %2870 = vmatpush2.bf16.msra.mxu0 0
  %2871 = vmatprep.subr.bf16.mxu0 0
  %2872 = vmatpush2.bf16.msra.mxu0 0
  %2873 = vmatprep.subr.bf16.mxu0 0
  %2874 = vmatpush2.bf16.msra.mxu0 0
  %2875 = vmatprep.subr.bf16.mxu0 0
  %2876 = vmatpush2.bf16.msra.mxu0 0
  %2877 = vmatprep.subr.bf16.mxu0 0
  %2878 = vmatpush2.bf16.msra.mxu0 0
  %2879 = vmatprep.mubr.bf16.mxu0 0
  %2880 = vmatmul.mubr.bf16.gmra.mxu0 %v1671
  %v2881 = vpop.f32.mrf.mxu0
  %v2882 = vadd.f32 %v2845, %v2881
  %v2883 = vpop.f32.mrf.mxu0
  %v2884 = vpop.f32.mrf.mxu0
  %v2885 = vadd.f32 %v2845, %v2884
  %v2886 = vpop.f32.mrf.mxu0
  %2887 = vdwg.mxu0
  %2888 = vrot.lane.b32.xlu0 %v2787, 64
  %v2889 = vpop.permute.xlu0 %2888
  %2890 = vrot.lane.b32.xlu0 %v2788, 64
  %v2891 = vpop.permute.xlu0 %2890
  %2894 = vrot.lane.b32.xlu0 %v2778, 64
  %v2895 = vpop.permute.xlu0 %2894
  %2897 = vmatprep.subr.bf16.mxu0 0
  %2898 = vmatpush1.bf16.msra.mxu0 0
  %2899 = vmatprep.subr.bf16.mxu0 0
  %2900 = vmatpush1.bf16.msra.mxu0 0
  %2901 = vmatprep.subr.bf16.mxu0 0
  %2902 = vmatpush1.bf16.msra.mxu0 0
  %2903 = vmatprep.subr.bf16.mxu0 0
  %2904 = vmatpush1.bf16.msra.mxu0 0
  %2905 = vmatprep.subr.bf16.mxu0 0
  %2906 = vmatpush1.bf16.msra.mxu0 0
  %2907 = vmatprep.subr.bf16.mxu0 0
  %2908 = vmatpush1.bf16.msra.mxu0 0
  %2909 = vmatprep.subr.bf16.mxu0 0
  %2910 = vmatpush1.bf16.msra.mxu0 %v2891
  %2911 = vmatprep.subr.bf16.mxu0 0
  %2912 = vmatpush1.bf16.msra.mxu0 %v2889
  %2913 = vmatprep.subr.bf16.mxu0 0
  %2914 = vmatpush2.bf16.msra.mxu0 0
  %2915 = vmatprep.subr.bf16.mxu0 0
  %2916 = vmatpush2.bf16.msra.mxu0 0
  %2917 = vmatprep.subr.bf16.mxu0 0
  %2918 = vmatpush2.bf16.msra.mxu0 0
  %2919 = vmatprep.subr.bf16.mxu0 0
  %2920 = vmatpush2.bf16.msra.mxu0 0
  %2921 = vmatprep.subr.bf16.mxu0 0
  %2922 = vmatpush2.bf16.msra.mxu0 0
  %2923 = vmatprep.subr.bf16.mxu0 0
  %2924 = vmatpush2.bf16.msra.mxu0 0
  %2925 = vmatprep.subr.bf16.mxu0 0
  %2926 = vmatpush2.bf16.msra.mxu0 0
  %2927 = vmatprep.subr.bf16.mxu0 0
  %2928 = vmatpush2.bf16.msra.mxu0 0
  %2929 = vmatprep.mubr.bf16.mxu0 0
  %2930 = vmatmul.mubr.bf16.gmra.mxu0 %v1725
  %v2931 = vpop.f32.mrf.mxu0
  %v2932 = vadd.f32 %v2895, %v2931
  %v2933 = vpop.f32.mrf.mxu0
  %v2934 = vpop.f32.mrf.mxu0
  %v2935 = vadd.f32 %v2895, %v2934
  %v2936 = vpop.f32.mrf.mxu0
  %2937 = vdwg.mxu0
  %2938 = vxpose.xlu0.b32.start [1/16] %v2882, 128
  %2939 = vxpose.xlu0.b32.cont [2/16] %v2885, 128
  %2940 = vxpose.xlu0.b32.cont [3/16] 0.0, 128
  %2941 = vxpose.xlu0.b32.cont [4/16] 0.0, 128
  %2942 = vxpose.xlu0.b32.cont [5/16] 0.0, 128
  %2943 = vxpose.xlu0.b32.cont [6/16] 0.0, 128
  %2944 = vxpose.xlu0.b32.cont [7/16] 0.0, 128
  %2945 = vxpose.xlu0.b32.cont [8/16] 0.0, 128
  %2946 = vxpose.xlu0.b32.cont [9/16] 0.0, 128
  %2947 = vxpose.xlu0.b32.cont [10/16] 0.0, 128
  %2948 = vxpose.xlu0.b32.cont [11/16] 0.0, 128
  %2949 = vxpose.xlu0.b32.cont [12/16] 0.0, 128
  %2950 = vxpose.xlu0.b32.cont [13/16] 0.0, 128
  %2951 = vxpose.xlu0.b32.cont [14/16] 0.0, 128
  %2952 = vxpose.xlu0.b32.cont [15/16] 0.0, 128
  %2953 = vxpose.xlu0.b32.end [16/16] 0.0, 128
  %v2954 = vpop.trf.xlu0
  %v2955 = vpop.trf.xlu0
  %v2956 = vpop.trf.xlu0
  %v2957 = vpop.trf.xlu0
  %v2958 = vpop.trf.xlu0
  %v2959 = vpop.trf.xlu0
  %v2960 = vpop.trf.xlu0
  %v2961 = vpop.trf.xlu0
  %v2962 = vpop.trf.xlu0
  %v2963 = vpop.trf.xlu0
  %v2964 = vpop.trf.xlu0
  %v2965 = vpop.trf.xlu0
  %v2966 = vpop.trf.xlu0
  %v2967 = vpop.trf.xlu0
  %v2968 = vpop.trf.xlu0
  %v2969 = vpop.trf.xlu0
  %2974 = vrot.lane.b32.xlu0 %v2954, 16
  %v2975 = vpop.permute.xlu0 %2974
  %2976 = vrot.lane.b32.xlu0 %v2955, 16
  %v2977 = vpop.permute.xlu0 %2976
  %2978 = vrot.lane.b32.xlu0 %v2956, 16
  %v2979 = vpop.permute.xlu0 %2978
  %2980 = vrot.lane.b32.xlu0 %v2957, 16
  %v2981 = vpop.permute.xlu0 %2980
  %2986 = vrot.lane.b32.xlu0 %v2954, 32
  %v2987 = vpop.permute.xlu0 %2986
  %2988 = vrot.lane.b32.xlu0 %v2955, 32
  %v2989 = vpop.permute.xlu0 %2988
  %2990 = vrot.lane.b32.xlu0 %v2956, 32
  %v2991 = vpop.permute.xlu0 %2990
  %2992 = vrot.lane.b32.xlu0 %v2957, 32
  %v2993 = vpop.permute.xlu0 %2992
  %2998 = vrot.lane.b32.xlu0 %v2954, 48
  %v2999 = vpop.permute.xlu0 %2998
  %3000 = vrot.lane.b32.xlu0 %v2955, 48
  %v3001 = vpop.permute.xlu0 %3000
  %3002 = vrot.lane.b32.xlu0 %v2956, 48
  %v3003 = vpop.permute.xlu0 %3002
  %3004 = vrot.lane.b32.xlu0 %v2957, 48
  %v3005 = vpop.permute.xlu0 %3004
  %v3010 = vsel %vm652, %v2954, %v2975
  %v3011 = vsel %vm652, %v2955, %v2977
  %v3012 = vsel %vm652, %v2956, %v2979
  %v3013 = vsel %vm652, %v2957, %v2981
  %v3014 = vsel %vm470, %v3010, %v2987
  %v3015 = vsel %vm470, %v3011, %v2989
  %v3016 = vsel %vm470, %v3012, %v2991
  %v3017 = vsel %vm470, %v3013, %v2993
  %v3018 = vsel %vm661, %v3014, %v2999
  %v3019 = vsel %vm661, %v3015, %v3001
  %v3020 = vsel %vm661, %v3016, %v3003
  %v3021 = vsel %vm661, %v3017, %v3005
  %v3022 = vmul.f32 %v3018, %v257
  %v3023 = vmul.f32 %v3019, %v258
  %v3024 = vmul.f32 %v3020, %v259
  %v3025 = vmul.f32 %v3021, %v260
  %v3026 = vpack.c.bf16 %v2836, %v2835
  %v3027 = vpack.c.bf16 %v3023, %v3022
  %v3028 = vpack.c.bf16 %v3025, %v3024
  %v3030 = vsel %vm470, %v3026, 0
  %3032 = vmatprep.subr.bf16.mxu0 0
  %3033 = vmatpush1.bf16.msra.mxu0 0
  %3034 = vmatprep.subr.bf16.mxu0 0
  %3035 = vmatpush1.bf16.msra.mxu0 0
  %3036 = vmatprep.subr.bf16.mxu0 0
  %3037 = vmatpush1.bf16.msra.mxu0 0
  %3038 = vmatprep.subr.bf16.mxu0 0
  %3039 = vmatpush1.bf16.msra.mxu0 0
  %3040 = vmatprep.subr.bf16.mxu0 0
  %3041 = vmatpush1.bf16.msra.mxu0 0
  %3042 = vmatprep.subr.bf16.mxu0 0
  %3043 = vmatpush1.bf16.msra.mxu0 0
  %3044 = vmatprep.subr.bf16.mxu0 0
  %3045 = vmatpush1.bf16.msra.mxu0 %v3028
  %3046 = vmatprep.subr.bf16.mxu0 0
  %3047 = vmatpush1.bf16.msra.mxu0 %v3027
  %3048 = vmatprep.subr.bf16.mxu0 0
  %3049 = vmatpush2.bf16.msra.mxu0 0
  %3050 = vmatprep.subr.bf16.mxu0 0
  %3051 = vmatpush2.bf16.msra.mxu0 0
  %3052 = vmatprep.subr.bf16.mxu0 0
  %3053 = vmatpush2.bf16.msra.mxu0 0
  %3054 = vmatprep.subr.bf16.mxu0 0
  %3055 = vmatpush2.bf16.msra.mxu0 0
  %3056 = vmatprep.subr.bf16.mxu0 0
  %3057 = vmatpush2.bf16.msra.mxu0 0
  %3058 = vmatprep.subr.bf16.mxu0 0
  %3059 = vmatpush2.bf16.msra.mxu0 0
  %3060 = vmatprep.subr.bf16.mxu0 0
  %3061 = vmatpush2.bf16.msra.mxu0 0
  %3062 = vmatprep.subr.bf16.mxu0 0
  %3063 = vmatpush2.bf16.msra.mxu0 0
  %3064 = vmatprep.mubr.bf16.mxu0 0
  %3065 = vmatmul.mubr.bf16.gmra.mxu0 %v3030
  %v3066 = vpop.f32.mrf.mxu0
  %v3067 = vadd.f32 %v57, %v3066
  %v3068 = vpop.f32.mrf.mxu0
  %v3069 = vpop.f32.mrf.mxu0
  %v3070 = vadd.f32 %v58, %v3069
  %v3071 = vpop.f32.mrf.mxu0
  %3072 = vdwg.mxu0
  %v3073 = vsel %vm717, %v3067, -inf
  %3074 = vmax.xlane.f32.xlu0 %v3073
  %v3075 = vpop.xlane.xlu0 %3074
  %v3076 = vsel %vm717, %v3070, -inf
  %3077 = vmax.xlane.f32.xlu0 %v3076
  %v3078 = vpop.xlane.xlu0 %3077
  %v3079 = vsub.f32 %v3067, %v3075
  %v3080 = vsub.f32 %v3070, %v3078
  %v3081 = vmul.f32 %v3079, 1.442695
  %v3082 = vpow.pop %v3081
  %v3083 = vmul.f32 %v3080, 1.442695
  %v3084 = vpow.pop %v3083
  %v3085 = vmul.f32 %v2932, %v445
  %v3086 = vmul.f32 %v2935, %v446
  %v3087 = vmul.f32 %v2932, %v447
  %v3088 = vmul.f32 %v2935, %v448
  %v3089 = vmul.f32 %v2932, %v449
  %v3090 = vmul.f32 %v2935, %v450
  %v3091 = vmul.f32 %v2932, %v451
  %v3092 = vmul.f32 %v2935, %v452
  %v3093 = vpack.c.bf16 %v3084, %v3082
  %v3094 = vpack.c.bf16 %v3086, %v3085
  %v3095 = vpack.c.bf16 %v3088, %v3087
  %v3096 = vpack.c.bf16 %v3090, %v3089
  %v3097 = vpack.c.bf16 %v3092, %v3091
  %v3099 = vsel %vm717, %v3093, 0
  %3101 = vmatprep.subr.bf16.mxu0 0
  %3102 = vmatpush1.bf16.msra.mxu0 0
  %3103 = vmatprep.subr.bf16.mxu0 0
  %3104 = vmatpush1.bf16.msra.mxu0 0
  %3105 = vmatprep.subr.bf16.mxu0 0
  %3106 = vmatpush1.bf16.msra.mxu0 0
  %3107 = vmatprep.subr.bf16.mxu0 0
  %3108 = vmatpush1.bf16.msra.mxu0 0
  %3109 = vmatprep.subr.bf16.mxu0 0
  %3110 = vmatpush1.bf16.msra.mxu0 %v3097
  %3111 = vmatprep.subr.bf16.mxu0 0
  %3112 = vmatpush1.bf16.msra.mxu0 %v3096
  %3113 = vmatprep.subr.bf16.mxu0 0
  %3114 = vmatpush1.bf16.msra.mxu0 %v3095
  %3115 = vmatprep.subr.bf16.mxu0 0
  %3116 = vmatpush1.bf16.msra.mxu0 %v3094
  %3117 = vmatprep.subr.bf16.mxu0 0
  %3118 = vmatpush2.bf16.msra.mxu0 0
  %3119 = vmatprep.subr.bf16.mxu0 0
  %3120 = vmatpush2.bf16.msra.mxu0 0
  %3121 = vmatprep.subr.bf16.mxu0 0
  %3122 = vmatpush2.bf16.msra.mxu0 0
  %3123 = vmatprep.subr.bf16.mxu0 0
  %3124 = vmatpush2.bf16.msra.mxu0 0
  %3125 = vmatprep.subr.bf16.mxu0 0
  %3126 = vmatpush2.bf16.msra.mxu0 0
  %3127 = vmatprep.subr.bf16.mxu0 0
  %3128 = vmatpush2.bf16.msra.mxu0 0
  %3129 = vmatprep.subr.bf16.mxu0 0
  %3130 = vmatpush2.bf16.msra.mxu0 0
  %3131 = vmatprep.subr.bf16.mxu0 0
  %3132 = vmatpush2.bf16.msra.mxu0 0
  %3133 = vmatprep.mubr.bf16.mxu0 0
  %3134 = vmatmul.mubr.bf16.gmra.mxu0 %v3099
  %v3135 = vpop.f32.mrf.mxu0
  %v3136 = vadd.f32 0.0, %v3135
  %v3137 = vpop.f32.mrf.mxu0
  %v3138 = vpop.f32.mrf.mxu0
  %v3139 = vadd.f32 0.0, %v3138
  %v3140 = vpop.f32.mrf.mxu0
  %3141 = vdwg.mxu0
  %3142 = vmatprep.subr.bf16.mxu0 0
  %3143 = vmatpush1.bf16.msra.mxu0 0
  %3144 = vmatprep.subr.bf16.mxu0 0
  %3145 = vmatpush1.bf16.msra.mxu0 0
  %3146 = vmatprep.subr.bf16.mxu0 0
  %3147 = vmatpush1.bf16.msra.mxu0 0
  %3148 = vmatprep.subr.bf16.mxu0 0
  %3149 = vmatpush1.bf16.msra.mxu0 0
  %3150 = vmatprep.subr.bf16.mxu0 0
  %3151 = vmatpush1.bf16.msra.mxu0 %v790
  %3152 = vmatprep.subr.bf16.mxu0 0
  %3153 = vmatpush1.bf16.msra.mxu0 %v789
  %3154 = vmatprep.subr.bf16.mxu0 0
  %3155 = vmatpush1.bf16.msra.mxu0 %v788
  %3156 = vmatprep.subr.bf16.mxu0 0
  %3157 = vmatpush1.bf16.msra.mxu0 %v787
  %3158 = vmatprep.subr.bf16.mxu0 0
  %3159 = vmatpush2.bf16.msra.mxu0 0
  %3160 = vmatprep.subr.bf16.mxu0 0
  %3161 = vmatpush2.bf16.msra.mxu0 0
  %3162 = vmatprep.subr.bf16.mxu0 0
  %3163 = vmatpush2.bf16.msra.mxu0 0
  %3164 = vmatprep.subr.bf16.mxu0 0
  %3165 = vmatpush2.bf16.msra.mxu0 0
  %3166 = vmatprep.subr.bf16.mxu0 0
  %3167 = vmatpush2.bf16.msra.mxu0 0
  %3168 = vmatprep.subr.bf16.mxu0 0
  %3169 = vmatpush2.bf16.msra.mxu0 0
  %3170 = vmatprep.subr.bf16.mxu0 0
  %3171 = vmatpush2.bf16.msra.mxu0 0
  %3172 = vmatprep.subr.bf16.mxu0 0
  %3173 = vmatpush2.bf16.msra.mxu0 0
  %3174 = vmatprep.mubr.bf16.mxu0 0
  %3175 = vmatmul.mubr.bf16.gmra.mxu0 %v3099
  %v3176 = vpop.f32.mrf.mxu0
  %v3177 = vadd.f32 0.0, %v3176
  %v3178 = vpop.f32.mrf.mxu0
  %v3179 = vpop.f32.mrf.mxu0
  %v3180 = vadd.f32 0.0, %v3179
  %v3181 = vpop.f32.mrf.mxu0
  %3182 = vdwg.mxu0
  %v3183 = vrcp.pop %v3177
  %v3184 = vrcp.pop %v3180
  %v3185 = vmul.f32 %v3136, %v3183
  %v3186 = vmul.f32 %v3139, %v3184
  %v3187 = vpack.c.bf16 %v3186, %v3185
  %v3188 = vlaneseq
  %v3189 = vshrl.u32 %v3188, 7
  %v3190 = vsub.s32 1, %v3189
  %v3191 = vrot.slane %v140, %v3190
  %v3196 = vunpack.c.l.b16 %v95
  %v3197 = vunpack.c.l.b16 %v96
  %v3198 = vunpack.c.l.b16 %v97
  %v3199 = vunpack.c.l.b16 %v98
  %v3200 = vpack.c.b16 %v3197, %v3196
  %v3201 = vpack.c.b16 %v3199, %v3198
  %v3205 = vsel %vm470, %v3187, 0
  %3207 = vmatprep.subr.bf16.mxu0 0
  %3208 = vmatpush1.bf16.msra.mxu0 0
  %3209 = vmatprep.subr.bf16.mxu0 0
  %3210 = vmatpush1.bf16.msra.mxu0 0
  %3211 = vmatprep.subr.bf16.mxu0 0
  %3212 = vmatpush1.bf16.msra.mxu0 0
  %3213 = vmatprep.subr.bf16.mxu0 0
  %3214 = vmatpush1.bf16.msra.mxu0 0
  %3215 = vmatprep.subr.bf16.mxu0 0
  %3216 = vmatpush1.bf16.msra.mxu0 0
  %3217 = vmatprep.subr.bf16.mxu0 0
  %3218 = vmatpush1.bf16.msra.mxu0 0
  %3219 = vmatprep.subr.bf16.mxu0 0
  %3220 = vmatpush1.bf16.msra.mxu0 %v3201
  %3221 = vmatprep.subr.bf16.mxu0 0
  %3222 = vmatpush1.bf16.msra.mxu0 %v3200
  %3223 = vmatprep.subr.bf16.mxu0 0
  %3224 = vmatpush2.bf16.msra.mxu0 0
  %3225 = vmatprep.subr.bf16.mxu0 0
  %3226 = vmatpush2.bf16.msra.mxu0 0
  %3227 = vmatprep.subr.bf16.mxu0 0
  %3228 = vmatpush2.bf16.msra.mxu0 0
  %3229 = vmatprep.subr.bf16.mxu0 0
  %3230 = vmatpush2.bf16.msra.mxu0 0
  %3231 = vmatprep.subr.bf16.mxu0 0
  %3232 = vmatpush2.bf16.msra.mxu0 0
  %3233 = vmatprep.subr.bf16.mxu0 0
  %3234 = vmatpush2.bf16.msra.mxu0 0
  %3235 = vmatprep.subr.bf16.mxu0 0
  %3236 = vmatpush2.bf16.msra.mxu0 0
  %3237 = vmatprep.subr.bf16.mxu0 0
  %3238 = vmatpush2.bf16.msra.mxu0 0
  %3239 = vmatprep.mubr.bf16.mxu0 0
  %3240 = vmatmul.mubr.bf16.gmra.mxu0 %v3205
  %v3241 = vpop.f32.mrf.mxu0
  %v3242 = vadd.f32 %v3191, %v3241
  %v3243 = vpop.f32.mrf.mxu0
  %v3244 = vpop.f32.mrf.mxu0
  %v3245 = vadd.f32 %v3191, %v3244
  %v3246 = vpop.f32.mrf.mxu0
  %3247 = vdwg.mxu0
  %v3248 = vadd.f32 %v2770, %v3242
  %v3249 = vadd.f32 %v2771, %v3245
  %v3250 = vsel %vm470, %v3248, 0.0
  %3251 = vadd.xlane.f32.xlu0 %v3250
  %v3252 = vpop.xlane.xlu0 %3251
  %v3253 = vsel %vm470, %v3249, 0.0
  %3254 = vadd.xlane.f32.xlu0 %v3253
  %v3255 = vpop.xlane.xlu0 %3254
  %v3256 = vmul.f32 %v3252, %v905
  %v3257 = vmul.f32 %v3255, %v905
  %v3258 = vsub.f32 %v3248, %v3256
  %v3259 = vsub.f32 %v3249, %v3257
  %v3260 = vmul.f32 %v3258, %v3258
  %v3261 = vmul.f32 %v3259, %v3259
  %v3262 = vsel %vm470, %v3260, 0.0
  %3263 = vadd.xlane.f32.xlu0 %v3262
  %v3264 = vpop.xlane.xlu0 %3263
  %v3265 = vsel %vm470, %v3261, 0.0
  %3266 = vadd.xlane.f32.xlu0 %v3265
  %v3267 = vpop.xlane.xlu0 %3266
  %v3268 = vmul.f32 %v3264, %v905
  %v3269 = vmul.f32 %v3267, %v905
  %v3270 = vadd.f32 %v3268, 1e-05
  %v3271 = vadd.f32 %v3269, 1e-05
  %v3272 = vrsqrt.pop %v3270
  %v3273 = vrsqrt.pop %v3271
  %v3274 = vmul.f32 %v3258, %v3272
  %v3275 = vmul.f32 %v3259, %v3273
  %v3276 = vlaneseq
  %v3277 = vshrl.u32 %v3276, 7
  %v3278 = vsub.s32 4, %v3277
  %v3279 = vrot.slane %v142, %v3278
  %v3280 = vmul.f32 %v3274, %v3279
  %v3281 = vmul.f32 %v3275, %v3279
  %v3282 = vlaneseq
  %v3283 = vshrl.u32 %v3282, 7
  %v3284 = vsub.s32 5, %v3283
  %v3285 = vrot.slane %v142, %v3284
  %v3286 = vadd.f32 %v3280, %v3285
  %v3287 = vadd.f32 %v3281, %v3285
  %v3288 = vpack.c.bf16 %v3287, %v3286
  %v3289 = vlaneseq
  %v3290 = vshrl.u32 %v3289, 7
  %v3291 = vsub.s32 0, %v3290
  %v3292 = vrot.slane %v142, %v3291
  %v3297 = vunpack.c.l.b16 %v107
  %v3298 = vunpack.c.l.b16 %v108
  %v3299 = vunpack.c.l.b16 %v109
  %v3300 = vunpack.c.l.b16 %v110
  %v3301 = vpack.c.b16 %v3298, %v3297
  %v3302 = vpack.c.b16 %v3300, %v3299
  %v3306 = vsel %vm470, %v3288, 0
  %3308 = vmatprep.subr.bf16.mxu0 0
  %3309 = vmatpush1.bf16.msra.mxu0 0
  %3310 = vmatprep.subr.bf16.mxu0 0
  %3311 = vmatpush1.bf16.msra.mxu0 0
  %3312 = vmatprep.subr.bf16.mxu0 0
  %3313 = vmatpush1.bf16.msra.mxu0 0
  %3314 = vmatprep.subr.bf16.mxu0 0
  %3315 = vmatpush1.bf16.msra.mxu0 0
  %3316 = vmatprep.subr.bf16.mxu0 0
  %3317 = vmatpush1.bf16.msra.mxu0 0
  %3318 = vmatprep.subr.bf16.mxu0 0
  %3319 = vmatpush1.bf16.msra.mxu0 0
  %3320 = vmatprep.subr.bf16.mxu0 0
  %3321 = vmatpush1.bf16.msra.mxu0 %v3302
  %3322 = vmatprep.subr.bf16.mxu0 0
  %3323 = vmatpush1.bf16.msra.mxu0 %v3301
  %3324 = vmatprep.subr.bf16.mxu0 0
  %3325 = vmatpush2.bf16.msra.mxu0 0
  %3326 = vmatprep.subr.bf16.mxu0 0
  %3327 = vmatpush2.bf16.msra.mxu0 0
  %3328 = vmatprep.subr.bf16.mxu0 0
  %3329 = vmatpush2.bf16.msra.mxu0 0
  %3330 = vmatprep.subr.bf16.mxu0 0
  %3331 = vmatpush2.bf16.msra.mxu0 0
  %3332 = vmatprep.subr.bf16.mxu0 0
  %3333 = vmatpush2.bf16.msra.mxu0 0
  %3334 = vmatprep.subr.bf16.mxu0 0
  %3335 = vmatpush2.bf16.msra.mxu0 0
  %3336 = vmatprep.subr.bf16.mxu0 0
  %3337 = vmatpush2.bf16.msra.mxu0 0
  %3338 = vmatprep.subr.bf16.mxu0 0
  %3339 = vmatpush2.bf16.msra.mxu0 0
  %3340 = vmatprep.mubr.bf16.mxu0 0
  %3341 = vmatmul.mubr.bf16.gmra.mxu0 %v3306
  %v3342 = vpop.f32.mrf.mxu0
  %v3343 = vadd.f32 %v3292, %v3342
  %v3344 = vpop.f32.mrf.mxu0
  %v3345 = vpop.f32.mrf.mxu0
  %v3346 = vadd.f32 %v3292, %v3345
  %v3347 = vpop.f32.mrf.mxu0
  %3348 = vdwg.mxu0
  %v3349 = vmax.f32 %v3343, 0.0
  %v3350 = vmax.f32 %v3346, 0.0
  %v3351 = vpack.c.bf16 %v3350, %v3349
  %v3352 = vlaneseq
  %v3353 = vshrl.u32 %v3352, 7
  %v3354 = vsub.s32 1, %v3353
  %v3355 = vrot.slane %v142, %v3354
  %v3364 = vunpack.c.l.b16 %v127
  %v3365 = vunpack.c.l.b16 %v128
  %v3366 = vunpack.c.l.b16 %v129
  %v3367 = vunpack.c.l.b16 %v130
  %v3368 = vunpack.c.l.b16 %v131
  %v3369 = vunpack.c.l.b16 %v132
  %v3370 = vunpack.c.l.b16 %v133
  %v3371 = vunpack.c.l.b16 %v134
  %v3372 = vpack.c.b16 %v3365, %v3364
  %v3373 = vpack.c.b16 %v3367, %v3366
  %v3374 = vpack.c.b16 %v3369, %v3368
  %v3375 = vpack.c.b16 %v3371, %v3370
  %v3381 = vsel %vm717, %v3351, 0
  %3383 = vmatprep.subr.bf16.mxu0 0
  %3384 = vmatpush1.bf16.msra.mxu0 0
  %3385 = vmatprep.subr.bf16.mxu0 0
  %3386 = vmatpush1.bf16.msra.mxu0 0
  %3387 = vmatprep.subr.bf16.mxu0 0
  %3388 = vmatpush1.bf16.msra.mxu0 0
  %3389 = vmatprep.subr.bf16.mxu0 0
  %3390 = vmatpush1.bf16.msra.mxu0 0
  %3391 = vmatprep.subr.bf16.mxu0 0
  %3392 = vmatpush1.bf16.msra.mxu0 %v3375
  %3393 = vmatprep.subr.bf16.mxu0 0
  %3394 = vmatpush1.bf16.msra.mxu0 %v3374
  %3395 = vmatprep.subr.bf16.mxu0 0
  %3396 = vmatpush1.bf16.msra.mxu0 %v3373
  %3397 = vmatprep.subr.bf16.mxu0 0
  %3398 = vmatpush1.bf16.msra.mxu0 %v3372
  %3399 = vmatprep.subr.bf16.mxu0 0
  %3400 = vmatpush2.bf16.msra.mxu0 0
  %3401 = vmatprep.subr.bf16.mxu0 0
  %3402 = vmatpush2.bf16.msra.mxu0 0
  %3403 = vmatprep.subr.bf16.mxu0 0
  %3404 = vmatpush2.bf16.msra.mxu0 0
  %3405 = vmatprep.subr.bf16.mxu0 0
  %3406 = vmatpush2.bf16.msra.mxu0 0
  %3407 = vmatprep.subr.bf16.mxu0 0
  %3408 = vmatpush2.bf16.msra.mxu0 0
  %3409 = vmatprep.subr.bf16.mxu0 0
  %3410 = vmatpush2.bf16.msra.mxu0 0
  %3411 = vmatprep.subr.bf16.mxu0 0
  %3412 = vmatpush2.bf16.msra.mxu0 0
  %3413 = vmatprep.subr.bf16.mxu0 0
  %3414 = vmatpush2.bf16.msra.mxu0 0
  %3415 = vmatprep.mubr.bf16.mxu0 0
  %3416 = vmatmul.mubr.bf16.gmra.mxu0 %v3381
  %v3417 = vpop.f32.mrf.mxu0
  %v3418 = vadd.f32 %v3355, %v3417
  %v3419 = vpop.f32.mrf.mxu0
  %v3420 = vpop.f32.mrf.mxu0
  %v3421 = vadd.f32 %v3355, %v3420
  %v3422 = vpop.f32.mrf.mxu0
  %3423 = vdwg.mxu0
  %v3424 = vadd.f32 %v3286, %v3418
  %v3425 = vadd.f32 %v3287, %v3421
  %v3426 = vsel %vm470, %v3424, 0.0
  %3427 = vadd.xlane.f32.xlu0 %v3426
  %v3428 = vpop.xlane.xlu0 %3427
  %v3429 = vsel %vm470, %v3425, 0.0
  %3430 = vadd.xlane.f32.xlu0 %v3429
  %v3431 = vpop.xlane.xlu0 %3430
  %v3432 = vmul.f32 %v3428, %v905
  %v3433 = vmul.f32 %v3431, %v905
  %v3434 = vsub.f32 %v3424, %v3432
  %v3435 = vsub.f32 %v3425, %v3433
  %v3436 = vmul.f32 %v3434, %v3434
  %v3437 = vmul.f32 %v3435, %v3435
  %v3438 = vsel %vm470, %v3436, 0.0
  %3439 = vadd.xlane.f32.xlu0 %v3438
  %v3440 = vpop.xlane.xlu0 %3439
  %v3441 = vsel %vm470, %v3437, 0.0
  %3442 = vadd.xlane.f32.xlu0 %v3441
  %v3443 = vpop.xlane.xlu0 %3442
  %v3444 = vmul.f32 %v3440, %v905
  %v3445 = vmul.f32 %v3443, %v905
  %v3446 = vadd.f32 %v3444, 1e-05
  %v3447 = vadd.f32 %v3445, 1e-05
  %v3448 = vrsqrt.pop %v3446
  %v3449 = vrsqrt.pop %v3447
  %v3450 = vmul.f32 %v3434, %v3448
  %v3451 = vmul.f32 %v3435, %v3449
  %v3452 = vlaneseq
  %v3453 = vshrl.u32 %v3452, 7
  %v3454 = vsub.s32 6, %v3453
  %v3455 = vrot.slane %v142, %v3454
  %v3456 = vmul.f32 %v3450, %v3455
  %v3457 = vmul.f32 %v3451, %v3455
  %v3458 = vlaneseq
  %v3459 = vshrl.u32 %v3458, 7
  %v3460 = vsub.s32 7, %v3459
  %v3461 = vrot.slane %v142, %v3460
  %v3462 = vadd.f32 %v3456, %v3461
  %v3463 = vadd.f32 %v3457, %v3461
  %v3464 = vpack.c.bf16 %v3463, %v3462
  %v3465 = vlaneseq
  %v3466 = vshrl.u32 %v3465, 7
  %v3467 = vsub.s32 0, %v3466
  %v3468 = vrot.slane %v143, %v3467
  %v3473 = vunpack.c.l.b16 %v135
  %v3474 = vunpack.c.l.b16 %v136
  %v3475 = vunpack.c.l.b16 %v137
  %v3476 = vunpack.c.l.b16 %v138
  %v3477 = vpack.c.b16 %v3474, %v3473
  %v3478 = vpack.c.b16 %v3476, %v3475
  %v3482 = vsel %vm470, %v3464, 0
  %3484 = vmatprep.subr.bf16.mxu0 0
  %3485 = vmatpush1.bf16.msra.mxu0 0
  %3486 = vmatprep.subr.bf16.mxu0 0
  %3487 = vmatpush1.bf16.msra.mxu0 0
  %3488 = vmatprep.subr.bf16.mxu0 0
  %3489 = vmatpush1.bf16.msra.mxu0 0
  %3490 = vmatprep.subr.bf16.mxu0 0
  %3491 = vmatpush1.bf16.msra.mxu0 0
  %3492 = vmatprep.subr.bf16.mxu0 0
  %3493 = vmatpush1.bf16.msra.mxu0 0
  %3494 = vmatprep.subr.bf16.mxu0 0
  %3495 = vmatpush1.bf16.msra.mxu0 0
  %3496 = vmatprep.subr.bf16.mxu0 0
  %3497 = vmatpush1.bf16.msra.mxu0 %v3478
  %3498 = vmatprep.subr.bf16.mxu0 0
  %3499 = vmatpush1.bf16.msra.mxu0 %v3477
  %3500 = vmatprep.subr.bf16.mxu0 0
  %3501 = vmatpush2.bf16.msra.mxu0 0
  %3502 = vmatprep.subr.bf16.mxu0 0
  %3503 = vmatpush2.bf16.msra.mxu0 0
  %3504 = vmatprep.subr.bf16.mxu0 0
  %3505 = vmatpush2.bf16.msra.mxu0 0
  %3506 = vmatprep.subr.bf16.mxu0 0
  %3507 = vmatpush2.bf16.msra.mxu0 0
  %3508 = vmatprep.subr.bf16.mxu0 0
  %3509 = vmatpush2.bf16.msra.mxu0 0
  %3510 = vmatprep.subr.bf16.mxu0 0
  %3511 = vmatpush2.bf16.msra.mxu0 0
  %3512 = vmatprep.subr.bf16.mxu0 0
  %3513 = vmatpush2.bf16.msra.mxu0 0
  %3514 = vmatprep.subr.bf16.mxu0 0
  %3515 = vmatpush2.bf16.msra.mxu0 0
  %3516 = vmatprep.mubr.bf16.mxu0 0
  %3517 = vmatmul.mubr.bf16.gmra.mxu0 %v3482
  %v3518 = vpop.f32.mrf.mxu0
  %v3519 = vadd.f32 %v3468, %v3518
  %v3520 = vpop.f32.mrf.mxu0
  %v3521 = vpop.f32.mrf.mxu0
  %v3522 = vadd.f32 %v3468, %v3521
  %v3523 = vpop.f32.mrf.mxu0
  %3524 = vdwg.mxu0
  %3525 = vst [vmem:[%s13] sm:$0xff] %v3519
  %3526 = vst [vmem:[%s13 + $0x8] sm:$0xff] %v3522
  // Predicated region
  $region54: #{tracking_model_forward.1} parent=0 // pred_check
    _
  $region55: #{tracking_model_forward.1} parent=0 // pred_check_branch
    %3528 = sbr.rel (0) target = $region57
  $region56: #{tracking_model_forward.1} parent=0 // pred_region
    _
  $region57: #{tracking_model_forward.1} parent=0 // pred_fallthru
    _
  // Predicated region
  $region58: #{tracking_model_forward.1} parent=0 // pred_check
    _
  $region59: #{tracking_model_forward.1} parent=0 // pred_check_branch
    %3530 = sbr.rel (0) target = $region61
  $region60: #{tracking_model_forward.1} parent=0 // pred_region
    _
  $region61: #{tracking_model_forward.1} parent=0 // pred_fallthru
    _

</llo_original>
